<compile_context>
chip_gen: v7x
topology: tpu7x:2x2x1
jax: 0.10.0
libtpu: 0.0.40
codegen_flags: <defaults>
</compile_context>

<pallas_src>
import math
import functools

import jax
import jax.numpy as jnp
from jax import lax
from jax.experimental import pallas as pl
from jax.experimental.pallas import tpu as pltpu


NEG_INF = -1e9          # finite "-inf": fully-masked rows -> uniform softmax, not NaN
LN_EPS = 1e-5           # PyTorch LayerNorm default
VMEM_LIMIT_BYTES = 48 * 1024 * 1024


# ----------------------------- in-kernel helpers ----------------------------

def _layernorm(x, g, b):
    mean = jnp.mean(x, axis=-1, keepdims=True)
    var = jnp.mean(jnp.square(x - mean), axis=-1, keepdims=True)
    return (x - mean) * lax.rsqrt(var + LN_EPS) * g + b


def _mha(q, k, v, wo, mask_tiled, nhead, dh):
    """Multi-head attention with the output projection folded in (no bias).

    q:(Lq,E) f32 already scaled by 1/sqrt(dh), k/v:(Lk,E) f32, wo:(E,E) bf16,
    mask_tiled:(H*Lq,Lk) f32 additive.

    - per-head scores via lax.dot_general contracting last dims (no k.T)
    - all H score tiles stacked along sublanes -> ONE softmax reduction
    - normalization via pl.reciprocal(approx=True) (EUP, not VALU divide)
    - per-head contexts re-concatenated along lanes -> ONE K=E matmul vs wo
    """
    lq = q.shape[0]
    qb = q.astype(jnp.bfloat16)
    kb = k.astype(jnp.bfloat16)
    vb = v.astype(jnp.bfloat16)

    scores = [
        lax.dot_general(qb[:, h * dh:(h + 1) * dh], kb[:, h * dh:(h + 1) * dh],
                        (((1,), (1,)), ((), ())),
                        preferred_element_type=jnp.float32)
        for h in range(nhead)
    ]
    s_all = jnp.concatenate(scores, axis=0) + mask_tiled           # (H*Lq, Lk)
    s_all = s_all - jnp.max(s_all, axis=-1, keepdims=True)
    p = jnp.exp(s_all)
    p = p * pl.reciprocal(jnp.sum(p, axis=-1, keepdims=True), approx=True)
    p = p.astype(jnp.bfloat16)

    ctx = jnp.concatenate(
        [jnp.dot(p[h * lq:(h + 1) * lq, :], vb[:, h * dh:(h + 1) * dh],
                 preferred_element_type=jnp.float32)
         for h in range(nhead)], axis=-1)                          # (Lq, E)
    return jnp.dot(ctx.astype(jnp.bfloat16), wo,
                   preferred_element_type=jnp.float32)


# ------------------------------ fused kernels -------------------------------

def _encoder_layer_kernel(
        x_ref, mask_ref,
        ln1_g, ln1_b, wqkv, bqkv, wo, bo,
        ln2_g, ln2_b, w1, b1, w2, b2,
        norm_g, norm_b,
        out_ref,
        x_scr, mask_scr,
        *, nhead, dh, scale):
    l = pl.program_id(1)
    emb = nhead * dh

    @pl.when(l == 0)
    def _():
        x_scr[...] = x_ref[...].astype(jnp.float32)
        m = mask_ref[...].astype(jnp.float32)
        mask_scr[...] = jnp.concatenate([m] * nhead, axis=0)       # (H*S, S)

    x = x_scr[...]                                                 # (S, E) f32
    mask_t = mask_scr[...]

    # --- pre-LN self-attention ---
    h = _layernorm(x, ln1_g[...], ln1_b[...]).astype(jnp.bfloat16)
    qkv = jnp.dot(h, wqkv[...], preferred_element_type=jnp.float32) + bqkv[...]
    attn = _mha(qkv[:, :emb] * scale, qkv[:, emb:2 * emb], qkv[:, 2 * emb:],
                wo[...], mask_t, nhead, dh)
    x = x + attn + bo[...]

    # --- pre-LN feed-forward ---
    h = _layernorm(x, ln2_g[...], ln2_b[...]).astype(jnp.bfloat16)
    h = jnp.maximum(jnp.dot(h, w1[...], preferred_element_type=jnp.float32)
                    + b1[...], 0.0)
    x = x + jnp.dot(h.astype(jnp.bfloat16), w2[...],
                    preferred_element_type=jnp.float32) + b2[...]

    x_scr[...] = x

    @pl.when(l == pl.num_programs(1) - 1)
    def _():
        out_ref[...] = _layernorm(x, norm_g[...], norm_b[...]).astype(out_ref.dtype)


def _decoder_layer_kernel(
        y_ref, mem_ref, smask_ref, mpad_ref,
        sa_ln_g, sa_ln_b, sa_wqkv, sa_bqkv, sa_wo, sa_bo,
        ca_ln_g, ca_ln_b, ca_wq, ca_bq, ca_wkv, ca_bkv, ca_wo, ca_bo,
        ff_ln_g, ff_ln_b, w1, b1, w2, b2,
        norm_g, norm_b, gen_w, gen_b,
        out_ref,
        y_scr, smask_scr, cmask_scr,
        *, nhead, dh, scale):
    l = pl.program_id(1)
    emb = nhead * dh
    t = y_ref.shape[0]
    s = mem_ref.shape[0]

    @pl.when(l == 0)
    def _():
        y_scr[...] = y_ref[...].astype(jnp.float32)
        m = smask_ref[...].astype(jnp.float32)
        smask_scr[...] = jnp.concatenate([m] * nhead, axis=0)              # (H*T, T)
        cmask_scr[...] = jnp.broadcast_to(mpad_ref[...].astype(jnp.float32),
                                          (nhead * t, s))                  # (H*T, S)

    y = y_scr[...]                                                 # (T, E) f32
    mem = mem_ref[...]                                             # (S, E) bf16

    # --- pre-LN masked self-attention ---
    h = _layernorm(y, sa_ln_g[...], sa_ln_b[...]).astype(jnp.bfloat16)
    qkv = jnp.dot(h, sa_wqkv[...], preferred_element_type=jnp.float32) + sa_bqkv[...]
    attn = _mha(qkv[:, :emb] * scale, qkv[:, emb:2 * emb], qkv[:, 2 * emb:],
                sa_wo[...], smask_scr[...], nhead, dh)
    y = y + attn + sa_bo[...]

    # --- pre-LN cross-attention against encoder memory ---
    h = _layernorm(y, ca_ln_g[...], ca_ln_b[...]).astype(jnp.bfloat16)
    q = jnp.dot(h, ca_wq[...], preferred_element_type=jnp.float32) + ca_bq[...]
    kv = jnp.dot(mem, ca_wkv[...], preferred_element_type=jnp.float32) + ca_bkv[...]
    attn = _mha(q * scale, kv[:, :emb], kv[:, emb:],
                ca_wo[...], cmask_scr[...], nhead, dh)
    y = y + attn + ca_bo[...]

    # --- pre-LN feed-forward ---
    h = _layernorm(y, ff_ln_g[...], ff_ln_b[...]).astype(jnp.bfloat16)
    h = jnp.maximum(jnp.dot(h, w1[...], preferred_element_type=jnp.float32)
                    + b1[...], 0.0)
    y = y + jnp.dot(h.astype(jnp.bfloat16), w2[...],
                    preferred_element_type=jnp.float32) + b2[...]

    y_scr[...] = y

    @pl.when(l == pl.num_programs(1) - 1)
    def _():
        z = _layernorm(y, norm_g[...], norm_b[...]).astype(jnp.bfloat16)
        # Fused three-hot generator: one lane-dense (E, Vpad=128) matmul.
        out_ref[...] = (jnp.dot(z, gen_w[...], preferred_element_type=jnp.float32)
                        + gen_b[...]).astype(out_ref.dtype)


# ------------------------------ pallas wrappers ------------------------------

def _act_spec(d1, d2):            # per-batch activation/mask (constant over l)
    return pl.BlockSpec((None, d1, d2), lambda b, l: (b, 0, 0))


def _layer_spec(d1, d2):          # per-layer streamed weight/bias
    return pl.BlockSpec((None, d1, d2), lambda b, l: (l, 0, 0))


def _const_spec(shape):           # grid-constant (final norm / generator)
    return pl.BlockSpec(shape, lambda b, l: (0,) * len(shape))


def encoder_stack(x, mask, p, nhead):
    B, S, E = x.shape
    NL = p["wqkv"].shape[0]
    F = p["w1"].shape[-1]
    dh = E // nhead
    kern = functools.partial(_encoder_layer_kernel, nhead=nhead, dh=dh,
                             scale=1.0 / math.sqrt(dh))
    return pl.pallas_call(
        kern,
        grid=(B, NL),
        in_specs=[
            _act_spec(S, E),                                   # x  (f32)
            _act_spec(S, S),                                   # fused additive mask (bf16)
            _layer_spec(1, E), _layer_spec(1, E),              # ln1 g, b
            _layer_spec(E, 3 * E), _layer_spec(1, 3 * E),      # wqkv, bqkv
            _layer_spec(E, E), _layer_spec(1, E),              # wo, bo
            _layer_spec(1, E), _layer_spec(1, E),              # ln2 g, b
            _layer_spec(E, F), _layer_spec(1, F),              # lin1
            _layer_spec(F, E), _layer_spec(1, E),              # lin2
            _const_spec((1, E)), _const_spec((1, E)),          # final encoder norm
        ],
        out_specs=_act_spec(S, E),
        out_shape=jax.ShapeDtypeStruct((B, S, E), jnp.bfloat16),   # memory in bf16
        scratch_shapes=[pltpu.VMEM((S, E), jnp.float32),           # residual carry
                        pltpu.VMEM((nhead * S, S), jnp.float32)],  # head-tiled mask
        compiler_params=pltpu.CompilerParams(
            dimension_semantics=("parallel", "arbitrary"),
            vmem_limit_bytes=VMEM_LIMIT_BYTES),
    )(x, mask,
      p["ln1_g"], p["ln1_b"], p["wqkv"], p["bqkv"], p["wo"], p["bo"],
      p["ln2_g"], p["ln2_b"], p["w1"], p["b1"], p["w2"], p["b2"],
      p["norm_g"], p["norm_b"])


def decoder_stack(y, memory, self_mask, mem_pad, p, gen_w, gen_b, nhead):
    B, T, E = y.shape
    S = memory.shape[1]
    NL = p["wqkv"].shape[0]
    F = p["w1"].shape[-1]
    Vp = gen_w.shape[-1]
    dh = E // nhead
    kern = functools.partial(_decoder_layer_kernel, nhead=nhead, dh=dh,
                             scale=1.0 / math.sqrt(dh))
    return pl.pallas_call(
        kern,
        grid=(B, NL),
        in_specs=[
            _act_spec(T, E),                                   # y (f32)
            _act_spec(S, E),                                   # memory (bf16)
            _act_spec(T, T),                                   # fused self mask (bf16)
            _act_spec(1, S),                                   # memory pad row (bf16)
            _layer_spec(1, E), _layer_spec(1, E),              # self-attn ln
            _layer_spec(E, 3 * E), _layer_spec(1, 3 * E),      # self wqkv, b
            _layer_spec(E, E), _layer_spec(1, E),              # self wo, bo
            _layer_spec(1, E), _layer_spec(1, E),              # cross ln
            _layer_spec(E, E), _layer_spec(1, E),              # cross wq, bq
            _layer_spec(E, 2 * E), _layer_spec(1, 2 * E),      # cross wkv, bkv
            _layer_spec(E, E), _layer_spec(1, E),              # cross wo, bo
            _layer_spec(1, E), _layer_spec(1, E),              # ffn ln
            _layer_spec(E, F), _layer_spec(1, F),              # lin1
            _layer_spec(F, E), _layer_spec(1, E),              # lin2
            _const_spec((1, E)), _const_spec((1, E)),          # final decoder norm
            _const_spec((E, Vp)), _const_spec((1, Vp)),        # fused generator
        ],
        out_specs=_act_spec(T, Vp),
        out_shape=jax.ShapeDtypeStruct((B, T, Vp), jnp.float32),
        scratch_shapes=[pltpu.VMEM((T, E), jnp.float32),           # residual carry
                        pltpu.VMEM((nhead * T, T), jnp.float32),   # head-tiled self mask
                        pltpu.VMEM((nhead * T, S), jnp.float32)],  # head-tiled cross mask
        compiler_params=pltpu.CompilerParams(
            dimension_semantics=("parallel", "arbitrary"),
            vmem_limit_bytes=VMEM_LIMIT_BYTES),
    )(y, memory, self_mask, mem_pad,
      p["ln1_g"], p["ln1_b"], p["wqkv"], p["bqkv"], p["wo"], p["bo"],
      p["ln2_g"], p["ln2_b"], p["wq"], p["bq"], p["wkv"], p["bkv"], p["wo2"], p["bo2"],
      p["ln3_g"], p["ln3_b"], p["w1"], p["b1"], p["w2"], p["b2"],
      p["norm_g"], p["norm_b"], gen_w, gen_b)


# ------------------------------- full forward --------------------------------

def transformer_forward(params, cfg, src, trg, src_mask, tgt_mask,
                        src_padding_mask, tgt_padding_mask, memory_key_padding_mask):
    E, H = cfg["emb_size"], cfg["nhead"]
    sqrt_e = math.sqrt(E)
    pe = params["pos_embedding"]                       # (maxlen, 1, E)
    S = src.shape[0]
    T = trg.shape[0]

    # Token embeddings + positional encoding (gathers = glue, not the hot path).
    # TODO(synk): AlphabetEmbedding assumed = nn.Embedding(vocab, E) * sqrt(E).
    src_emb = jnp.take(params["src_emb"], src, axis=0) * sqrt_e + pe[:S]
    # TODO(synk): ThreeHotEmbedding assumed = sum of 3 nn.Embeddings * sqrt(E).
    tgt_emb = (jnp.take(params["tgt_emb_i"], trg[..., 0], axis=0)
               + jnp.take(params["tgt_emb_v"], trg[..., 1], axis=0)
               + jnp.take(params["tgt_emb_f"], trg[..., 2], axis=0)) * sqrt_e + pe[:T]
    # dropout: identity (inference)

    # Batch-major layout: one grid program per (batch, layer) inside the kernels.
    x = jnp.transpose(src_emb, (1, 0, 2)).astype(jnp.float32)      # (B, S, E)
    y = jnp.transpose(tgt_emb, (1, 0, 2)).astype(jnp.float32)      # (B, T, E)

    def attn_add(m):
        if m.dtype == jnp.bool_:
            return jnp.where(m, NEG_INF, 0.0).astype(jnp.float32)
        return jnp.maximum(m.astype(jnp.float32), NEG_INF)          # clamp -inf -> finite

    def pad_add(m):                                    # (B, L) bool -> (B, 1, L) f32
        return jnp.where(m, NEG_INF, 0.0).astype(jnp.float32)[:, None, :]

    # Fuse attn mask + key-padding once on the host; ship bf16 (half the DMA).
    src_mask_full = (attn_add(src_mask)[None] + pad_add(src_padding_mask)
                     ).astype(jnp.bfloat16)                         # (B, S, S)
    tgt_mask_full = (attn_add(tgt_mask)[None] + pad_add(tgt_padding_mask)
                     ).astype(jnp.bfloat16)                         # (B, T, T)
    mem_pad = pad_add(memory_key_padding_mask).astype(jnp.bfloat16)  # (B, 1, S)

    memory = encoder_stack(x, src_mask_full, params["enc"], H)       # (B, S, E) bf16
    logits = decoder_stack(y, memory, tgt_mask_full, mem_pad,
                           params["dec"], params["gen_w"], params["gen_b"], H)

    logits = jnp.transpose(logits, (1, 0, 2))          # (T, B, Vpad)
    vi, vv, vf = cfg["vocab_i"], cfg["vocab_v"], cfg["vocab_f"]
    # TODO(synk): decoder_cls source unavailable; assumed ThreeHotIndependentDecoder
    # = three independent Linear(E, vocab_c) heads (fused + zero-padded to 128 lanes).
    return (logits[..., :vi],
            logits[..., vi:vi + vv],
            logits[..., vi + vv:vi + vv + vf])


# -------------------------------- parameters ---------------------------------

def init_params(key, cfg):
    E, F = cfg["emb_size"], cfg["dim_feedforward"]
    NLe, NLd = cfg["num_encoder_layers"], cfg["num_decoder_layers"]
    keys = iter(jax.random.split(key, 32))

    def w(shape, dtype=jnp.bfloat16, scale=0.02):       # matmul weights in bf16
        return (jax.random.normal(next(keys), shape, jnp.float32) * scale).astype(dtype)

    zeros = lambda s: jnp.zeros(s, jnp.float32)
    ones = lambda s: jnp.ones(s, jnp.float32)
    ln = lambda nl: (ones((nl, 1, E)), zeros((nl, 1, E)))

    enc = {}
    enc["ln1_g"], enc["ln1_b"] = ln(NLe)
    enc["wqkv"], enc["bqkv"] = w((NLe, E, 3 * E)), zeros((NLe, 1, 3 * E))
    enc["wo"], enc["bo"] = w((NLe, E, E)), zeros((NLe, 1, E))
    enc["ln2_g"], enc["ln2_b"] = ln(NLe)
    enc["w1"], enc["b1"] = w((NLe, E, F)), zeros((NLe, 1, F))
    enc["w2"], enc["b2"] = w((NLe, F, E)), zeros((NLe, 1, E))
    enc["norm_g"], enc["norm_b"] = ones((1, E)), zeros((1, E))

    dec = {}
    dec["ln1_g"], dec["ln1_b"] = ln(NLd)
    dec["wqkv"], dec["bqkv"] = w((NLd, E, 3 * E)), zeros((NLd, 1, 3 * E))
    dec["wo"], dec["bo"] = w((NLd, E, E)), zeros((NLd, 1, E))
    dec["ln2_g"], dec["ln2_b"] = ln(NLd)
    dec["wq"], dec["bq"] = w((NLd, E, E)), zeros((NLd, 1, E))
    dec["wkv"], dec["bkv"] = w((NLd, E, 2 * E)), zeros((NLd, 1, 2 * E))
    dec["wo2"], dec["bo2"] = w((NLd, E, E)), zeros((NLd, 1, E))
    dec["ln3_g"], dec["ln3_b"] = ln(NLd)
    dec["w1"], dec["b1"] = w((NLd, E, F)), zeros((NLd, 1, F))
    dec["w2"], dec["b2"] = w((NLd, F, E)), zeros((NLd, 1, E))
    dec["norm_g"], dec["norm_b"] = ones((1, E)), zeros((1, E))

    # Fused generator heads: concatenated (E, vi+vv+vf), zero-padded to 128 lanes
    # so the kernel's output store is lane-dense.
    vi, vv, vf = cfg["vocab_i"], cfg["vocab_v"], cfg["vocab_f"]
    vsum = vi + vv + vf
    vpad = max(128, ((vsum + 127) // 128) * 128)
    gen_w = jnp.zeros((E, vpad), jnp.float32).at[:, :vsum].set(
        w((E, vsum), dtype=jnp.float32)).astype(jnp.bfloat16)
    gen_b = jnp.zeros((1, vpad), jnp.float32)

    params = {
        "src_emb": w((cfg["src_vocab"], E), dtype=jnp.float32),
        "tgt_emb_i": w((cfg["vocab_i"], E), dtype=jnp.float32),
        "tgt_emb_v": w((cfg["vocab_v"], E), dtype=jnp.float32),
        "tgt_emb_f": w((cfg["vocab_f"], E), dtype=jnp.float32),
        "enc": enc, "dec": dec,
        "gen_w": gen_w, "gen_b": gen_b,
    }

    # PositionalEncoding buffer: (maxlen, 1, E) with interleaved sin/cos.
    maxlen = cfg["maxlen"]
    den = jnp.exp(-jnp.arange(0, E, 2, dtype=jnp.float32) * math.log(10000.0) / E)
    pos = jnp.arange(maxlen, dtype=jnp.float32).reshape(maxlen, 1)
    pe_buf = jnp.zeros((maxlen, E), jnp.float32)
    pe_buf = pe_buf.at[:, 0::2].set(jnp.sin(pos * den))
    pe_buf = pe_buf.at[:, 1::2].set(jnp.cos(pos * den))
    params["pos_embedding"] = pe_buf[:, None, :]
    return params


# ----------------------------------- main ------------------------------------

if __name__ == "__main__":
    cfg = dict(emb_size=32, nhead=4, dim_feedforward=64,
               num_encoder_layers=2, num_decoder_layers=2,
               src_vocab=20, vocab_i=11, vocab_v=12, vocab_f=13, maxlen=64)

    S, T, B = 8, 8, 2
    key = jax.random.PRNGKey(0)
    kp, ks, ki, kv, kf = jax.random.split(key, 5)
    params = init_params(kp, cfg)

    src = jax.random.randint(ks, (S, B), 0, cfg["src_vocab"], dtype=jnp.int32)
    trg = jnp.stack([
        jax.random.randint(ki, (T, B), 0, cfg["vocab_i"], dtype=jnp.int32),
        jax.random.randint(kv, (T, B), 0, cfg["vocab_v"], dtype=jnp.int32),
        jax.random.randint(kf, (T, B), 0, cfg["vocab_f"], dtype=jnp.int32),
    ], axis=-1)                                            # (T, B, 3)

    src_mask = jnp.zeros((S, S), jnp.float32)
    tgt_mask = jnp.triu(jnp.full((T, T), -jnp.inf, jnp.float32), k=1)  # causal
    src_padding_mask = jnp.zeros((B, S), dtype=bool)
    tgt_padding_mask = jnp.zeros((B, T), dtype=bool)
    memory_key_padding_mask = jnp.zeros((B, S), dtype=bool)

    fwd = jax.jit(lambda *a: transformer_forward(params, cfg, *a))
    logits_i, logits_v, logits_f = fwd(src, trg, src_mask, tgt_mask,
                                       src_padding_mask, tgt_padding_mask,
                                       memory_key_padding_mask)
    jax.block_until_ready((logits_i, logits_v, logits_f))

    assert logits_i.shape == (T, B, cfg["vocab_i"])
    assert logits_v.shape == (T, B, cfg["vocab_v"])
    assert logits_f.shape == (T, B, cfg["vocab_f"])
    assert bool(jnp.all(jnp.isfinite(logits_i)))
    assert bool(jnp.all(jnp.isfinite(logits_v)))
    assert bool(jnp.all(jnp.isfinite(logits_f)))
    print("KERNEL_OK")
</pallas_src>

<mosaic_0001>
module attributes {stable_mosaic.version = 11 : i64} {
  func.func @_encoder_layer_kernel(%arg0: i32, %arg1: i32, %arg2: memref<1x8x32xf32, #tpu.memory_space<vmem>>, %arg3: memref<1x8x8xbf16, #tpu.memory_space<vmem>>, %arg4: memref<1x1x32xf32, #tpu.memory_space<vmem>>, %arg5: memref<1x1x32xf32, #tpu.memory_space<vmem>>, %arg6: memref<1x32x96xbf16, #tpu.memory_space<vmem>>, %arg7: memref<1x1x96xf32, #tpu.memory_space<vmem>>, %arg8: memref<1x32x32xbf16, #tpu.memory_space<vmem>>, %arg9: memref<1x1x32xf32, #tpu.memory_space<vmem>>, %arg10: memref<1x1x32xf32, #tpu.memory_space<vmem>>, %arg11: memref<1x1x32xf32, #tpu.memory_space<vmem>>, %arg12: memref<1x32x64xbf16, #tpu.memory_space<vmem>>, %arg13: memref<1x1x64xf32, #tpu.memory_space<vmem>>, %arg14: memref<1x64x32xbf16, #tpu.memory_space<vmem>>, %arg15: memref<1x1x32xf32, #tpu.memory_space<vmem>>, %arg16: memref<1x32xf32, #tpu.memory_space<vmem>>, %arg17: memref<1x32xf32, #tpu.memory_space<vmem>>, %arg18: memref<1x8x32xbf16, #tpu.memory_space<vmem>>, %arg19: memref<8x32xf32, #tpu.memory_space<vmem>>, %arg20: memref<32x8xf32, #tpu.memory_space<vmem>>) attributes {dimension_semantics = [#tpu.dimension_semantics<parallel>, #tpu.dimension_semantics<arbitrary>], iteration_bounds = array<i64: 2, 2>, scalar_prefetch = 0 : i64, scratch_operands = 2 : i64, tpu.core_type = #tpu.core_type<tc>, window_params = [{transform_indices = @transform_0, window_bounds = array<i64: 1, 8, 32>}, {transform_indices = @transform_1, window_bounds = array<i64: 1, 8, 8>}, {transform_indices = @transform_2, window_bounds = array<i64: 1, 1, 32>}, {transform_indices = @transform_3, window_bounds = array<i64: 1, 1, 32>}, {transform_indices = @transform_4, window_bounds = array<i64: 1, 32, 96>}, {transform_indices = @transform_5, window_bounds = array<i64: 1, 1, 96>}, {transform_indices = @transform_6, window_bounds = array<i64: 1, 32, 32>}, {transform_indices = @transform_7, window_bounds = array<i64: 1, 1, 32>}, {transform_indices = @transform_8, window_bounds = array<i64: 1, 1, 32>}, {transform_indices = @transform_9, window_bounds = array<i64: 1, 1, 32>}, {transform_indices = @transform_10, window_bounds = array<i64: 1, 32, 64>}, {transform_indices = @transform_11, window_bounds = array<i64: 1, 1, 64>}, {transform_indices = @transform_12, window_bounds = array<i64: 1, 64, 32>}, {transform_indices = @transform_13, window_bounds = array<i64: 1, 1, 32>}, {pipeline_mode = #tpu.pipeline_mode<synchronous>, transform_indices = @transform_14, window_bounds = array<i64: 1, 32>}, {pipeline_mode = #tpu.pipeline_mode<synchronous>, transform_indices = @transform_15, window_bounds = array<i64: 1, 32>}, {transform_indices = @transform_16, window_bounds = array<i64: 1, 8, 32>}]} {
    %c0_i32 = arith.constant 0 : i32
    %0 = arith.cmpi eq, %arg1, %c0_i32 : i32
    %1 = arith.extui %0 : i1 to i32
    %c0_i32_0 = arith.constant 0 : i32
    %2 = arith.cmpi ne, %1, %c0_i32_0 : i32
    scf.if %2 {
      %c0_68 = arith.constant 0 : index
      %c0_69 = arith.constant 0 : index
      %c0_70 = arith.constant 0 : index
      %143 = vector.load %arg2[%c0_68, %c0_69, %c0_70] : memref<1x8x32xf32, #tpu.memory_space<vmem>>, vector<1x8x32xf32>
      %144 = vector.shape_cast %143 : vector<1x8x32xf32> to vector<8x32xf32>
      %c0_71 = arith.constant 0 : index
      %c0_72 = arith.constant 0 : index
      %145 = vector.load %arg19[%c0_71, %c0_72] : memref<8x32xf32, #tpu.memory_space<vmem>>, vector<8x32xf32>
      tpu.vector_store %arg19[%c0_71, %c0_72], %144 {strides = array<i32>} : memref<8x32xf32, #tpu.memory_space<vmem>>, vector<8x32xf32>,
      %c0_73 = arith.constant 0 : index
      %c0_74 = arith.constant 0 : index
      %c0_75 = arith.constant 0 : index
      %146 = vector.load %arg3[%c0_73, %c0_74, %c0_75] : memref<1x8x8xbf16, #tpu.memory_space<vmem>>, vector<1x8x8xbf16>
      %147 = vector.shape_cast %146 : vector<1x8x8xbf16> to vector<8x8xbf16>
      %148 = arith.extf %147 : vector<8x8xbf16> to vector<8x8xf32>
      %149 = tpu.concatenate %148, %148, %148, %148 in 0 : vector<8x8xf32>, vector<8x8xf32>, vector<8x8xf32>, vector<8x8xf32> -> vector<32x8xf32>
      %c0_76 = arith.constant 0 : index
      %c0_77 = arith.constant 0 : index
      %150 = vector.load %arg20[%c0_76, %c0_77] : memref<32x8xf32, #tpu.memory_space<vmem>>, vector<32x8xf32>
      tpu.vector_store %arg20[%c0_76, %c0_77], %149 {strides = array<i32>} : memref<32x8xf32, #tpu.memory_space<vmem>>, vector<32x8xf32>,
    } else {
    }
    %c0 = arith.constant 0 : index
    %c0_1 = arith.constant 0 : index
    %3 = vector.load %arg19[%c0, %c0_1] : memref<8x32xf32, #tpu.memory_space<vmem>>, vector<8x32xf32>
    %c0_2 = arith.constant 0 : index
    %c0_3 = arith.constant 0 : index
    %4 = vector.load %arg20[%c0_2, %c0_3] : memref<32x8xf32, #tpu.memory_space<vmem>>, vector<32x8xf32>
    %c0_4 = arith.constant 0 : index
    %c0_5 = arith.constant 0 : index
    %c0_6 = arith.constant 0 : index
    %5 = vector.load %arg4[%c0_4, %c0_5, %c0_6] : memref<1x1x32xf32, #tpu.memory_space<vmem>>, vector<1x1x32xf32>
    %6 = vector.shape_cast %5 : vector<1x1x32xf32> to vector<1x32xf32>
    %c0_7 = arith.constant 0 : index
    %c0_8 = arith.constant 0 : index
    %c0_9 = arith.constant 0 : index
    %7 = vector.load %arg5[%c0_7, %c0_8, %c0_9] : memref<1x1x32xf32, #tpu.memory_space<vmem>>, vector<1x1x32xf32>
    %8 = vector.shape_cast %7 : vector<1x1x32xf32> to vector<1x32xf32>
    %cst = arith.constant dense<0.000000e+00> : vector<8xf32>
    %9 = vector.multi_reduction <add>, %3, %cst [1] : vector<8x32xf32> to vector<8xf32>
    %10 = vector.shape_cast %9 : vector<8xf32> to vector<8x1xf32>
    %cst_10 = arith.constant 3.200000e+01 : f32
    %11 = vector.broadcast %cst_10 : f32 to vector<8x1xf32>
    %12 = arith.divf %10, %11 : vector<8x1xf32>
    %13 = vector.broadcast %12 : vector<8x1xf32> to vector<8x32xf32>
    %14 = arith.subf %3, %13 : vector<8x32xf32>
    %15 = arith.mulf %14, %14 : vector<8x32xf32>
    %cst_11 = arith.constant dense<0.000000e+00> : vector<8xf32>
    %16 = vector.multi_reduction <add>, %15, %cst_11 [1] : vector<8x32xf32> to vector<8xf32>
    %17 = vector.shape_cast %16 : vector<8xf32> to vector<8x1xf32>
    %cst_12 = arith.constant 3.200000e+01 : f32
    %18 = vector.broadcast %cst_12 : f32 to vector<8x1xf32>
    %19 = arith.divf %17, %18 : vector<8x1xf32>
    %20 = vector.broadcast %12 : vector<8x1xf32> to vector<8x32xf32>
    %21 = arith.subf %3, %20 : vector<8x32xf32>
    %cst_13 = arith.constant 9.99999974E-6 : f32
    %22 = vector.broadcast %cst_13 : f32 to vector<8x1xf32>
    %23 = arith.addf %19, %22 : vector<8x1xf32>
    %24 = math.rsqrt %23 : vector<8x1xf32>
    %25 = vector.broadcast %24 : vector<8x1xf32> to vector<8x32xf32>
    %26 = arith.mulf %21, %25 : vector<8x32xf32>
    %27 = vector.broadcast %6 : vector<1x32xf32> to vector<8x32xf32>
    %28 = arith.mulf %26, %27 : vector<8x32xf32>
    %29 = vector.broadcast %8 : vector<1x32xf32> to vector<8x32xf32>
    %30 = arith.addf %28, %29 : vector<8x32xf32>
    %31 = arith.truncf %30 : vector<8x32xf32> to vector<8x32xbf16>
    %c0_14 = arith.constant 0 : index
    %c0_15 = arith.constant 0 : index
    %c0_16 = arith.constant 0 : index
    %32 = vector.load %arg6[%c0_14, %c0_15, %c0_16] : memref<1x32x96xbf16, #tpu.memory_space<vmem>>, vector<1x32x96xbf16>
    %33 = vector.shape_cast %32 : vector<1x32x96xbf16> to vector<32x96xbf16>
    %cst_17 = arith.constant dense<0.000000e+00> : vector<8x96xf32>
    %34 = tpu.matmul %31, %33, %cst_17 {dimension_numbers = #tpu.dot_dimension_numbers<[1], [0], [0], [1], [0, 0, 1, 1], [], []>} : vector<8x32xbf16>, vector<32x96xbf16>, vector<8x96xf32> -> vector<8x96xf32>
    %c0_18 = arith.constant 0 : index
    %c0_19 = arith.constant 0 : index
    %c0_20 = arith.constant 0 : index
    %35 = vector.load %arg7[%c0_18, %c0_19, %c0_20] : memref<1x1x96xf32, #tpu.memory_space<vmem>>, vector<1x1x96xf32>
    %36 = vector.shape_cast %35 : vector<1x1x96xf32> to vector<1x96xf32>
    %37 = vector.broadcast %36 : vector<1x96xf32> to vector<8x96xf32>
    %38 = arith.addf %34, %37 : vector<8x96xf32>
    %39 = vector.extract_strided_slice %38 {offsets = [0, 0], sizes = [8, 32], strides = [1, 1]} : vector<8x96xf32> to vector<8x32xf32>
    %cst_21 = arith.constant 0.353553385 : f32
    %40 = vector.broadcast %cst_21 : f32 to vector<8x32xf32>
    %41 = arith.mulf %39, %40 : vector<8x32xf32>
    %42 = vector.extract_strided_slice %38 {offsets = [0, 32], sizes = [8, 32], strides = [1, 1]} : vector<8x96xf32> to vector<8x32xf32>
    %43 = vector.extract_strided_slice %38 {offsets = [0, 64], sizes = [8, 32], strides = [1, 1]} : vector<8x96xf32> to vector<8x32xf32>
    %c0_22 = arith.constant 0 : index
    %c0_23 = arith.constant 0 : index
    %c0_24 = arith.constant 0 : index
    %44 = vector.load %arg8[%c0_22, %c0_23, %c0_24] : memref<1x32x32xbf16, #tpu.memory_space<vmem>>, vector<1x32x32xbf16>
    %45 = vector.shape_cast %44 : vector<1x32x32xbf16> to vector<32x32xbf16>
    %46 = arith.truncf %41 : vector<8x32xf32> to vector<8x32xbf16>
    %47 = arith.truncf %42 : vector<8x32xf32> to vector<8x32xbf16>
    %48 = arith.truncf %43 : vector<8x32xf32> to vector<8x32xbf16>
    %49 = vector.extract_strided_slice %46 {offsets = [0, 0], sizes = [8, 8], strides = [1, 1]} : vector<8x32xbf16> to vector<8x8xbf16>
    %50 = vector.extract_strided_slice %47 {offsets = [0, 0], sizes = [8, 8], strides = [1, 1]} : vector<8x32xbf16> to vector<8x8xbf16>
    %cst_25 = arith.constant dense<0.000000e+00> : vector<8x8xf32>
    %51 = tpu.matmul %49, %50, %cst_25 {dimension_numbers = #tpu.dot_dimension_numbers<[1], [1], [0], [0], [0, 0, 1, 0], [], []>} : vector<8x8xbf16>, vector<8x8xbf16>, vector<8x8xf32> -> vector<8x8xf32>
    %52 = vector.extract_strided_slice %46 {offsets = [0, 8], sizes = [8, 8], strides = [1, 1]} : vector<8x32xbf16> to vector<8x8xbf16>
    %53 = vector.extract_strided_slice %47 {offsets = [0, 8], sizes = [8, 8], strides = [1, 1]} : vector<8x32xbf16> to vector<8x8xbf16>
    %cst_26 = arith.constant dense<0.000000e+00> : vector<8x8xf32>
    %54 = tpu.matmul %52, %53, %cst_26 {dimension_numbers = #tpu.dot_dimension_numbers<[1], [1], [0], [0], [0, 0, 1, 0], [], []>} : vector<8x8xbf16>, vector<8x8xbf16>, vector<8x8xf32> -> vector<8x8xf32>
    %55 = vector.extract_strided_slice %46 {offsets = [0, 16], sizes = [8, 8], strides = [1, 1]} : vector<8x32xbf16> to vector<8x8xbf16>
    %56 = vector.extract_strided_slice %47 {offsets = [0, 16], sizes = [8, 8], strides = [1, 1]} : vector<8x32xbf16> to vector<8x8xbf16>
    %cst_27 = arith.constant dense<0.000000e+00> : vector<8x8xf32>
    %57 = tpu.matmul %55, %56, %cst_27 {dimension_numbers = #tpu.dot_dimension_numbers<[1], [1], [0], [0], [0, 0, 1, 0], [], []>} : vector<8x8xbf16>, vector<8x8xbf16>, vector<8x8xf32> -> vector<8x8xf32>
    %58 = vector.extract_strided_slice %46 {offsets = [0, 24], sizes = [8, 8], strides = [1, 1]} : vector<8x32xbf16> to vector<8x8xbf16>
    %59 = vector.extract_strided_slice %47 {offsets = [0, 24], sizes = [8, 8], strides = [1, 1]} : vector<8x32xbf16> to vector<8x8xbf16>
    %cst_28 = arith.constant dense<0.000000e+00> : vector<8x8xf32>
    %60 = tpu.matmul %58, %59, %cst_28 {dimension_numbers = #tpu.dot_dimension_numbers<[1], [1], [0], [0], [0, 0, 1, 0], [], []>} : vector<8x8xbf16>, vector<8x8xbf16>, vector<8x8xf32> -> vector<8x8xf32>
    %61 = tpu.concatenate %51, %54, %57, %60 in 0 : vector<8x8xf32>, vector<8x8xf32>, vector<8x8xf32>, vector<8x8xf32> -> vector<32x8xf32>
    %62 = arith.addf %61, %4 : vector<32x8xf32>
    %cst_29 = arith.constant dense<0xFF800000> : vector<32xf32>
    %63 = vector.multi_reduction <maximumf>, %62, %cst_29 [1] : vector<32x8xf32> to vector<32xf32>
    %64 = vector.shape_cast %63 : vector<32xf32> to vector<32x1xf32>
    %65 = vector.broadcast %64 : vector<32x1xf32> to vector<32x8xf32>
    %66 = arith.subf %62, %65 : vector<32x8xf32>
    %67 = math.exp %66 : vector<32x8xf32>
    %cst_30 = arith.constant dense<0.000000e+00> : vector<32xf32>
    %68 = vector.multi_reduction <add>, %67, %cst_30 [1] : vector<32x8xf32> to vector<32xf32>
    %69 = vector.shape_cast %68 : vector<32xf32> to vector<32x1xf32>
    %70 = tpu.reciprocal %69 {approx = true} : vector<32x1xf32> -> vector<32x1xf32>
    %71 = vector.broadcast %70 : vector<32x1xf32> to vector<32x8xf32>
    %72 = arith.mulf %67, %71 : vector<32x8xf32>
    %73 = arith.truncf %72 : vector<32x8xf32> to vector<32x8xbf16>
    %74 = vector.extract_strided_slice %73 {offsets = [0, 0], sizes = [8, 8], strides = [1, 1]} : vector<32x8xbf16> to vector<8x8xbf16>
    %75 = vector.extract_strided_slice %48 {offsets = [0, 0], sizes = [8, 8], strides = [1, 1]} : vector<8x32xbf16> to vector<8x8xbf16>
    %cst_31 = arith.constant dense<0.000000e+00> : vector<8x8xf32>
    %76 = tpu.matmul %74, %75, %cst_31 {dimension_numbers = #tpu.dot_dimension_numbers<[1], [0], [0], [1], [0, 0, 1, 1], [], []>} : vector<8x8xbf16>, vector<8x8xbf16>, vector<8x8xf32> -> vector<8x8xf32>
    %77 = vector.extract_strided_slice %73 {offsets = [8, 0], sizes = [8, 8], strides = [1, 1]} : vector<32x8xbf16> to vector<8x8xbf16>
    %78 = vector.extract_strided_slice %48 {offsets = [0, 8], sizes = [8, 8], strides = [1, 1]} : vector<8x32xbf16> to vector<8x8xbf16>
    %cst_32 = arith.constant dense<0.000000e+00> : vector<8x8xf32>
    %79 = tpu.matmul %77, %78, %cst_32 {dimension_numbers = #tpu.dot_dimension_numbers<[1], [0], [0], [1], [0, 0, 1, 1], [], []>} : vector<8x8xbf16>, vector<8x8xbf16>, vector<8x8xf32> -> vector<8x8xf32>
    %80 = vector.extract_strided_slice %73 {offsets = [16, 0], sizes = [8, 8], strides = [1, 1]} : vector<32x8xbf16> to vector<8x8xbf16>
    %81 = vector.extract_strided_slice %48 {offsets = [0, 16], sizes = [8, 8], strides = [1, 1]} : vector<8x32xbf16> to vector<8x8xbf16>
    %cst_33 = arith.constant dense<0.000000e+00> : vector<8x8xf32>
    %82 = tpu.matmul %80, %81, %cst_33 {dimension_numbers = #tpu.dot_dimension_numbers<[1], [0], [0], [1], [0, 0, 1, 1], [], []>} : vector<8x8xbf16>, vector<8x8xbf16>, vector<8x8xf32> -> vector<8x8xf32>
    %83 = vector.extract_strided_slice %73 {offsets = [24, 0], sizes = [8, 8], strides = [1, 1]} : vector<32x8xbf16> to vector<8x8xbf16>
    %84 = vector.extract_strided_slice %48 {offsets = [0, 24], sizes = [8, 8], strides = [1, 1]} : vector<8x32xbf16> to vector<8x8xbf16>
    %cst_34 = arith.constant dense<0.000000e+00> : vector<8x8xf32>
    %85 = tpu.matmul %83, %84, %cst_34 {dimension_numbers = #tpu.dot_dimension_numbers<[1], [0], [0], [1], [0, 0, 1, 1], [], []>} : vector<8x8xbf16>, vector<8x8xbf16>, vector<8x8xf32> -> vector<8x8xf32>
    %86 = tpu.concatenate %76, %79, %82, %85 in 1 : vector<8x8xf32>, vector<8x8xf32>, vector<8x8xf32>, vector<8x8xf32> -> vector<8x32xf32>
    %87 = arith.truncf %86 : vector<8x32xf32> to vector<8x32xbf16>
    %cst_35 = arith.constant dense<0.000000e+00> : vector<8x32xf32>
    %88 = tpu.matmul %87, %45, %cst_35 {dimension_numbers = #tpu.dot_dimension_numbers<[1], [0], [0], [1], [0, 0, 1, 1], [], []>} : vector<8x32xbf16>, vector<32x32xbf16>, vector<8x32xf32> -> vector<8x32xf32>
    %89 = arith.addf %3, %88 : vector<8x32xf32>
    %c0_36 = arith.constant 0 : index
    %c0_37 = arith.constant 0 : index
    %c0_38 = arith.constant 0 : index
    %90 = vector.load %arg9[%c0_36, %c0_37, %c0_38] : memref<1x1x32xf32, #tpu.memory_space<vmem>>, vector<1x1x32xf32>
    %91 = vector.shape_cast %90 : vector<1x1x32xf32> to vector<1x32xf32>
    %92 = vector.broadcast %91 : vector<1x32xf32> to vector<8x32xf32>
    %93 = arith.addf %89, %92 : vector<8x32xf32>
    %c0_39 = arith.constant 0 : index
    %c0_40 = arith.constant 0 : index
    %c0_41 = arith.constant 0 : index
    %94 = vector.load %arg10[%c0_39, %c0_40, %c0_41] : memref<1x1x32xf32, #tpu.memory_space<vmem>>, vector<1x1x32xf32>
    %95 = vector.shape_cast %94 : vector<1x1x32xf32> to vector<1x32xf32>
    %c0_42 = arith.constant 0 : index
    %c0_43 = arith.constant 0 : index
    %c0_44 = arith.constant 0 : index
    %96 = vector.load %arg11[%c0_42, %c0_43, %c0_44] : memref<1x1x32xf32, #tpu.memory_space<vmem>>, vector<1x1x32xf32>
    %97 = vector.shape_cast %96 : vector<1x1x32xf32> to vector<1x32xf32>
    %cst_45 = arith.constant dense<0.000000e+00> : vector<8xf32>
    %98 = vector.multi_reduction <add>, %93, %cst_45 [1] : vector<8x32xf32> to vector<8xf32>
    %99 = vector.shape_cast %98 : vector<8xf32> to vector<8x1xf32>
    %cst_46 = arith.constant 3.200000e+01 : f32
    %100 = vector.broadcast %cst_46 : f32 to vector<8x1xf32>
    %101 = arith.divf %99, %100 : vector<8x1xf32>
    %102 = vector.broadcast %101 : vector<8x1xf32> to vector<8x32xf32>
    %103 = arith.subf %93, %102 : vector<8x32xf32>
    %104 = arith.mulf %103, %103 : vector<8x32xf32>
    %cst_47 = arith.constant dense<0.000000e+00> : vector<8xf32>
    %105 = vector.multi_reduction <add>, %104, %cst_47 [1] : vector<8x32xf32> to vector<8xf32>
    %106 = vector.shape_cast %105 : vector<8xf32> to vector<8x1xf32>
    %cst_48 = arith.constant 3.200000e+01 : f32
    %107 = vector.broadcast %cst_48 : f32 to vector<8x1xf32>
    %108 = arith.divf %106, %107 : vector<8x1xf32>
    %109 = vector.broadcast %101 : vector<8x1xf32> to vector<8x32xf32>
    %110 = arith.subf %93, %109 : vector<8x32xf32>
    %cst_49 = arith.constant 9.99999974E-6 : f32
    %111 = vector.broadcast %cst_49 : f32 to vector<8x1xf32>
    %112 = arith.addf %108, %111 : vector<8x1xf32>
    %113 = math.rsqrt %112 : vector<8x1xf32>
    %114 = vector.broadcast %113 : vector<8x1xf32> to vector<8x32xf32>
    %115 = arith.mulf %110, %114 : vector<8x32xf32>
    %116 = vector.broadcast %95 : vector<1x32xf32> to vector<8x32xf32>
    %117 = arith.mulf %115, %116 : vector<8x32xf32>
    %118 = vector.broadcast %97 : vector<1x32xf32> to vector<8x32xf32>
    %119 = arith.addf %117, %118 : vector<8x32xf32>
    %120 = arith.truncf %119 : vector<8x32xf32> to vector<8x32xbf16>
    %c0_50 = arith.constant 0 : index
    %c0_51 = arith.constant 0 : index
    %c0_52 = arith.constant 0 : index
    %121 = vector.load %arg12[%c0_50, %c0_51, %c0_52] : memref<1x32x64xbf16, #tpu.memory_space<vmem>>, vector<1x32x64xbf16>
    %122 = vector.shape_cast %121 : vector<1x32x64xbf16> to vector<32x64xbf16>
    %cst_53 = arith.constant dense<0.000000e+00> : vector<8x64xf32>
    %123 = tpu.matmul %120, %122, %cst_53 {dimension_numbers = #tpu.dot_dimension_numbers<[1], [0], [0], [1], [0, 0, 1, 1], [], []>} : vector<8x32xbf16>, vector<32x64xbf16>, vector<8x64xf32> -> vector<8x64xf32>
    %c0_54 = arith.constant 0 : index
    %c0_55 = arith.constant 0 : index
    %c0_56 = arith.constant 0 : index
    %124 = vector.load %arg13[%c0_54, %c0_55, %c0_56] : memref<1x1x64xf32, #tpu.memory_space<vmem>>, vector<1x1x64xf32>
    %125 = vector.shape_cast %124 : vector<1x1x64xf32> to vector<1x64xf32>
    %126 = vector.broadcast %125 : vector<1x64xf32> to vector<8x64xf32>
    %127 = arith.addf %123, %126 : vector<8x64xf32>
    %cst_57 = arith.constant 0.000000e+00 : f32
    %128 = vector.broadcast %cst_57 : f32 to vector<8x64xf32>
    %129 = arith.maximumf %127, %128 : vector<8x64xf32>
    %130 = arith.truncf %129 : vector<8x64xf32> to vector<8x64xbf16>
    %c0_58 = arith.constant 0 : index
    %c0_59 = arith.constant 0 : index
    %c0_60 = arith.constant 0 : index
    %131 = vector.load %arg14[%c0_58, %c0_59, %c0_60] : memref<1x64x32xbf16, #tpu.memory_space<vmem>>, vector<1x64x32xbf16>
    %132 = vector.shape_cast %131 : vector<1x64x32xbf16> to vector<64x32xbf16>
    %cst_61 = arith.constant dense<0.000000e+00> : vector<8x32xf32>
    %133 = tpu.matmul %130, %132, %cst_61 {dimension_numbers = #tpu.dot_dimension_numbers<[1], [0], [0], [1], [0, 0, 1, 1], [], []>} : vector<8x64xbf16>, vector<64x32xbf16>, vector<8x32xf32> -> vector<8x32xf32>
    %134 = arith.addf %93, %133 : vector<8x32xf32>
    %c0_62 = arith.constant 0 : index
    %c0_63 = arith.constant 0 : index
    %c0_64 = arith.constant 0 : index
    %135 = vector.load %arg15[%c0_62, %c0_63, %c0_64] : memref<1x1x32xf32, #tpu.memory_space<vmem>>, vector<1x1x32xf32>
    %136 = vector.shape_cast %135 : vector<1x1x32xf32> to vector<1x32xf32>
    %137 = vector.broadcast %136 : vector<1x32xf32> to vector<8x32xf32>
    %138 = arith.addf %134, %137 : vector<8x32xf32>
    %c0_65 = arith.constant 0 : index
    %c0_66 = arith.constant 0 : index
    %139 = vector.load %arg19[%c0_65, %c0_66] : memref<8x32xf32, #tpu.memory_space<vmem>>, vector<8x32xf32>
    tpu.vector_store %arg19[%c0_65, %c0_66], %138 {strides = array<i32>} : memref<8x32xf32, #tpu.memory_space<vmem>>, vector<8x32xf32>,
    %c1_i32 = arith.constant 1 : i32
    %140 = arith.cmpi eq, %arg1, %c1_i32 : i32
    %141 = arith.extui %140 : i1 to i32
    %c0_i32_67 = arith.constant 0 : i32
    %142 = arith.cmpi ne, %141, %c0_i32_67 : i32
    scf.if %142 {
      %c0_68 = arith.constant 0 : index
      %c0_69 = arith.constant 0 : index
      %143 = vector.load %arg16[%c0_68, %c0_69] : memref<1x32xf32, #tpu.memory_space<vmem>>, vector<1x32xf32>
      %c0_70 = arith.constant 0 : index
      %c0_71 = arith.constant 0 : index
      %144 = vector.load %arg17[%c0_70, %c0_71] : memref<1x32xf32, #tpu.memory_space<vmem>>, vector<1x32xf32>
      %cst_72 = arith.constant dense<0.000000e+00> : vector<8xf32>
      %145 = vector.multi_reduction <add>, %138, %cst_72 [1] : vector<8x32xf32> to vector<8xf32>
      %146 = vector.shape_cast %145 : vector<8xf32> to vector<8x1xf32>
      %cst_73 = arith.constant 3.200000e+01 : f32
      %147 = vector.broadcast %cst_73 : f32 to vector<8x1xf32>
      %148 = arith.divf %146, %147 : vector<8x1xf32>
      %149 = vector.broadcast %148 : vector<8x1xf32> to vector<8x32xf32>
      %150 = arith.subf %138, %149 : vector<8x32xf32>
      %151 = arith.mulf %150, %150 : vector<8x32xf32>
      %cst_74 = arith.constant dense<0.000000e+00> : vector<8xf32>
      %152 = vector.multi_reduction <add>, %151, %cst_74 [1] : vector<8x32xf32> to vector<8xf32>
      %153 = vector.shape_cast %152 : vector<8xf32> to vector<8x1xf32>
      %cst_75 = arith.constant 3.200000e+01 : f32
      %154 = vector.broadcast %cst_75 : f32 to vector<8x1xf32>
      %155 = arith.divf %153, %154 : vector<8x1xf32>
      %156 = vector.broadcast %148 : vector<8x1xf32> to vector<8x32xf32>
      %157 = arith.subf %138, %156 : vector<8x32xf32>
      %cst_76 = arith.constant 9.99999974E-6 : f32
      %158 = vector.broadcast %cst_76 : f32 to vector<8x1xf32>
      %159 = arith.addf %155, %158 : vector<8x1xf32>
      %160 = math.rsqrt %159 : vector<8x1xf32>
      %161 = vector.broadcast %160 : vector<8x1xf32> to vector<8x32xf32>
      %162 = arith.mulf %157, %161 : vector<8x32xf32>
      %163 = vector.broadcast %143 : vector<1x32xf32> to vector<8x32xf32>
      %164 = arith.mulf %162, %163 : vector<8x32xf32>
      %165 = vector.broadcast %144 : vector<1x32xf32> to vector<8x32xf32>
      %166 = arith.addf %164, %165 : vector<8x32xf32>
      %167 = arith.truncf %166 : vector<8x32xf32> to vector<8x32xbf16>
      %c0_77 = arith.constant 0 : index
      %c0_78 = arith.constant 0 : index
      %c0_79 = arith.constant 0 : index
      %168 = vector.load %arg18[%c0_77, %c0_78, %c0_79] : memref<1x8x32xbf16, #tpu.memory_space<vmem>>, vector<1x8x32xbf16>
      %169 = vector.shape_cast %168 : vector<1x8x32xbf16> to vector<8x32xbf16>
      %170 = vector.shape_cast %167 : vector<8x32xbf16> to vector<1x8x32xbf16>
      tpu.vector_store %arg18[%c0_77, %c0_78, %c0_79], %170 {strides = array<i32>} : memref<1x8x32xbf16, #tpu.memory_space<vmem>>, vector<1x8x32xbf16>,
    } else {
    }
    return
  }
  func.func @transform_0(%arg0: i32, %arg1: i32) -> (i32, i32, i32) {
    %c0_i32 = arith.constant 0 : i32
    %c0_i32_0 = arith.constant 0 : i32
    %c0_i32_1 = arith.constant 0 : i32
    return %arg0, %c0_i32, %c0_i32_0 : i32, i32, i32
  }
  func.func @transform_1(%arg0: i32, %arg1: i32) -> (i32, i32, i32) {
    %c0_i32 = arith.constant 0 : i32
    %c0_i32_0 = arith.constant 0 : i32
    %c0_i32_1 = arith.constant 0 : i32
    return %arg0, %c0_i32, %c0_i32_0 : i32, i32, i32
  }
  func.func @transform_2(%arg0: i32, %arg1: i32) -> (i32, i32, i32) {
    %c0_i32 = arith.constant 0 : i32
    %c0_i32_0 = arith.constant 0 : i32
    %c0_i32_1 = arith.constant 0 : i32
    return %arg1, %c0_i32, %c0_i32_0 : i32, i32, i32
  }
  func.func @transform_3(%arg0: i32, %arg1: i32) -> (i32, i32, i32) {
    %c0_i32 = arith.constant 0 : i32
    %c0_i32_0 = arith.constant 0 : i32
    %c0_i32_1 = arith.constant 0 : i32
    return %arg1, %c0_i32, %c0_i32_0 : i32, i32, i32
  }
  func.func @transform_4(%arg0: i32, %arg1: i32) -> (i32, i32, i32) {
    %c0_i32 = arith.constant 0 : i32
    %c0_i32_0 = arith.constant 0 : i32
    %c0_i32_1 = arith.constant 0 : i32
    return %arg1, %c0_i32, %c0_i32_0 : i32, i32, i32
  }
  func.func @transform_5(%arg0: i32, %arg1: i32) -> (i32, i32, i32) {
    %c0_i32 = arith.constant 0 : i32
    %c0_i32_0 = arith.constant 0 : i32
    %c0_i32_1 = arith.constant 0 : i32
    return %arg1, %c0_i32, %c0_i32_0 : i32, i32, i32
  }
  func.func @transform_6(%arg0: i32, %arg1: i32) -> (i32, i32, i32) {
    %c0_i32 = arith.constant 0 : i32
    %c0_i32_0 = arith.constant 0 : i32
    %c0_i32_1 = arith.constant 0 : i32
    return %arg1, %c0_i32, %c0_i32_0 : i32, i32, i32
  }
  func.func @transform_7(%arg0: i32, %arg1: i32) -> (i32, i32, i32) {
    %c0_i32 = arith.constant 0 : i32
    %c0_i32_0 = arith.constant 0 : i32
    %c0_i32_1 = arith.constant 0 : i32
    return %arg1, %c0_i32, %c0_i32_0 : i32, i32, i32
  }
  func.func @transform_8(%arg0: i32, %arg1: i32) -> (i32, i32, i32) {
    %c0_i32 = arith.constant 0 : i32
    %c0_i32_0 = arith.constant 0 : i32
    %c0_i32_1 = arith.constant 0 : i32
    return %arg1, %c0_i32, %c0_i32_0 : i32, i32, i32
  }
  func.func @transform_9(%arg0: i32, %arg1: i32) -> (i32, i32, i32) {
    %c0_i32 = arith.constant 0 : i32
    %c0_i32_0 = arith.constant 0 : i32
    %c0_i32_1 = arith.constant 0 : i32
    return %arg1, %c0_i32, %c0_i32_0 : i32, i32, i32
  }
  func.func @transform_10(%arg0: i32, %arg1: i32) -> (i32, i32, i32) {
    %c0_i32 = arith.constant 0 : i32
    %c0_i32_0 = arith.constant 0 : i32
    %c0_i32_1 = arith.constant 0 : i32
    return %arg1, %c0_i32, %c0_i32_0 : i32, i32, i32
  }
  func.func @transform_11(%arg0: i32, %arg1: i32) -> (i32, i32, i32) {
    %c0_i32 = arith.constant 0 : i32
    %c0_i32_0 = arith.constant 0 : i32
    %c0_i32_1 = arith.constant 0 : i32
    return %arg1, %c0_i32, %c0_i32_0 : i32, i32, i32
  }
  func.func @transform_12(%arg0: i32, %arg1: i32) -> (i32, i32, i32) {
    %c0_i32 = arith.constant 0 : i32
    %c0_i32_0 = arith.constant 0 : i32
    %c0_i32_1 = arith.constant 0 : i32
    return %arg1, %c0_i32, %c0_i32_0 : i32, i32, i32
  }
  func.func @transform_13(%arg0: i32, %arg1: i32) -> (i32, i32, i32) {
    %c0_i32 = arith.constant 0 : i32
    %c0_i32_0 = arith.constant 0 : i32
    %c0_i32_1 = arith.constant 0 : i32
    return %arg1, %c0_i32, %c0_i32_0 : i32, i32, i32
  }
  func.func @transform_14(%arg0: i32, %arg1: i32) -> (i32, i32) {
    %c0_i32 = arith.constant 0 : i32
    %c0_i32_0 = arith.constant 0 : i32
    %c0_i32_1 = arith.constant 0 : i32
    return %c0_i32, %c0_i32_0 : i32, i32
  }
  func.func @transform_15(%arg0: i32, %arg1: i32) -> (i32, i32) {
    %c0_i32 = arith.constant 0 : i32
    %c0_i32_0 = arith.constant 0 : i32
    %c0_i32_1 = arith.constant 0 : i32
    return %c0_i32, %c0_i32_0 : i32, i32
  }
  func.func @transform_16(%arg0: i32, %arg1: i32) -> (i32, i32, i32) {
    %c0_i32 = arith.constant 0 : i32
    %c0_i32_0 = arith.constant 0 : i32
    %c0_i32_1 = arith.constant 0 : i32
    return %arg0, %c0_i32, %c0_i32_0 : i32, i32, i32
  }
}

module attributes {stable_mosaic.version = 11 : i64} {
  func.func @_decoder_layer_kernel(%arg0: i32, %arg1: i32, %arg2: memref<1x8x32xf32, #tpu.memory_space<vmem>>, %arg3: memref<1x8x32xbf16, #tpu.memory_space<vmem>>, %arg4: memref<1x8x8xbf16, #tpu.memory_space<vmem>>, %arg5: memref<1x1x8xbf16, #tpu.memory_space<vmem>>, %arg6: memref<1x1x32xf32, #tpu.memory_space<vmem>>, %arg7: memref<1x1x32xf32, #tpu.memory_space<vmem>>, %arg8: memref<1x32x96xbf16, #tpu.memory_space<vmem>>, %arg9: memref<1x1x96xf32, #tpu.memory_space<vmem>>, %arg10: memref<1x32x32xbf16, #tpu.memory_space<vmem>>, %arg11: memref<1x1x32xf32, #tpu.memory_space<vmem>>, %arg12: memref<1x1x32xf32, #tpu.memory_space<vmem>>, %arg13: memref<1x1x32xf32, #tpu.memory_space<vmem>>, %arg14: memref<1x32x32xbf16, #tpu.memory_space<vmem>>, %arg15: memref<1x1x32xf32, #tpu.memory_space<vmem>>, %arg16: memref<1x32x64xbf16, #tpu.memory_space<vmem>>, %arg17: memref<1x1x64xf32, #tpu.memory_space<vmem>>, %arg18: memref<1x32x32xbf16, #tpu.memory_space<vmem>>, %arg19: memref<1x1x32xf32, #tpu.memory_space<vmem>>, %arg20: memref<1x1x32xf32, #tpu.memory_space<vmem>>, %arg21: memref<1x1x32xf32, #tpu.memory_space<vmem>>, %arg22: memref<1x32x64xbf16, #tpu.memory_space<vmem>>, %arg23: memref<1x1x64xf32, #tpu.memory_space<vmem>>, %arg24: memref<1x64x32xbf16, #tpu.memory_space<vmem>>, %arg25: memref<1x1x32xf32, #tpu.memory_space<vmem>>, %arg26: memref<1x32xf32, #tpu.memory_space<vmem>>, %arg27: memref<1x32xf32, #tpu.memory_space<vmem>>, %arg28: memref<32x128xbf16, #tpu.memory_space<vmem>>, %arg29: memref<1x128xf32, #tpu.memory_space<vmem>>, %arg30: memref<1x8x128xf32, #tpu.memory_space<vmem>>, %arg31: memref<8x32xf32, #tpu.memory_space<vmem>>, %arg32: memref<32x8xf32, #tpu.memory_space<vmem>>, %arg33: memref<32x8xf32, #tpu.memory_space<vmem>>) attributes {dimension_semantics = [#tpu.dimension_semantics<parallel>, #tpu.dimension_semantics<arbitrary>], iteration_bounds = array<i64: 2, 2>, scalar_prefetch = 0 : i64, scratch_operands = 3 : i64, tpu.core_type = #tpu.core_type<tc>, window_params = [{transform_indices = @transform_0, window_bounds = array<i64: 1, 8, 32>}, {transform_indices = @transform_1, window_bounds = array<i64: 1, 8, 32>}, {transform_indices = @transform_2, window_bounds = array<i64: 1, 8, 8>}, {transform_indices = @transform_3, window_bounds = array<i64: 1, 1, 8>}, {transform_indices = @transform_4, window_bounds = array<i64: 1, 1, 32>}, {transform_indices = @transform_5, window_bounds = array<i64: 1, 1, 32>}, {transform_indices = @transform_6, window_bounds = array<i64: 1, 32, 96>}, {transform_indices = @transform_7, window_bounds = array<i64: 1, 1, 96>}, {transform_indices = @transform_8, window_bounds = array<i64: 1, 32, 32>}, {transform_indices = @transform_9, window_bounds = array<i64: 1, 1, 32>}, {transform_indices = @transform_10, window_bounds = array<i64: 1, 1, 32>}, {transform_indices = @transform_11, window_bounds = array<i64: 1, 1, 32>}, {transform_indices = @transform_12, window_bounds = array<i64: 1, 32, 32>}, {transform_indices = @transform_13, window_bounds = array<i64: 1, 1, 32>}, {transform_indices = @transform_14, window_bounds = array<i64: 1, 32, 64>}, {transform_indices = @transform_15, window_bounds = array<i64: 1, 1, 64>}, {transform_indices = @transform_16, window_bounds = array<i64: 1, 32, 32>}, {transform_indices = @transform_17, window_bounds = array<i64: 1, 1, 32>}, {transform_indices = @transform_18, window_bounds = array<i64: 1, 1, 32>}, {transform_indices = @transform_19, window_bounds = array<i64: 1, 1, 32>}, {transform_indices = @transform_20, window_bounds = array<i64: 1, 32, 64>}, {transform_indices = @transform_21, window_bounds = array<i64: 1, 1, 64>}, {transform_indices = @transform_22, window_bounds = array<i64: 1, 64, 32>}, {transform_indices = @transform_23, window_bounds = array<i64: 1, 1, 32>}, {pipeline_mode = #tpu.pipeline_mode<synchronous>, transform_indices = @transform_24, window_bounds = array<i64: 1, 32>}, {pipeline_mode = #tpu.pipeline_mode<synchronous>, transform_indices = @transform_25, window_bounds = array<i64: 1, 32>}, {pipeline_mode = #tpu.pipeline_mode<synchronous>, transform_indices = @transform_26, window_bounds = array<i64: 32, 128>}, {pipeline_mode = #tpu.pipeline_mode<synchronous>, transform_indices = @transform_27, window_bounds = array<i64: 1, 128>}, {transform_indices = @transform_28, window_bounds = array<i64: 1, 8, 128>}]} {
    %c0_i32 = arith.constant 0 : i32
    %0 = arith.cmpi eq, %arg1, %c0_i32 : i32
    %1 = arith.extui %0 : i1 to i32
    %c0_i32_0 = arith.constant 0 : i32
    %2 = arith.cmpi ne, %1, %c0_i32_0 : i32
    scf.if %2 {
      %c0_116 = arith.constant 0 : index
      %c0_117 = arith.constant 0 : index
      %c0_118 = arith.constant 0 : index
      %241 = vector.load %arg2[%c0_116, %c0_117, %c0_118] : memref<1x8x32xf32, #tpu.memory_space<vmem>>, vector<1x8x32xf32>
      %242 = vector.shape_cast %241 : vector<1x8x32xf32> to vector<8x32xf32>
      %c0_119 = arith.constant 0 : index
      %c0_120 = arith.constant 0 : index
      %243 = vector.load %arg31[%c0_119, %c0_120] : memref<8x32xf32, #tpu.memory_space<vmem>>, vector<8x32xf32>
      tpu.vector_store %arg31[%c0_119, %c0_120], %242 {strides = array<i32>} : memref<8x32xf32, #tpu.memory_space<vmem>>, vector<8x32xf32>,
      %c0_121 = arith.constant 0 : index
      %c0_122 = arith.constant 0 : index
      %c0_123 = arith.constant 0 : index
      %244 = vector.load %arg4[%c0_121, %c0_122, %c0_123] : memref<1x8x8xbf16, #tpu.memory_space<vmem>>, vector<1x8x8xbf16>
      %245 = vector.shape_cast %244 : vector<1x8x8xbf16> to vector<8x8xbf16>
      %246 = arith.extf %245 : vector<8x8xbf16> to vector<8x8xf32>
      %247 = tpu.concatenate %246, %246, %246, %246 in 0 : vector<8x8xf32>, vector<8x8xf32>, vector<8x8xf32>, vector<8x8xf32> -> vector<32x8xf32>
      %c0_124 = arith.constant 0 : index
      %c0_125 = arith.constant 0 : index
      %248 = vector.load %arg32[%c0_124, %c0_125] : memref<32x8xf32, #tpu.memory_space<vmem>>, vector<32x8xf32>
      tpu.vector_store %arg32[%c0_124, %c0_125], %247 {strides = array<i32>} : memref<32x8xf32, #tpu.memory_space<vmem>>, vector<32x8xf32>,
      %c0_126 = arith.constant 0 : index
      %c0_127 = arith.constant 0 : index
      %c0_128 = arith.constant 0 : index
      %249 = vector.load %arg5[%c0_126, %c0_127, %c0_128] : memref<1x1x8xbf16, #tpu.memory_space<vmem>>, vector<1x1x8xbf16>
      %250 = vector.shape_cast %249 : vector<1x1x8xbf16> to vector<1x8xbf16>
      %251 = arith.extf %250 : vector<1x8xbf16> to vector<1x8xf32>
      %252 = vector.shape_cast %251 : vector<1x8xf32> to vector<1x8xf32>
      %253 = vector.broadcast %252 : vector<1x8xf32> to vector<32x8xf32>
      %c0_129 = arith.constant 0 : index
      %c0_130 = arith.constant 0 : index
      %254 = vector.load %arg33[%c0_129, %c0_130] : memref<32x8xf32, #tpu.memory_space<vmem>>, vector<32x8xf32>
      tpu.vector_store %arg33[%c0_129, %c0_130], %253 {strides = array<i32>} : memref<32x8xf32, #tpu.memory_space<vmem>>, vector<32x8xf32>,
    } else {
    }
    %c0 = arith.constant 0 : index
    %c0_1 = arith.constant 0 : index
    %3 = vector.load %arg31[%c0, %c0_1] : memref<8x32xf32, #tpu.memory_space<vmem>>, vector<8x32xf32>
    %c0_2 = arith.constant 0 : index
    %c0_3 = arith.constant 0 : index
    %c0_4 = arith.constant 0 : index
    %4 = vector.load %arg3[%c0_2, %c0_3, %c0_4] : memref<1x8x32xbf16, #tpu.memory_space<vmem>>, vector<1x8x32xbf16>
    %5 = vector.shape_cast %4 : vector<1x8x32xbf16> to vector<8x32xbf16>
    %c0_5 = arith.constant 0 : index
    %c0_6 = arith.constant 0 : index
    %c0_7 = arith.constant 0 : index
    %6 = vector.load %arg6[%c0_5, %c0_6, %c0_7] : memref<1x1x32xf32, #tpu.memory_space<vmem>>, vector<1x1x32xf32>
    %7 = vector.shape_cast %6 : vector<1x1x32xf32> to vector<1x32xf32>
    %c0_8 = arith.constant 0 : index
    %c0_9 = arith.constant 0 : index
    %c0_10 = arith.constant 0 : index
    %8 = vector.load %arg7[%c0_8, %c0_9, %c0_10] : memref<1x1x32xf32, #tpu.memory_space<vmem>>, vector<1x1x32xf32>
    %9 = vector.shape_cast %8 : vector<1x1x32xf32> to vector<1x32xf32>
    %cst = arith.constant dense<0.000000e+00> : vector<8xf32>
    %10 = vector.multi_reduction <add>, %3, %cst [1] : vector<8x32xf32> to vector<8xf32>
    %11 = vector.shape_cast %10 : vector<8xf32> to vector<8x1xf32>
    %cst_11 = arith.constant 3.200000e+01 : f32
    %12 = vector.broadcast %cst_11 : f32 to vector<8x1xf32>
    %13 = arith.divf %11, %12 : vector<8x1xf32>
    %14 = vector.broadcast %13 : vector<8x1xf32> to vector<8x32xf32>
    %15 = arith.subf %3, %14 : vector<8x32xf32>
    %16 = arith.mulf %15, %15 : vector<8x32xf32>
    %cst_12 = arith.constant dense<0.000000e+00> : vector<8xf32>
    %17 = vector.multi_reduction <add>, %16, %cst_12 [1] : vector<8x32xf32> to vector<8xf32>
    %18 = vector.shape_cast %17 : vector<8xf32> to vector<8x1xf32>
    %cst_13 = arith.constant 3.200000e+01 : f32
    %19 = vector.broadcast %cst_13 : f32 to vector<8x1xf32>
    %20 = arith.divf %18, %19 : vector<8x1xf32>
    %21 = vector.broadcast %13 : vector<8x1xf32> to vector<8x32xf32>
    %22 = arith.subf %3, %21 : vector<8x32xf32>
    %cst_14 = arith.constant 9.99999974E-6 : f32
    %23 = vector.broadcast %cst_14 : f32 to vector<8x1xf32>
    %24 = arith.addf %20, %23 : vector<8x1xf32>
    %25 = math.rsqrt %24 : vector<8x1xf32>
    %26 = vector.broadcast %25 : vector<8x1xf32> to vector<8x32xf32>
    %27 = arith.mulf %22, %26 : vector<8x32xf32>
    %28 = vector.broadcast %7 : vector<1x32xf32> to vector<8x32xf32>
    %29 = arith.mulf %27, %28 : vector<8x32xf32>
    %30 = vector.broadcast %9 : vector<1x32xf32> to vector<8x32xf32>
    %31 = arith.addf %29, %30 : vector<8x32xf32>
    %32 = arith.truncf %31 : vector<8x32xf32> to vector<8x32xbf16>
    %c0_15 = arith.constant 0 : index
    %c0_16 = arith.constant 0 : index
    %c0_17 = arith.constant 0 : index
    %33 = vector.load %arg8[%c0_15, %c0_16, %c0_17] : memref<1x32x96xbf16, #tpu.memory_space<vmem>>, vector<1x32x96xbf16>
    %34 = vector.shape_cast %33 : vector<1x32x96xbf16> to vector<32x96xbf16>
    %cst_18 = arith.constant dense<0.000000e+00> : vector<8x96xf32>
    %35 = tpu.matmul %32, %34, %cst_18 {dimension_numbers = #tpu.dot_dimension_numbers<[1], [0], [0], [1], [0, 0, 1, 1], [], []>} : vector<8x32xbf16>, vector<32x96xbf16>, vector<8x96xf32> -> vector<8x96xf32>
    %c0_19 = arith.constant 0 : index
    %c0_20 = arith.constant 0 : index
    %c0_21 = arith.constant 0 : index
    %36 = vector.load %arg9[%c0_19, %c0_20, %c0_21] : memref<1x1x96xf32, #tpu.memory_space<vmem>>, vector<1x1x96xf32>
    %37 = vector.shape_cast %36 : vector<1x1x96xf32> to vector<1x96xf32>
    %38 = vector.broadcast %37 : vector<1x96xf32> to vector<8x96xf32>
    %39 = arith.addf %35, %38 : vector<8x96xf32>
    %40 = vector.extract_strided_slice %39 {offsets = [0, 0], sizes = [8, 32], strides = [1, 1]} : vector<8x96xf32> to vector<8x32xf32>
    %cst_22 = arith.constant 0.353553385 : f32
    %41 = vector.broadcast %cst_22 : f32 to vector<8x32xf32>
    %42 = arith.mulf %40, %41 : vector<8x32xf32>
    %43 = vector.extract_strided_slice %39 {offsets = [0, 32], sizes = [8, 32], strides = [1, 1]} : vector<8x96xf32> to vector<8x32xf32>
    %44 = vector.extract_strided_slice %39 {offsets = [0, 64], sizes = [8, 32], strides = [1, 1]} : vector<8x96xf32> to vector<8x32xf32>
    %c0_23 = arith.constant 0 : index
    %c0_24 = arith.constant 0 : index
    %c0_25 = arith.constant 0 : index
    %45 = vector.load %arg10[%c0_23, %c0_24, %c0_25] : memref<1x32x32xbf16, #tpu.memory_space<vmem>>, vector<1x32x32xbf16>
    %46 = vector.shape_cast %45 : vector<1x32x32xbf16> to vector<32x32xbf16>
    %c0_26 = arith.constant 0 : index
    %c0_27 = arith.constant 0 : index
    %47 = vector.load %arg32[%c0_26, %c0_27] : memref<32x8xf32, #tpu.memory_space<vmem>>, vector<32x8xf32>
    %48 = arith.truncf %42 : vector<8x32xf32> to vector<8x32xbf16>
    %49 = arith.truncf %43 : vector<8x32xf32> to vector<8x32xbf16>
    %50 = arith.truncf %44 : vector<8x32xf32> to vector<8x32xbf16>
    %51 = vector.extract_strided_slice %48 {offsets = [0, 0], sizes = [8, 8], strides = [1, 1]} : vector<8x32xbf16> to vector<8x8xbf16>
    %52 = vector.extract_strided_slice %49 {offsets = [0, 0], sizes = [8, 8], strides = [1, 1]} : vector<8x32xbf16> to vector<8x8xbf16>
    %cst_28 = arith.constant dense<0.000000e+00> : vector<8x8xf32>
    %53 = tpu.matmul %51, %52, %cst_28 {dimension_numbers = #tpu.dot_dimension_numbers<[1], [1], [0], [0], [0, 0, 1, 0], [], []>} : vector<8x8xbf16>, vector<8x8xbf16>, vector<8x8xf32> -> vector<8x8xf32>
    %54 = vector.extract_strided_slice %48 {offsets = [0, 8], sizes = [8, 8], strides = [1, 1]} : vector<8x32xbf16> to vector<8x8xbf16>
    %55 = vector.extract_strided_slice %49 {offsets = [0, 8], sizes = [8, 8], strides = [1, 1]} : vector<8x32xbf16> to vector<8x8xbf16>
    %cst_29 = arith.constant dense<0.000000e+00> : vector<8x8xf32>
    %56 = tpu.matmul %54, %55, %cst_29 {dimension_numbers = #tpu.dot_dimension_numbers<[1], [1], [0], [0], [0, 0, 1, 0], [], []>} : vector<8x8xbf16>, vector<8x8xbf16>, vector<8x8xf32> -> vector<8x8xf32>
    %57 = vector.extract_strided_slice %48 {offsets = [0, 16], sizes = [8, 8], strides = [1, 1]} : vector<8x32xbf16> to vector<8x8xbf16>
    %58 = vector.extract_strided_slice %49 {offsets = [0, 16], sizes = [8, 8], strides = [1, 1]} : vector<8x32xbf16> to vector<8x8xbf16>
    %cst_30 = arith.constant dense<0.000000e+00> : vector<8x8xf32>
    %59 = tpu.matmul %57, %58, %cst_30 {dimension_numbers = #tpu.dot_dimension_numbers<[1], [1], [0], [0], [0, 0, 1, 0], [], []>} : vector<8x8xbf16>, vector<8x8xbf16>, vector<8x8xf32> -> vector<8x8xf32>
    %60 = vector.extract_strided_slice %48 {offsets = [0, 24], sizes = [8, 8], strides = [1, 1]} : vector<8x32xbf16> to vector<8x8xbf16>
    %61 = vector.extract_strided_slice %49 {offsets = [0, 24], sizes = [8, 8], strides = [1, 1]} : vector<8x32xbf16> to vector<8x8xbf16>
    %cst_31 = arith.constant dense<0.000000e+00> : vector<8x8xf32>
    %62 = tpu.matmul %60, %61, %cst_31 {dimension_numbers = #tpu.dot_dimension_numbers<[1], [1], [0], [0], [0, 0, 1, 0], [], []>} : vector<8x8xbf16>, vector<8x8xbf16>, vector<8x8xf32> -> vector<8x8xf32>
    %63 = tpu.concatenate %53, %56, %59, %62 in 0 : vector<8x8xf32>, vector<8x8xf32>, vector<8x8xf32>, vector<8x8xf32> -> vector<32x8xf32>
    %64 = arith.addf %63, %47 : vector<32x8xf32>
    %cst_32 = arith.constant dense<0xFF800000> : vector<32xf32>
    %65 = vector.multi_reduction <maximumf>, %64, %cst_32 [1] : vector<32x8xf32> to vector<32xf32>
    %66 = vector.shape_cast %65 : vector<32xf32> to vector<32x1xf32>
    %67 = vector.broadcast %66 : vector<32x1xf32> to vector<32x8xf32>
    %68 = arith.subf %64, %67 : vector<32x8xf32>
    %69 = math.exp %68 : vector<32x8xf32>
    %cst_33 = arith.constant dense<0.000000e+00> : vector<32xf32>
    %70 = vector.multi_reduction <add>, %69, %cst_33 [1] : vector<32x8xf32> to vector<32xf32>
    %71 = vector.shape_cast %70 : vector<32xf32> to vector<32x1xf32>
    %72 = tpu.reciprocal %71 {approx = true} : vector<32x1xf32> -> vector<32x1xf32>
    %73 = vector.broadcast %72 : vector<32x1xf32> to vector<32x8xf32>
    %74 = arith.mulf %69, %73 : vector<32x8xf32>
    %75 = arith.truncf %74 : vector<32x8xf32> to vector<32x8xbf16>
    %76 = vector.extract_strided_slice %75 {offsets = [0, 0], sizes = [8, 8], strides = [1, 1]} : vector<32x8xbf16> to vector<8x8xbf16>
    %77 = vector.extract_strided_slice %50 {offsets = [0, 0], sizes = [8, 8], strides = [1, 1]} : vector<8x32xbf16> to vector<8x8xbf16>
    %cst_34 = arith.constant dense<0.000000e+00> : vector<8x8xf32>
    %78 = tpu.matmul %76, %77, %cst_34 {dimension_numbers = #tpu.dot_dimension_numbers<[1], [0], [0], [1], [0, 0, 1, 1], [], []>} : vector<8x8xbf16>, vector<8x8xbf16>, vector<8x8xf32> -> vector<8x8xf32>
    %79 = vector.extract_strided_slice %75 {offsets = [8, 0], sizes = [8, 8], strides = [1, 1]} : vector<32x8xbf16> to vector<8x8xbf16>
    %80 = vector.extract_strided_slice %50 {offsets = [0, 8], sizes = [8, 8], strides = [1, 1]} : vector<8x32xbf16> to vector<8x8xbf16>
    %cst_35 = arith.constant dense<0.000000e+00> : vector<8x8xf32>
    %81 = tpu.matmul %79, %80, %cst_35 {dimension_numbers = #tpu.dot_dimension_numbers<[1], [0], [0], [1], [0, 0, 1, 1], [], []>} : vector<8x8xbf16>, vector<8x8xbf16>, vector<8x8xf32> -> vector<8x8xf32>
    %82 = vector.extract_strided_slice %75 {offsets = [16, 0], sizes = [8, 8], strides = [1, 1]} : vector<32x8xbf16> to vector<8x8xbf16>
    %83 = vector.extract_strided_slice %50 {offsets = [0, 16], sizes = [8, 8], strides = [1, 1]} : vector<8x32xbf16> to vector<8x8xbf16>
    %cst_36 = arith.constant dense<0.000000e+00> : vector<8x8xf32>
    %84 = tpu.matmul %82, %83, %cst_36 {dimension_numbers = #tpu.dot_dimension_numbers<[1], [0], [0], [1], [0, 0, 1, 1], [], []>} : vector<8x8xbf16>, vector<8x8xbf16>, vector<8x8xf32> -> vector<8x8xf32>
    %85 = vector.extract_strided_slice %75 {offsets = [24, 0], sizes = [8, 8], strides = [1, 1]} : vector<32x8xbf16> to vector<8x8xbf16>
    %86 = vector.extract_strided_slice %50 {offsets = [0, 24], sizes = [8, 8], strides = [1, 1]} : vector<8x32xbf16> to vector<8x8xbf16>
    %cst_37 = arith.constant dense<0.000000e+00> : vector<8x8xf32>
    %87 = tpu.matmul %85, %86, %cst_37 {dimension_numbers = #tpu.dot_dimension_numbers<[1], [0], [0], [1], [0, 0, 1, 1], [], []>} : vector<8x8xbf16>, vector<8x8xbf16>, vector<8x8xf32> -> vector<8x8xf32>
    %88 = tpu.concatenate %78, %81, %84, %87 in 1 : vector<8x8xf32>, vector<8x8xf32>, vector<8x8xf32>, vector<8x8xf32> -> vector<8x32xf32>
    %89 = arith.truncf %88 : vector<8x32xf32> to vector<8x32xbf16>
    %cst_38 = arith.constant dense<0.000000e+00> : vector<8x32xf32>
    %90 = tpu.matmul %89, %46, %cst_38 {dimension_numbers = #tpu.dot_dimension_numbers<[1], [0], [0], [1], [0, 0, 1, 1], [], []>} : vector<8x32xbf16>, vector<32x32xbf16>, vector<8x32xf32> -> vector<8x32xf32>
    %91 = arith.addf %3, %90 : vector<8x32xf32>
    %c0_39 = arith.constant 0 : index
    %c0_40 = arith.constant 0 : index
    %c0_41 = arith.constant 0 : index
    %92 = vector.load %arg11[%c0_39, %c0_40, %c0_41] : memref<1x1x32xf32, #tpu.memory_space<vmem>>, vector<1x1x32xf32>
    %93 = vector.shape_cast %92 : vector<1x1x32xf32> to vector<1x32xf32>
    %94 = vector.broadcast %93 : vector<1x32xf32> to vector<8x32xf32>
    %95 = arith.addf %91, %94 : vector<8x32xf32>
    %c0_42 = arith.constant 0 : index
    %c0_43 = arith.constant 0 : index
    %c0_44 = arith.constant 0 : index
    %96 = vector.load %arg12[%c0_42, %c0_43, %c0_44] : memref<1x1x32xf32, #tpu.memory_space<vmem>>, vector<1x1x32xf32>
    %97 = vector.shape_cast %96 : vector<1x1x32xf32> to vector<1x32xf32>
    %c0_45 = arith.constant 0 : index
    %c0_46 = arith.constant 0 : index
    %c0_47 = arith.constant 0 : index
    %98 = vector.load %arg13[%c0_45, %c0_46, %c0_47] : memref<1x1x32xf32, #tpu.memory_space<vmem>>, vector<1x1x32xf32>
    %99 = vector.shape_cast %98 : vector<1x1x32xf32> to vector<1x32xf32>
    %cst_48 = arith.constant dense<0.000000e+00> : vector<8xf32>
    %100 = vector.multi_reduction <add>, %95, %cst_48 [1] : vector<8x32xf32> to vector<8xf32>
    %101 = vector.shape_cast %100 : vector<8xf32> to vector<8x1xf32>
    %cst_49 = arith.constant 3.200000e+01 : f32
    %102 = vector.broadcast %cst_49 : f32 to vector<8x1xf32>
    %103 = arith.divf %101, %102 : vector<8x1xf32>
    %104 = vector.broadcast %103 : vector<8x1xf32> to vector<8x32xf32>
    %105 = arith.subf %95, %104 : vector<8x32xf32>
    %106 = arith.mulf %105, %105 : vector<8x32xf32>
    %cst_50 = arith.constant dense<0.000000e+00> : vector<8xf32>
    %107 = vector.multi_reduction <add>, %106, %cst_50 [1] : vector<8x32xf32> to vector<8xf32>
    %108 = vector.shape_cast %107 : vector<8xf32> to vector<8x1xf32>
    %cst_51 = arith.constant 3.200000e+01 : f32
    %109 = vector.broadcast %cst_51 : f32 to vector<8x1xf32>
    %110 = arith.divf %108, %109 : vector<8x1xf32>
    %111 = vector.broadcast %103 : vector<8x1xf32> to vector<8x32xf32>
    %112 = arith.subf %95, %111 : vector<8x32xf32>
    %cst_52 = arith.constant 9.99999974E-6 : f32
    %113 = vector.broadcast %cst_52 : f32 to vector<8x1xf32>
    %114 = arith.addf %110, %113 : vector<8x1xf32>
    %115 = math.rsqrt %114 : vector<8x1xf32>
    %116 = vector.broadcast %115 : vector<8x1xf32> to vector<8x32xf32>
    %117 = arith.mulf %112, %116 : vector<8x32xf32>
    %118 = vector.broadcast %97 : vector<1x32xf32> to vector<8x32xf32>
    %119 = arith.mulf %117, %118 : vector<8x32xf32>
    %120 = vector.broadcast %99 : vector<1x32xf32> to vector<8x32xf32>
    %121 = arith.addf %119, %120 : vector<8x32xf32>
    %122 = arith.truncf %121 : vector<8x32xf32> to vector<8x32xbf16>
    %c0_53 = arith.constant 0 : index
    %c0_54 = arith.constant 0 : index
    %c0_55 = arith.constant 0 : index
    %123 = vector.load %arg14[%c0_53, %c0_54, %c0_55] : memref<1x32x32xbf16, #tpu.memory_space<vmem>>, vector<1x32x32xbf16>
    %124 = vector.shape_cast %123 : vector<1x32x32xbf16> to vector<32x32xbf16>
    %cst_56 = arith.constant dense<0.000000e+00> : vector<8x32xf32>
    %125 = tpu.matmul %122, %124, %cst_56 {dimension_numbers = #tpu.dot_dimension_numbers<[1], [0], [0], [1], [0, 0, 1, 1], [], []>} : vector<8x32xbf16>, vector<32x32xbf16>, vector<8x32xf32> -> vector<8x32xf32>
    %c0_57 = arith.constant 0 : index
    %c0_58 = arith.constant 0 : index
    %c0_59 = arith.constant 0 : index
    %126 = vector.load %arg15[%c0_57, %c0_58, %c0_59] : memref<1x1x32xf32, #tpu.memory_space<vmem>>, vector<1x1x32xf32>
    %127 = vector.shape_cast %126 : vector<1x1x32xf32> to vector<1x32xf32>
    %128 = vector.broadcast %127 : vector<1x32xf32> to vector<8x32xf32>
    %129 = arith.addf %125, %128 : vector<8x32xf32>
    %c0_60 = arith.constant 0 : index
    %c0_61 = arith.constant 0 : index
    %c0_62 = arith.constant 0 : index
    %130 = vector.load %arg16[%c0_60, %c0_61, %c0_62] : memref<1x32x64xbf16, #tpu.memory_space<vmem>>, vector<1x32x64xbf16>
    %131 = vector.shape_cast %130 : vector<1x32x64xbf16> to vector<32x64xbf16>
    %cst_63 = arith.constant dense<0.000000e+00> : vector<8x64xf32>
    %132 = tpu.matmul %5, %131, %cst_63 {dimension_numbers = #tpu.dot_dimension_numbers<[1], [0], [0], [1], [0, 0, 1, 1], [], []>} : vector<8x32xbf16>, vector<32x64xbf16>, vector<8x64xf32> -> vector<8x64xf32>
    %c0_64 = arith.constant 0 : index
    %c0_65 = arith.constant 0 : index
    %c0_66 = arith.constant 0 : index
    %133 = vector.load %arg17[%c0_64, %c0_65, %c0_66] : memref<1x1x64xf32, #tpu.memory_space<vmem>>, vector<1x1x64xf32>
    %134 = vector.shape_cast %133 : vector<1x1x64xf32> to vector<1x64xf32>
    %135 = vector.broadcast %134 : vector<1x64xf32> to vector<8x64xf32>
    %136 = arith.addf %132, %135 : vector<8x64xf32>
    %cst_67 = arith.constant 0.353553385 : f32
    %137 = vector.broadcast %cst_67 : f32 to vector<8x32xf32>
    %138 = arith.mulf %129, %137 : vector<8x32xf32>
    %139 = vector.extract_strided_slice %136 {offsets = [0, 0], sizes = [8, 32], strides = [1, 1]} : vector<8x64xf32> to vector<8x32xf32>
    %140 = vector.extract_strided_slice %136 {offsets = [0, 32], sizes = [8, 32], strides = [1, 1]} : vector<8x64xf32> to vector<8x32xf32>
    %c0_68 = arith.constant 0 : index
    %c0_69 = arith.constant 0 : index
    %c0_70 = arith.constant 0 : index
    %141 = vector.load %arg18[%c0_68, %c0_69, %c0_70] : memref<1x32x32xbf16, #tpu.memory_space<vmem>>, vector<1x32x32xbf16>
    %142 = vector.shape_cast %141 : vector<1x32x32xbf16> to vector<32x32xbf16>
    %c0_71 = arith.constant 0 : index
    %c0_72 = arith.constant 0 : index
    %143 = vector.load %arg33[%c0_71, %c0_72] : memref<32x8xf32, #tpu.memory_space<vmem>>, vector<32x8xf32>
    %144 = arith.truncf %138 : vector<8x32xf32> to vector<8x32xbf16>
    %145 = arith.truncf %139 : vector<8x32xf32> to vector<8x32xbf16>
    %146 = arith.truncf %140 : vector<8x32xf32> to vector<8x32xbf16>
    %147 = vector.extract_strided_slice %144 {offsets = [0, 0], sizes = [8, 8], strides = [1, 1]} : vector<8x32xbf16> to vector<8x8xbf16>
    %148 = vector.extract_strided_slice %145 {offsets = [0, 0], sizes = [8, 8], strides = [1, 1]} : vector<8x32xbf16> to vector<8x8xbf16>
    %cst_73 = arith.constant dense<0.000000e+00> : vector<8x8xf32>
    %149 = tpu.matmul %147, %148, %cst_73 {dimension_numbers = #tpu.dot_dimension_numbers<[1], [1], [0], [0], [0, 0, 1, 0], [], []>} : vector<8x8xbf16>, vector<8x8xbf16>, vector<8x8xf32> -> vector<8x8xf32>
    %150 = vector.extract_strided_slice %144 {offsets = [0, 8], sizes = [8, 8], strides = [1, 1]} : vector<8x32xbf16> to vector<8x8xbf16>
    %151 = vector.extract_strided_slice %145 {offsets = [0, 8], sizes = [8, 8], strides = [1, 1]} : vector<8x32xbf16> to vector<8x8xbf16>
    %cst_74 = arith.constant dense<0.000000e+00> : vector<8x8xf32>
    %152 = tpu.matmul %150, %151, %cst_74 {dimension_numbers = #tpu.dot_dimension_numbers<[1], [1], [0], [0], [0, 0, 1, 0], [], []>} : vector<8x8xbf16>, vector<8x8xbf16>, vector<8x8xf32> -> vector<8x8xf32>
    %153 = vector.extract_strided_slice %144 {offsets = [0, 16], sizes = [8, 8], strides = [1, 1]} : vector<8x32xbf16> to vector<8x8xbf16>
    %154 = vector.extract_strided_slice %145 {offsets = [0, 16], sizes = [8, 8], strides = [1, 1]} : vector<8x32xbf16> to vector<8x8xbf16>
    %cst_75 = arith.constant dense<0.000000e+00> : vector<8x8xf32>
    %155 = tpu.matmul %153, %154, %cst_75 {dimension_numbers = #tpu.dot_dimension_numbers<[1], [1], [0], [0], [0, 0, 1, 0], [], []>} : vector<8x8xbf16>, vector<8x8xbf16>, vector<8x8xf32> -> vector<8x8xf32>
    %156 = vector.extract_strided_slice %144 {offsets = [0, 24], sizes = [8, 8], strides = [1, 1]} : vector<8x32xbf16> to vector<8x8xbf16>
    %157 = vector.extract_strided_slice %145 {offsets = [0, 24], sizes = [8, 8], strides = [1, 1]} : vector<8x32xbf16> to vector<8x8xbf16>
    %cst_76 = arith.constant dense<0.000000e+00> : vector<8x8xf32>
    %158 = tpu.matmul %156, %157, %cst_76 {dimension_numbers = #tpu.dot_dimension_numbers<[1], [1], [0], [0], [0, 0, 1, 0], [], []>} : vector<8x8xbf16>, vector<8x8xbf16>, vector<8x8xf32> -> vector<8x8xf32>
    %159 = tpu.concatenate %149, %152, %155, %158 in 0 : vector<8x8xf32>, vector<8x8xf32>, vector<8x8xf32>, vector<8x8xf32> -> vector<32x8xf32>
    %160 = arith.addf %159, %143 : vector<32x8xf32>
    %cst_77 = arith.constant dense<0xFF800000> : vector<32xf32>
    %161 = vector.multi_reduction <maximumf>, %160, %cst_77 [1] : vector<32x8xf32> to vector<32xf32>
    %162 = vector.shape_cast %161 : vector<32xf32> to vector<32x1xf32>
    %163 = vector.broadcast %162 : vector<32x1xf32> to vector<32x8xf32>
    %164 = arith.subf %160, %163 : vector<32x8xf32>
    %165 = math.exp %164 : vector<32x8xf32>
    %cst_78 = arith.constant dense<0.000000e+00> : vector<32xf32>
    %166 = vector.multi_reduction <add>, %165, %cst_78 [1] : vector<32x8xf32> to vector<32xf32>
    %167 = vector.shape_cast %166 : vector<32xf32> to vector<32x1xf32>
    %168 = tpu.reciprocal %167 {approx = true} : vector<32x1xf32> -> vector<32x1xf32>
    %169 = vector.broadcast %168 : vector<32x1xf32> to vector<32x8xf32>
    %170 = arith.mulf %165, %169 : vector<32x8xf32>
    %171 = arith.truncf %170 : vector<32x8xf32> to vector<32x8xbf16>
    %172 = vector.extract_strided_slice %171 {offsets = [0, 0], sizes = [8, 8], strides = [1, 1]} : vector<32x8xbf16> to vector<8x8xbf16>
    %173 = vector.extract_strided_slice %146 {offsets = [0, 0], sizes = [8, 8], strides = [1, 1]} : vector<8x32xbf16> to vector<8x8xbf16>
    %cst_79 = arith.constant dense<0.000000e+00> : vector<8x8xf32>
    %174 = tpu.matmul %172, %173, %cst_79 {dimension_numbers = #tpu.dot_dimension_numbers<[1], [0], [0], [1], [0, 0, 1, 1], [], []>} : vector<8x8xbf16>, vector<8x8xbf16>, vector<8x8xf32> -> vector<8x8xf32>
    %175 = vector.extract_strided_slice %171 {offsets = [8, 0], sizes = [8, 8], strides = [1, 1]} : vector<32x8xbf16> to vector<8x8xbf16>
    %176 = vector.extract_strided_slice %146 {offsets = [0, 8], sizes = [8, 8], strides = [1, 1]} : vector<8x32xbf16> to vector<8x8xbf16>
    %cst_80 = arith.constant dense<0.000000e+00> : vector<8x8xf32>
    %177 = tpu.matmul %175, %176, %cst_80 {dimension_numbers = #tpu.dot_dimension_numbers<[1], [0], [0], [1], [0, 0, 1, 1], [], []>} : vector<8x8xbf16>, vector<8x8xbf16>, vector<8x8xf32> -> vector<8x8xf32>
    %178 = vector.extract_strided_slice %171 {offsets = [16, 0], sizes = [8, 8], strides = [1, 1]} : vector<32x8xbf16> to vector<8x8xbf16>
    %179 = vector.extract_strided_slice %146 {offsets = [0, 16], sizes = [8, 8], strides = [1, 1]} : vector<8x32xbf16> to vector<8x8xbf16>
    %cst_81 = arith.constant dense<0.000000e+00> : vector<8x8xf32>
    %180 = tpu.matmul %178, %179, %cst_81 {dimension_numbers = #tpu.dot_dimension_numbers<[1], [0], [0], [1], [0, 0, 1, 1], [], []>} : vector<8x8xbf16>, vector<8x8xbf16>, vector<8x8xf32> -> vector<8x8xf32>
    %181 = vector.extract_strided_slice %171 {offsets = [24, 0], sizes = [8, 8], strides = [1, 1]} : vector<32x8xbf16> to vector<8x8xbf16>
    %182 = vector.extract_strided_slice %146 {offsets = [0, 24], sizes = [8, 8], strides = [1, 1]} : vector<8x32xbf16> to vector<8x8xbf16>
    %cst_82 = arith.constant dense<0.000000e+00> : vector<8x8xf32>
    %183 = tpu.matmul %181, %182, %cst_82 {dimension_numbers = #tpu.dot_dimension_numbers<[1], [0], [0], [1], [0, 0, 1, 1], [], []>} : vector<8x8xbf16>, vector<8x8xbf16>, vector<8x8xf32> -> vector<8x8xf32>
    %184 = tpu.concatenate %174, %177, %180, %183 in 1 : vector<8x8xf32>, vector<8x8xf32>, vector<8x8xf32>, vector<8x8xf32> -> vector<8x32xf32>
    %185 = arith.truncf %184 : vector<8x32xf32> to vector<8x32xbf16>
    %cst_83 = arith.constant dense<0.000000e+00> : vector<8x32xf32>
    %186 = tpu.matmul %185, %142, %cst_83 {dimension_numbers = #tpu.dot_dimension_numbers<[1], [0], [0], [1], [0, 0, 1, 1], [], []>} : vector<8x32xbf16>, vector<32x32xbf16>, vector<8x32xf32> -> vector<8x32xf32>
    %187 = arith.addf %95, %186 : vector<8x32xf32>
    %c0_84 = arith.constant 0 : index
    %c0_85 = arith.constant 0 : index
    %c0_86 = arith.constant 0 : index
    %188 = vector.load %arg19[%c0_84, %c0_85, %c0_86] : memref<1x1x32xf32, #tpu.memory_space<vmem>>, vector<1x1x32xf32>
    %189 = vector.shape_cast %188 : vector<1x1x32xf32> to vector<1x32xf32>
    %190 = vector.broadcast %189 : vector<1x32xf32> to vector<8x32xf32>
    %191 = arith.addf %187, %190 : vector<8x32xf32>
    %c0_87 = arith.constant 0 : index
    %c0_88 = arith.constant 0 : index
    %c0_89 = arith.constant 0 : index
    %192 = vector.load %arg20[%c0_87, %c0_88, %c0_89] : memref<1x1x32xf32, #tpu.memory_space<vmem>>, vector<1x1x32xf32>
    %193 = vector.shape_cast %192 : vector<1x1x32xf32> to vector<1x32xf32>
    %c0_90 = arith.constant 0 : index
    %c0_91 = arith.constant 0 : index
    %c0_92 = arith.constant 0 : index
    %194 = vector.load %arg21[%c0_90, %c0_91, %c0_92] : memref<1x1x32xf32, #tpu.memory_space<vmem>>, vector<1x1x32xf32>
    %195 = vector.shape_cast %194 : vector<1x1x32xf32> to vector<1x32xf32>
    %cst_93 = arith.constant dense<0.000000e+00> : vector<8xf32>
    %196 = vector.multi_reduction <add>, %191, %cst_93 [1] : vector<8x32xf32> to vector<8xf32>
    %197 = vector.shape_cast %196 : vector<8xf32> to vector<8x1xf32>
    %cst_94 = arith.constant 3.200000e+01 : f32
    %198 = vector.broadcast %cst_94 : f32 to vector<8x1xf32>
    %199 = arith.divf %197, %198 : vector<8x1xf32>
    %200 = vector.broadcast %199 : vector<8x1xf32> to vector<8x32xf32>
    %201 = arith.subf %191, %200 : vector<8x32xf32>
    %202 = arith.mulf %201, %201 : vector<8x32xf32>
    %cst_95 = arith.constant dense<0.000000e+00> : vector<8xf32>
    %203 = vector.multi_reduction <add>, %202, %cst_95 [1] : vector<8x32xf32> to vector<8xf32>
    %204 = vector.shape_cast %203 : vector<8xf32> to vector<8x1xf32>
    %cst_96 = arith.constant 3.200000e+01 : f32
    %205 = vector.broadcast %cst_96 : f32 to vector<8x1xf32>
    %206 = arith.divf %204, %205 : vector<8x1xf32>
    %207 = vector.broadcast %199 : vector<8x1xf32> to vector<8x32xf32>
    %208 = arith.subf %191, %207 : vector<8x32xf32>
    %cst_97 = arith.constant 9.99999974E-6 : f32
    %209 = vector.broadcast %cst_97 : f32 to vector<8x1xf32>
    %210 = arith.addf %206, %209 : vector<8x1xf32>
    %211 = math.rsqrt %210 : vector<8x1xf32>
    %212 = vector.broadcast %211 : vector<8x1xf32> to vector<8x32xf32>
    %213 = arith.mulf %208, %212 : vector<8x32xf32>
    %214 = vector.broadcast %193 : vector<1x32xf32> to vector<8x32xf32>
    %215 = arith.mulf %213, %214 : vector<8x32xf32>
    %216 = vector.broadcast %195 : vector<1x32xf32> to vector<8x32xf32>
    %217 = arith.addf %215, %216 : vector<8x32xf32>
    %218 = arith.truncf %217 : vector<8x32xf32> to vector<8x32xbf16>
    %c0_98 = arith.constant 0 : index
    %c0_99 = arith.constant 0 : index
    %c0_100 = arith.constant 0 : index
    %219 = vector.load %arg22[%c0_98, %c0_99, %c0_100] : memref<1x32x64xbf16, #tpu.memory_space<vmem>>, vector<1x32x64xbf16>
    %220 = vector.shape_cast %219 : vector<1x32x64xbf16> to vector<32x64xbf16>
    %cst_101 = arith.constant dense<0.000000e+00> : vector<8x64xf32>
    %221 = tpu.matmul %218, %220, %cst_101 {dimension_numbers = #tpu.dot_dimension_numbers<[1], [0], [0], [1], [0, 0, 1, 1], [], []>} : vector<8x32xbf16>, vector<32x64xbf16>, vector<8x64xf32> -> vector<8x64xf32>
    %c0_102 = arith.constant 0 : index
    %c0_103 = arith.constant 0 : index
    %c0_104 = arith.constant 0 : index
    %222 = vector.load %arg23[%c0_102, %c0_103, %c0_104] : memref<1x1x64xf32, #tpu.memory_space<vmem>>, vector<1x1x64xf32>
    %223 = vector.shape_cast %222 : vector<1x1x64xf32> to vector<1x64xf32>
    %224 = vector.broadcast %223 : vector<1x64xf32> to vector<8x64xf32>
    %225 = arith.addf %221, %224 : vector<8x64xf32>
    %cst_105 = arith.constant 0.000000e+00 : f32
    %226 = vector.broadcast %cst_105 : f32 to vector<8x64xf32>
    %227 = arith.maximumf %225, %226 : vector<8x64xf32>
    %228 = arith.truncf %227 : vector<8x64xf32> to vector<8x64xbf16>
    %c0_106 = arith.constant 0 : index
    %c0_107 = arith.constant 0 : index
    %c0_108 = arith.constant 0 : index
    %229 = vector.load %arg24[%c0_106, %c0_107, %c0_108] : memref<1x64x32xbf16, #tpu.memory_space<vmem>>, vector<1x64x32xbf16>
    %230 = vector.shape_cast %229 : vector<1x64x32xbf16> to vector<64x32xbf16>
    %cst_109 = arith.constant dense<0.000000e+00> : vector<8x32xf32>
    %231 = tpu.matmul %228, %230, %cst_109 {dimension_numbers = #tpu.dot_dimension_numbers<[1], [0], [0], [1], [0, 0, 1, 1], [], []>} : vector<8x64xbf16>, vector<64x32xbf16>, vector<8x32xf32> -> vector<8x32xf32>
    %232 = arith.addf %191, %231 : vector<8x32xf32>
    %c0_110 = arith.constant 0 : index
    %c0_111 = arith.constant 0 : index
    %c0_112 = arith.constant 0 : index
    %233 = vector.load %arg25[%c0_110, %c0_111, %c0_112] : memref<1x1x32xf32, #tpu.memory_space<vmem>>, vector<1x1x32xf32>
    %234 = vector.shape_cast %233 : vector<1x1x32xf32> to vector<1x32xf32>
    %235 = vector.broadcast %234 : vector<1x32xf32> to vector<8x32xf32>
    %236 = arith.addf %232, %235 : vector<8x32xf32>
    %c0_113 = arith.constant 0 : index
    %c0_114 = arith.constant 0 : index
    %237 = vector.load %arg31[%c0_113, %c0_114] : memref<8x32xf32, #tpu.memory_space<vmem>>, vector<8x32xf32>
    tpu.vector_store %arg31[%c0_113, %c0_114], %236 {strides = array<i32>} : memref<8x32xf32, #tpu.memory_space<vmem>>, vector<8x32xf32>,
    %c1_i32 = arith.constant 1 : i32
    %238 = arith.cmpi eq, %arg1, %c1_i32 : i32
    %239 = arith.extui %238 : i1 to i32
    %c0_i32_115 = arith.constant 0 : i32
    %240 = arith.cmpi ne, %239, %c0_i32_115 : i32
    scf.if %240 {
      %c0_116 = arith.constant 0 : index
      %c0_117 = arith.constant 0 : index
      %241 = vector.load %arg26[%c0_116, %c0_117] : memref<1x32xf32, #tpu.memory_space<vmem>>, vector<1x32xf32>
      %c0_118 = arith.constant 0 : index
      %c0_119 = arith.constant 0 : index
      %242 = vector.load %arg27[%c0_118, %c0_119] : memref<1x32xf32, #tpu.memory_space<vmem>>, vector<1x32xf32>
      %cst_120 = arith.constant dense<0.000000e+00> : vector<8xf32>
      %243 = vector.multi_reduction <add>, %236, %cst_120 [1] : vector<8x32xf32> to vector<8xf32>
      %244 = vector.shape_cast %243 : vector<8xf32> to vector<8x1xf32>
      %cst_121 = arith.constant 3.200000e+01 : f32
      %245 = vector.broadcast %cst_121 : f32 to vector<8x1xf32>
      %246 = arith.divf %244, %245 : vector<8x1xf32>
      %247 = vector.broadcast %246 : vector<8x1xf32> to vector<8x32xf32>
      %248 = arith.subf %236, %247 : vector<8x32xf32>
      %249 = arith.mulf %248, %248 : vector<8x32xf32>
      %cst_122 = arith.constant dense<0.000000e+00> : vector<8xf32>
      %250 = vector.multi_reduction <add>, %249, %cst_122 [1] : vector<8x32xf32> to vector<8xf32>
      %251 = vector.shape_cast %250 : vector<8xf32> to vector<8x1xf32>
      %cst_123 = arith.constant 3.200000e+01 : f32
      %252 = vector.broadcast %cst_123 : f32 to vector<8x1xf32>
      %253 = arith.divf %251, %252 : vector<8x1xf32>
      %254 = vector.broadcast %246 : vector<8x1xf32> to vector<8x32xf32>
      %255 = arith.subf %236, %254 : vector<8x32xf32>
      %cst_124 = arith.constant 9.99999974E-6 : f32
      %256 = vector.broadcast %cst_124 : f32 to vector<8x1xf32>
      %257 = arith.addf %253, %256 : vector<8x1xf32>
      %258 = math.rsqrt %257 : vector<8x1xf32>
      %259 = vector.broadcast %258 : vector<8x1xf32> to vector<8x32xf32>
      %260 = arith.mulf %255, %259 : vector<8x32xf32>
      %261 = vector.broadcast %241 : vector<1x32xf32> to vector<8x32xf32>
      %262 = arith.mulf %260, %261 : vector<8x32xf32>
      %263 = vector.broadcast %242 : vector<1x32xf32> to vector<8x32xf32>
      %264 = arith.addf %262, %263 : vector<8x32xf32>
      %265 = arith.truncf %264 : vector<8x32xf32> to vector<8x32xbf16>
      %c0_125 = arith.constant 0 : index
      %c0_126 = arith.constant 0 : index
      %266 = vector.load %arg28[%c0_125, %c0_126] : memref<32x128xbf16, #tpu.memory_space<vmem>>, vector<32x128xbf16>
      %cst_127 = arith.constant dense<0.000000e+00> : vector<8x128xf32>
      %267 = tpu.matmul %265, %266, %cst_127 {dimension_numbers = #tpu.dot_dimension_numbers<[1], [0], [0], [1], [0, 0, 1, 1], [], []>} : vector<8x32xbf16>, vector<32x128xbf16>, vector<8x128xf32> -> vector<8x128xf32>
      %c0_128 = arith.constant 0 : index
      %c0_129 = arith.constant 0 : index
      %268 = vector.load %arg29[%c0_128, %c0_129] : memref<1x128xf32, #tpu.memory_space<vmem>>, vector<1x128xf32>
      %269 = vector.broadcast %268 : vector<1x128xf32> to vector<8x128xf32>
      %270 = arith.addf %267, %269 : vector<8x128xf32>
      %c0_130 = arith.constant 0 : index
      %c0_131 = arith.constant 0 : index
      %c0_132 = arith.constant 0 : index
      %271 = vector.load %arg30[%c0_130, %c0_131, %c0_132] : memref<1x8x128xf32, #tpu.memory_space<vmem>>, vector<1x8x128xf32>
      %272 = vector.shape_cast %271 : vector<1x8x128xf32> to vector<8x128xf32>
      %273 = vector.shape_cast %270 : vector<8x128xf32> to vector<1x8x128xf32>
      tpu.vector_store %arg30[%c0_130, %c0_131, %c0_132], %273 {strides = array<i32>} : memref<1x8x128xf32, #tpu.memory_space<vmem>>, vector<1x8x128xf32>,
    } else {
    }
    return
  }
  func.func @transform_0(%arg0: i32, %arg1: i32) -> (i32, i32, i32) {
    %c0_i32 = arith.constant 0 : i32
    %c0_i32_0 = arith.constant 0 : i32
    %c0_i32_1 = arith.constant 0 : i32
    return %arg0, %c0_i32, %c0_i32_0 : i32, i32, i32
  }
  func.func @transform_1(%arg0: i32, %arg1: i32) -> (i32, i32, i32) {
    %c0_i32 = arith.constant 0 : i32
    %c0_i32_0 = arith.constant 0 : i32
    %c0_i32_1 = arith.constant 0 : i32
    return %arg0, %c0_i32, %c0_i32_0 : i32, i32, i32
  }
  func.func @transform_2(%arg0: i32, %arg1: i32) -> (i32, i32, i32) {
    %c0_i32 = arith.constant 0 : i32
    %c0_i32_0 = arith.constant 0 : i32
    %c0_i32_1 = arith.constant 0 : i32
    return %arg0, %c0_i32, %c0_i32_0 : i32, i32, i32
  }
  func.func @transform_3(%arg0: i32, %arg1: i32) -> (i32, i32, i32) {
    %c0_i32 = arith.constant 0 : i32
    %c0_i32_0 = arith.constant 0 : i32
    %c0_i32_1 = arith.constant 0 : i32
    return %arg0, %c0_i32, %c0_i32_0 : i32, i32, i32
  }
  func.func @transform_4(%arg0: i32, %arg1: i32) -> (i32, i32, i32) {
    %c0_i32 = arith.constant 0 : i32
    %c0_i32_0 = arith.constant 0 : i32
    %c0_i32_1 = arith.constant 0 : i32
    return %arg1, %c0_i32, %c0_i32_0 : i32, i32, i32
  }
  func.func @transform_5(%arg0: i32, %arg1: i32) -> (i32, i32, i32) {
    %c0_i32 = arith.constant 0 : i32
    %c0_i32_0 = arith.constant 0 : i32
    %c0_i32_1 = arith.constant 0 : i32
    return %arg1, %c0_i32, %c0_i32_0 : i32, i32, i32
  }
  func.func @transform_6(%arg0: i32, %arg1: i32) -> (i32, i32, i32) {
    %c0_i32 = arith.constant 0 : i32
    %c0_i32_0 = arith.constant 0 : i32
    %c0_i32_1 = arith.constant 0 : i32
    return %arg1, %c0_i32, %c0_i32_0 : i32, i32, i32
  }
  func.func @transform_7(%arg0: i32, %arg1: i32) -> (i32, i32, i32) {
    %c0_i32 = arith.constant 0 : i32
    %c0_i32_0 = arith.constant 0 : i32
    %c0_i32_1 = arith.constant 0 : i32
    return %arg1, %c0_i32, %c0_i32_0 : i32, i32, i32
  }
  func.func @transform_8(%arg0: i32, %arg1: i32) -> (i32, i32, i32) {
    %c0_i32 = arith.constant 0 : i32
    %c0_i32_0 = arith.constant 0 : i32
    %c0_i32_1 = arith.constant 0 : i32
    return %arg1, %c0_i32, %c0_i32_0 : i32, i32, i32
  }
  func.func @transform_9(%arg0: i32, %arg1: i32) -> (i32, i32, i32) {
    %c0_i32 = arith.constant 0 : i32
    %c0_i32_0 = arith.constant 0 : i32
    %c0_i32_1 = arith.constant 0 : i32
    return %arg1, %c0_i32, %c0_i32_0 : i32, i32, i32
  }
  func.func @transform_10(%arg0: i32, %arg1: i32) -> (i32, i32, i32) {
    %c0_i32 = arith.constant 0 : i32
    %c0_i32_0 = arith.constant 0 : i32
    %c0_i32_1 = arith.constant 0 : i32
    return %arg1, %c0_i32, %c0_i32_0 : i32, i32, i32
  }
  func.func @transform_11(%arg0: i32, %arg1: i32) -> (i32, i32, i32) {
    %c0_i32 = arith.constant 0 : i32
    %c0_i32_0 = arith.constant 0 : i32
    %c0_i32_1 = arith.constant 0 : i32
    return %arg1, %c0_i32, %c0_i32_0 : i32, i32, i32
  }
  func.func @transform_12(%arg0: i32, %arg1: i32) -> (i32, i32, i32) {
    %c0_i32 = arith.constant 0 : i32
    %c0_i32_0 = arith.constant 0 : i32
    %c0_i32_1 = arith.constant 0 : i32
    return %arg1, %c0_i32, %c0_i32_0 : i32, i32, i32
  }
  func.func @transform_13(%arg0: i32, %arg1: i32) -> (i32, i32, i32) {
    %c0_i32 = arith.constant 0 : i32
    %c0_i32_0 = arith.constant 0 : i32
    %c0_i32_1 = arith.constant 0 : i32
    return %arg1, %c0_i32, %c0_i32_0 : i32, i32, i32
  }
  func.func @transform_14(%arg0: i32, %arg1: i32) -> (i32, i32, i32) {
    %c0_i32 = arith.constant 0 : i32
    %c0_i32_0 = arith.constant 0 : i32
    %c0_i32_1 = arith.constant 0 : i32
    return %arg1, %c0_i32, %c0_i32_0 : i32, i32, i32
  }
  func.func @transform_15(%arg0: i32, %arg1: i32) -> (i32, i32, i32) {
    %c0_i32 = arith.constant 0 : i32
    %c0_i32_0 = arith.constant 0 : i32
    %c0_i32_1 = arith.constant 0 : i32
    return %arg1, %c0_i32, %c0_i32_0 : i32, i32, i32
  }
  func.func @transform_16(%arg0: i32, %arg1: i32) -> (i32, i32, i32) {
    %c0_i32 = arith.constant 0 : i32
    %c0_i32_0 = arith.constant 0 : i32
    %c0_i32_1 = arith.constant 0 : i32
    return %arg1, %c0_i32, %c0_i32_0 : i32, i32, i32
  }
  func.func @transform_17(%arg0: i32, %arg1: i32) -> (i32, i32, i32) {
    %c0_i32 = arith.constant 0 : i32
    %c0_i32_0 = arith.constant 0 : i32
    %c0_i32_1 = arith.constant 0 : i32
    return %arg1, %c0_i32, %c0_i32_0 : i32, i32, i32
  }
  func.func @transform_18(%arg0: i32, %arg1: i32) -> (i32, i32, i32) {
    %c0_i32 = arith.constant 0 : i32
    %c0_i32_0 = arith.constant 0 : i32
    %c0_i32_1 = arith.constant 0 : i32
    return %arg1, %c0_i32, %c0_i32_0 : i32, i32, i32
  }
  func.func @transform_19(%arg0: i32, %arg1: i32) -> (i32, i32, i32) {
    %c0_i32 = arith.constant 0 : i32
    %c0_i32_0 = arith.constant 0 : i32
    %c0_i32_1 = arith.constant 0 : i32
    return %arg1, %c0_i32, %c0_i32_0 : i32, i32, i32
  }
  func.func @transform_20(%arg0: i32, %arg1: i32) -> (i32, i32, i32) {
    %c0_i32 = arith.constant 0 : i32
    %c0_i32_0 = arith.constant 0 : i32
    %c0_i32_1 = arith.constant 0 : i32
    return %arg1, %c0_i32, %c0_i32_0 : i32, i32, i32
  }
  func.func @transform_21(%arg0: i32, %arg1: i32) -> (i32, i32, i32) {
    %c0_i32 = arith.constant 0 : i32
    %c0_i32_0 = arith.constant 0 : i32
    %c0_i32_1 = arith.constant 0 : i32
    return %arg1, %c0_i32, %c0_i32_0 : i32, i32, i32
  }
  func.func @transform_22(%arg0: i32, %arg1: i32) -> (i32, i32, i32) {
    %c0_i32 = arith.constant 0 : i32
    %c0_i32_0 = arith.constant 0 : i32
    %c0_i32_1 = arith.constant 0 : i32
    return %arg1, %c0_i32, %c0_i32_0 : i32, i32, i32
  }
  func.func @transform_23(%arg0: i32, %arg1: i32) -> (i32, i32, i32) {
    %c0_i32 = arith.constant 0 : i32
    %c0_i32_0 = arith.constant 0 : i32
    %c0_i32_1 = arith.constant 0 : i32
    return %arg1, %c0_i32, %c0_i32_0 : i32, i32, i32
  }
  func.func @transform_24(%arg0: i32, %arg1: i32) -> (i32, i32) {
    %c0_i32 = arith.constant 0 : i32
    %c0_i32_0 = arith.constant 0 : i32
    %c0_i32_1 = arith.constant 0 : i32
    return %c0_i32, %c0_i32_0 : i32, i32
  }
  func.func @transform_25(%arg0: i32, %arg1: i32) -> (i32, i32) {
    %c0_i32 = arith.constant 0 : i32
    %c0_i32_0 = arith.constant 0 : i32
    %c0_i32_1 = arith.constant 0 : i32
    return %c0_i32, %c0_i32_0 : i32, i32
  }
  func.func @transform_26(%arg0: i32, %arg1: i32) -> (i32, i32) {
    %c0_i32 = arith.constant 0 : i32
    %c0_i32_0 = arith.constant 0 : i32
    %c0_i32_1 = arith.constant 0 : i32
    return %c0_i32, %c0_i32_0 : i32, i32
  }
  func.func @transform_27(%arg0: i32, %arg1: i32) -> (i32, i32) {
    %c0_i32 = arith.constant 0 : i32
    %c0_i32_0 = arith.constant 0 : i32
    %c0_i32_1 = arith.constant 0 : i32
    return %c0_i32, %c0_i32_0 : i32, i32
  }
  func.func @transform_28(%arg0: i32, %arg1: i32) -> (i32, i32, i32) {
    %c0_i32 = arith.constant 0 : i32
    %c0_i32_0 = arith.constant 0 : i32
    %c0_i32_1 = arith.constant 0 : i32
    return %arg0, %c0_i32, %c0_i32_0 : i32, i32, i32
  }
}

</mosaic_0001>

<llo_original>
// kernel: _lambda_.2
$region0: #{_lambda_.2}
  #allocation0 [shape = 'u32[]', space=smem, size = 0x4, offset = 0x4, fixed_abs, tag = 'smem constant byte address 0x4 - core index']
  #allocation1 [shape = 'u32[144,128]{1,0:T(1,128)}', space=vmem, size = 0x12000, scoped, tag = 'internal scratch']
  #allocation2 [shape = 'f32[8,32]{1,0:T(8,128)}', space=vmem, size = 0x1000, scoped, tag = 'scratch operand']
  #allocation3 [shape = 'f32[32,8]{1,0:T(8,128)}', space=vmem, size = 0x4000, scoped, tag = 'scratch operand']
  %s0 = inlined_call_operand.vmem [shape: f32[2,8,32], index: 0, kind: input, shape index: {}]
  %s1 = inlined_call_operand.vmem [shape: bf16[2,8,8], index: 1, kind: input, shape index: {}]
  %s2 = inlined_call_operand.vmem [shape: f32[2,1,32], index: 2, kind: input, shape index: {}, may-alias: {2,8}]
  %s3 = inlined_call_operand.vmem [shape: f32[2,1,32], index: 3, kind: input, shape index: {}, may-alias: {3,7,9,13}]
  %s4 = inlined_call_operand.vmem [shape: bf16[2,32,96], index: 4, kind: input, shape index: {}]
  %s5 = inlined_call_operand.vmem [shape: f32[2,1,96], index: 5, kind: input, shape index: {}]
  %s6 = inlined_call_operand.vmem [shape: bf16[2,32,32], index: 6, kind: input, shape index: {}]
  %s7 = inlined_call_operand.vmem [shape: f32[2,1,32], index: 7, kind: input, shape index: {}, may-alias: {3,7,9,13}]
  %s8 = inlined_call_operand.vmem [shape: f32[2,1,32], index: 8, kind: input, shape index: {}, may-alias: {2,8}]
  %s9 = inlined_call_operand.vmem [shape: f32[2,1,32], index: 9, kind: input, shape index: {}, may-alias: {3,7,9,13}]
  %s10 = inlined_call_operand.vmem [shape: bf16[2,32,64], index: 10, kind: input, shape index: {}]
  %s11 = inlined_call_operand.vmem [shape: f32[2,1,64], index: 11, kind: input, shape index: {}]
  %s12 = inlined_call_operand.vmem [shape: bf16[2,64,32], index: 12, kind: input, shape index: {}]
  %s13 = inlined_call_operand.vmem [shape: f32[2,1,32], index: 13, kind: input, shape index: {}, may-alias: {3,7,9,13}]
  %s14 = inlined_call_operand.vmem [shape: f32[1,32], index: 14, kind: input, shape index: {}]
  %s15 = inlined_call_operand.vmem [shape: f32[1,32], index: 15, kind: input, shape index: {}]
  %s16 = inlined_call_operand.vmem [shape: bf16[2,8,32], index: 16, kind: output, shape index: {}]
  %s17 = sld [smem:[#allocation0]]
  $region105: #{_lambda_.2} parent=0
    _
  %s19 = ssub.s32 1, %s17
  %s20 = scalar_select 0, %s19, %s17
  loop: start=0, step=1, limit=6
  $region2: #{_lambda_.2} parent=0 // loop_pre_header
    _
  $region3: #{_lambda_.2} parent=0 // loop_header
    %s22 = sphi 0, %s26
    %p23 = scmp.ge.s32.totalorder %s22, 6
    %s29 = sphi 0, %s41
    %s30 = sphi 0, %s37
    %s31 = sphi 0, %s29
    %s32 = sphi 0, %s30
    %s33 = sphi 0, %s31
    %s34 = sphi 0, %s32
    %s44 = sphi 0, %s46
    %s47 = sphi 0, %s44
    %s48 = sphi 0, %s47
    %s64 = sphi 0, %s48
    %s70 = sphi 0, %s72
    %s73 = sphi 0, %s70
    %s74 = sphi 0, %s73
    %s90 = sphi 0, %s74
    %s96 = sphi 0, %s98
    %s99 = sphi 0, %s96
    %s100 = sphi 0, %s99
    %s116 = sphi 0, %s100
    %s122 = sphi 0, %s124
    %s125 = sphi 0, %s122
    %s126 = sphi 0, %s125
    %s142 = sphi 0, %s126
    %s148 = sphi 0, %s150
    %s151 = sphi 0, %s148
    %s152 = sphi 0, %s151
    %s168 = sphi 0, %s152
    %s174 = sphi 0, %s176
    %s177 = sphi 0, %s174
    %s178 = sphi 0, %s177
    %s194 = sphi 0, %s178
    %s200 = sphi 0, %s202
    %s203 = sphi 0, %s200
    %s204 = sphi 0, %s203
    %s220 = sphi 0, %s204
    %s226 = sphi 0, %s228
    %s229 = sphi 0, %s226
    %s230 = sphi 0, %s229
    %s246 = sphi 0, %s230
    %s252 = sphi 0, %s254
    %s255 = sphi 0, %s252
    %s256 = sphi 0, %s255
    %s272 = sphi 0, %s256
    %s278 = sphi 0, %s280
    %s281 = sphi 0, %s278
    %s282 = sphi 0, %s281
    %s298 = sphi 0, %s282
    %s304 = sphi 0, %s306
    %s307 = sphi 0, %s304
    %s308 = sphi 0, %s307
    %s324 = sphi 0, %s308
    %s330 = sphi 0, %s332
    %s333 = sphi 0, %s330
    %s334 = sphi 0, %s333
    %s350 = sphi 0, %s334
    %s356 = sphi 0, %s358
    %s359 = sphi 0, %s356
    %s360 = sphi 0, %s359
    %s376 = sphi 0, %s360
    %s382 = sphi 0, %s384
    %s385 = sphi 0, %s382
    %s386 = sphi 0, %s385
    %s402 = sphi 0, %s386
    %s406 = sphi 0, %s406
    %s408 = sphi 0, %s406
    %s409 = sphi 0, %s408
    %s423 = sphi 0, %s409
    %s427 = sphi 0, %s427
    %s429 = sphi 0, %s427
    %s430 = sphi 0, %s429
    %s444 = sphi 0, %s430
    %s450 = sphi 0, %s452
    %s453 = sphi 0, %s450
    %s454 = sphi 0, %s453
    %s470 = sphi 0, %s454
  $region4: #{_lambda_.2} parent=0 // loop_header_branch
    %25 = sbr.rel (%p23) target = $region8
  $region5: #{_lambda_.2} parent=0 // loop_body
    %s27 = ssub.s32 %s22, 1
    %s28 = ssub.s32 %s22, 2
    %s35 = sadd.s32 1, %s30
    %p36 = scmp.ge.s32.totalorder %s35, 2
    %s37 = scalar_select %p36, 0, %s35
    %s38 = sadd.s32 1, %s29
    %s39 = scalar_select %p36, %s38, %s29
    %p40 = scmp.ge.s32.totalorder %s39, 2
    %s41 = scalar_select %p40, 0, %s39
    %s42 = ssub.s32 %s29, %s41
    %p43 = scmp.eq.s32.totalorder %s42, 0
    %s45 = sadd.s32 %s44, 1
    %s46 = scalar_select %p43, %s44, %s45
    %p49 = pneg %p43
    %p50 = scmp.eq.s32.totalorder %s22, 3
    %p51 = por %p49, %p50
    %p52 = scmp.ne.s32.totalorder %s44, %s47
    %p53 = scmp.eq.s32.totalorder %s22, 0
    %p54 = por %p52, %p53
    %p55 = scmp.ne.s32.totalorder %s44, %s47
    %p56 = scmp.eq.s32.totalorder %s27, 3
    %p57 = por %p55, %p56
    %p58 = scmp.ne.s32.totalorder %s47, %s48
    %p59 = scmp.eq.s32.totalorder %s27, 0
    %p60 = por %p58, %p59
    %p61 = scmp.ne.s32.totalorder %s47, %s48
    %p62 = scmp.eq.s32.totalorder %s28, 3
    %p63 = por %p61, %p62
    %p65 = scmp.ne.s32.totalorder %s48, %s64
    %p66 = scmp.eq.s32.totalorder %s28, 0
    %p67 = por %p65, %p66
    %s68 = ssub.s32 %s29, %s41
    %p69 = scmp.eq.s32.totalorder %s68, 0
    %s71 = sadd.s32 %s70, 1
    %s72 = scalar_select %p69, %s70, %s71
    %p75 = pneg %p69
    %p76 = scmp.eq.s32.totalorder %s22, 3
    %p77 = por %p75, %p76
    %p78 = scmp.ne.s32.totalorder %s70, %s73
    %p79 = scmp.eq.s32.totalorder %s22, 0
    %p80 = por %p78, %p79
    %p81 = scmp.ne.s32.totalorder %s70, %s73
    %p82 = scmp.eq.s32.totalorder %s27, 3
    %p83 = por %p81, %p82
    %p84 = scmp.ne.s32.totalorder %s73, %s74
    %p85 = scmp.eq.s32.totalorder %s27, 0
    %p86 = por %p84, %p85
    %p87 = scmp.ne.s32.totalorder %s73, %s74
    %p88 = scmp.eq.s32.totalorder %s28, 3
    %p89 = por %p87, %p88
    %p91 = scmp.ne.s32.totalorder %s74, %s90
    %p92 = scmp.eq.s32.totalorder %s28, 0
    %p93 = por %p91, %p92
    %s94 = ssub.s32 %s30, %s37
    %p95 = scmp.eq.s32.totalorder %s94, 0
    %s97 = sadd.s32 %s96, 1
    %s98 = scalar_select %p95, %s96, %s97
    %p101 = pneg %p95
    %p102 = scmp.eq.s32.totalorder %s22, 3
    %p103 = por %p101, %p102
    %p104 = scmp.ne.s32.totalorder %s96, %s99
    %p105 = scmp.eq.s32.totalorder %s22, 0
    %p106 = por %p104, %p105
    %p107 = scmp.ne.s32.totalorder %s96, %s99
    %p108 = scmp.eq.s32.totalorder %s27, 3
    %p109 = por %p107, %p108
    %p110 = scmp.ne.s32.totalorder %s99, %s100
    %p111 = scmp.eq.s32.totalorder %s27, 0
    %p112 = por %p110, %p111
    %p113 = scmp.ne.s32.totalorder %s99, %s100
    %p114 = scmp.eq.s32.totalorder %s28, 3
    %p115 = por %p113, %p114
    %p117 = scmp.ne.s32.totalorder %s100, %s116
    %p118 = scmp.eq.s32.totalorder %s28, 0
    %p119 = por %p117, %p118
    %s120 = ssub.s32 %s30, %s37
    %p121 = scmp.eq.s32.totalorder %s120, 0
    %s123 = sadd.s32 %s122, 1
    %s124 = scalar_select %p121, %s122, %s123
    %p127 = pneg %p121
    %p128 = scmp.eq.s32.totalorder %s22, 3
    %p129 = por %p127, %p128
    %p130 = scmp.ne.s32.totalorder %s122, %s125
    %p131 = scmp.eq.s32.totalorder %s22, 0
    %p132 = por %p130, %p131
    %p133 = scmp.ne.s32.totalorder %s122, %s125
    %p134 = scmp.eq.s32.totalorder %s27, 3
    %p135 = por %p133, %p134
    %p136 = scmp.ne.s32.totalorder %s125, %s126
    %p137 = scmp.eq.s32.totalorder %s27, 0
    %p138 = por %p136, %p137
    %p139 = scmp.ne.s32.totalorder %s125, %s126
    %p140 = scmp.eq.s32.totalorder %s28, 3
    %p141 = por %p139, %p140
    %p143 = scmp.ne.s32.totalorder %s126, %s142
    %p144 = scmp.eq.s32.totalorder %s28, 0
    %p145 = por %p143, %p144
    %s146 = ssub.s32 %s30, %s37
    %p147 = scmp.eq.s32.totalorder %s146, 0
    %s149 = sadd.s32 %s148, 1
    %s150 = scalar_select %p147, %s148, %s149
    %p153 = pneg %p147
    %p154 = scmp.eq.s32.totalorder %s22, 3
    %p155 = por %p153, %p154
    %p156 = scmp.ne.s32.totalorder %s148, %s151
    %p157 = scmp.eq.s32.totalorder %s22, 0
    %p158 = por %p156, %p157
    %p159 = scmp.ne.s32.totalorder %s148, %s151
    %p160 = scmp.eq.s32.totalorder %s27, 3
    %p161 = por %p159, %p160
    %p162 = scmp.ne.s32.totalorder %s151, %s152
    %p163 = scmp.eq.s32.totalorder %s27, 0
    %p164 = por %p162, %p163
    %p165 = scmp.ne.s32.totalorder %s151, %s152
    %p166 = scmp.eq.s32.totalorder %s28, 3
    %p167 = por %p165, %p166
    %p169 = scmp.ne.s32.totalorder %s152, %s168
    %p170 = scmp.eq.s32.totalorder %s28, 0
    %p171 = por %p169, %p170
    %s172 = ssub.s32 %s30, %s37
    %p173 = scmp.eq.s32.totalorder %s172, 0
    %s175 = sadd.s32 %s174, 1
    %s176 = scalar_select %p173, %s174, %s175
    %p179 = pneg %p173
    %p180 = scmp.eq.s32.totalorder %s22, 3
    %p181 = por %p179, %p180
    %p182 = scmp.ne.s32.totalorder %s174, %s177
    %p183 = scmp.eq.s32.totalorder %s22, 0
    %p184 = por %p182, %p183
    %p185 = scmp.ne.s32.totalorder %s174, %s177
    %p186 = scmp.eq.s32.totalorder %s27, 3
    %p187 = por %p185, %p186
    %p188 = scmp.ne.s32.totalorder %s177, %s178
    %p189 = scmp.eq.s32.totalorder %s27, 0
    %p190 = por %p188, %p189
    %p191 = scmp.ne.s32.totalorder %s177, %s178
    %p192 = scmp.eq.s32.totalorder %s28, 3
    %p193 = por %p191, %p192
    %p195 = scmp.ne.s32.totalorder %s178, %s194
    %p196 = scmp.eq.s32.totalorder %s28, 0
    %p197 = por %p195, %p196
    %s198 = ssub.s32 %s30, %s37
    %p199 = scmp.eq.s32.totalorder %s198, 0
    %s201 = sadd.s32 %s200, 1
    %s202 = scalar_select %p199, %s200, %s201
    %p205 = pneg %p199
    %p206 = scmp.eq.s32.totalorder %s22, 3
    %p207 = por %p205, %p206
    %p208 = scmp.ne.s32.totalorder %s200, %s203
    %p209 = scmp.eq.s32.totalorder %s22, 0
    %p210 = por %p208, %p209
    %p211 = scmp.ne.s32.totalorder %s200, %s203
    %p212 = scmp.eq.s32.totalorder %s27, 3
    %p213 = por %p211, %p212
    %p214 = scmp.ne.s32.totalorder %s203, %s204
    %p215 = scmp.eq.s32.totalorder %s27, 0
    %p216 = por %p214, %p215
    %p217 = scmp.ne.s32.totalorder %s203, %s204
    %p218 = scmp.eq.s32.totalorder %s28, 3
    %p219 = por %p217, %p218
    %p221 = scmp.ne.s32.totalorder %s204, %s220
    %p222 = scmp.eq.s32.totalorder %s28, 0
    %p223 = por %p221, %p222
    %s224 = ssub.s32 %s30, %s37
    %p225 = scmp.eq.s32.totalorder %s224, 0
    %s227 = sadd.s32 %s226, 1
    %s228 = scalar_select %p225, %s226, %s227
    %p231 = pneg %p225
    %p232 = scmp.eq.s32.totalorder %s22, 3
    %p233 = por %p231, %p232
    %p234 = scmp.ne.s32.totalorder %s226, %s229
    %p235 = scmp.eq.s32.totalorder %s22, 0
    %p236 = por %p234, %p235
    %p237 = scmp.ne.s32.totalorder %s226, %s229
    %p238 = scmp.eq.s32.totalorder %s27, 3
    %p239 = por %p237, %p238
    %p240 = scmp.ne.s32.totalorder %s229, %s230
    %p241 = scmp.eq.s32.totalorder %s27, 0
    %p242 = por %p240, %p241
    %p243 = scmp.ne.s32.totalorder %s229, %s230
    %p244 = scmp.eq.s32.totalorder %s28, 3
    %p245 = por %p243, %p244
    %p247 = scmp.ne.s32.totalorder %s230, %s246
    %p248 = scmp.eq.s32.totalorder %s28, 0
    %p249 = por %p247, %p248
    %s250 = ssub.s32 %s30, %s37
    %p251 = scmp.eq.s32.totalorder %s250, 0
    %s253 = sadd.s32 %s252, 1
    %s254 = scalar_select %p251, %s252, %s253
    %p257 = pneg %p251
    %p258 = scmp.eq.s32.totalorder %s22, 3
    %p259 = por %p257, %p258
    %p260 = scmp.ne.s32.totalorder %s252, %s255
    %p261 = scmp.eq.s32.totalorder %s22, 0
    %p262 = por %p260, %p261
    %p263 = scmp.ne.s32.totalorder %s252, %s255
    %p264 = scmp.eq.s32.totalorder %s27, 3
    %p265 = por %p263, %p264
    %p266 = scmp.ne.s32.totalorder %s255, %s256
    %p267 = scmp.eq.s32.totalorder %s27, 0
    %p268 = por %p266, %p267
    %p269 = scmp.ne.s32.totalorder %s255, %s256
    %p270 = scmp.eq.s32.totalorder %s28, 3
    %p271 = por %p269, %p270
    %p273 = scmp.ne.s32.totalorder %s256, %s272
    %p274 = scmp.eq.s32.totalorder %s28, 0
    %p275 = por %p273, %p274
    %s276 = ssub.s32 %s30, %s37
    %p277 = scmp.eq.s32.totalorder %s276, 0
    %s279 = sadd.s32 %s278, 1
    %s280 = scalar_select %p277, %s278, %s279
    %p283 = pneg %p277
    %p284 = scmp.eq.s32.totalorder %s22, 3
    %p285 = por %p283, %p284
    %p286 = scmp.ne.s32.totalorder %s278, %s281
    %p287 = scmp.eq.s32.totalorder %s22, 0
    %p288 = por %p286, %p287
    %p289 = scmp.ne.s32.totalorder %s278, %s281
    %p290 = scmp.eq.s32.totalorder %s27, 3
    %p291 = por %p289, %p290
    %p292 = scmp.ne.s32.totalorder %s281, %s282
    %p293 = scmp.eq.s32.totalorder %s27, 0
    %p294 = por %p292, %p293
    %p295 = scmp.ne.s32.totalorder %s281, %s282
    %p296 = scmp.eq.s32.totalorder %s28, 3
    %p297 = por %p295, %p296
    %p299 = scmp.ne.s32.totalorder %s282, %s298
    %p300 = scmp.eq.s32.totalorder %s28, 0
    %p301 = por %p299, %p300
    %s302 = ssub.s32 %s30, %s37
    %p303 = scmp.eq.s32.totalorder %s302, 0
    %s305 = sadd.s32 %s304, 1
    %s306 = scalar_select %p303, %s304, %s305
    %p309 = pneg %p303
    %p310 = scmp.eq.s32.totalorder %s22, 3
    %p311 = por %p309, %p310
    %p312 = scmp.ne.s32.totalorder %s304, %s307
    %p313 = scmp.eq.s32.totalorder %s22, 0
    %p314 = por %p312, %p313
    %p315 = scmp.ne.s32.totalorder %s304, %s307
    %p316 = scmp.eq.s32.totalorder %s27, 3
    %p317 = por %p315, %p316
    %p318 = scmp.ne.s32.totalorder %s307, %s308
    %p319 = scmp.eq.s32.totalorder %s27, 0
    %p320 = por %p318, %p319
    %p321 = scmp.ne.s32.totalorder %s307, %s308
    %p322 = scmp.eq.s32.totalorder %s28, 3
    %p323 = por %p321, %p322
    %p325 = scmp.ne.s32.totalorder %s308, %s324
    %p326 = scmp.eq.s32.totalorder %s28, 0
    %p327 = por %p325, %p326
    %s328 = ssub.s32 %s30, %s37
    %p329 = scmp.eq.s32.totalorder %s328, 0
    %s331 = sadd.s32 %s330, 1
    %s332 = scalar_select %p329, %s330, %s331
    %p335 = pneg %p329
    %p336 = scmp.eq.s32.totalorder %s22, 3
    %p337 = por %p335, %p336
    %p338 = scmp.ne.s32.totalorder %s330, %s333
    %p339 = scmp.eq.s32.totalorder %s22, 0
    %p340 = por %p338, %p339
    %p341 = scmp.ne.s32.totalorder %s330, %s333
    %p342 = scmp.eq.s32.totalorder %s27, 3
    %p343 = por %p341, %p342
    %p344 = scmp.ne.s32.totalorder %s333, %s334
    %p345 = scmp.eq.s32.totalorder %s27, 0
    %p346 = por %p344, %p345
    %p347 = scmp.ne.s32.totalorder %s333, %s334
    %p348 = scmp.eq.s32.totalorder %s28, 3
    %p349 = por %p347, %p348
    %p351 = scmp.ne.s32.totalorder %s334, %s350
    %p352 = scmp.eq.s32.totalorder %s28, 0
    %p353 = por %p351, %p352
    %s354 = ssub.s32 %s30, %s37
    %p355 = scmp.eq.s32.totalorder %s354, 0
    %s357 = sadd.s32 %s356, 1
    %s358 = scalar_select %p355, %s356, %s357
    %p361 = pneg %p355
    %p362 = scmp.eq.s32.totalorder %s22, 3
    %p363 = por %p361, %p362
    %p364 = scmp.ne.s32.totalorder %s356, %s359
    %p365 = scmp.eq.s32.totalorder %s22, 0
    %p366 = por %p364, %p365
    %p367 = scmp.ne.s32.totalorder %s356, %s359
    %p368 = scmp.eq.s32.totalorder %s27, 3
    %p369 = por %p367, %p368
    %p370 = scmp.ne.s32.totalorder %s359, %s360
    %p371 = scmp.eq.s32.totalorder %s27, 0
    %p372 = por %p370, %p371
    %p373 = scmp.ne.s32.totalorder %s359, %s360
    %p374 = scmp.eq.s32.totalorder %s28, 3
    %p375 = por %p373, %p374
    %p377 = scmp.ne.s32.totalorder %s360, %s376
    %p378 = scmp.eq.s32.totalorder %s28, 0
    %p379 = por %p377, %p378
    %s380 = ssub.s32 %s30, %s37
    %p381 = scmp.eq.s32.totalorder %s380, 0
    %s383 = sadd.s32 %s382, 1
    %s384 = scalar_select %p381, %s382, %s383
    %p387 = pneg %p381
    %p388 = scmp.eq.s32.totalorder %s22, 3
    %p389 = por %p387, %p388
    %p390 = scmp.ne.s32.totalorder %s382, %s385
    %p391 = scmp.eq.s32.totalorder %s22, 0
    %p392 = por %p390, %p391
    %p393 = scmp.ne.s32.totalorder %s382, %s385
    %p394 = scmp.eq.s32.totalorder %s27, 3
    %p395 = por %p393, %p394
    %p396 = scmp.ne.s32.totalorder %s385, %s386
    %p397 = scmp.eq.s32.totalorder %s27, 0
    %p398 = por %p396, %p397
    %p399 = scmp.ne.s32.totalorder %s385, %s386
    %p400 = scmp.eq.s32.totalorder %s28, 3
    %p401 = por %p399, %p400
    %p403 = scmp.ne.s32.totalorder %s386, %s402
    %p404 = scmp.eq.s32.totalorder %s28, 0
    %p405 = por %p403, %p404
    %s407 = sadd.s32 %s406, 1
    %p410 = scmp.eq.s32.totalorder %s22, 3
    %p411 = scmp.ne.s32.totalorder %s406, %s408
    %p412 = scmp.eq.s32.totalorder %s22, 0
    %p413 = por %p411, %p412
    %p414 = scmp.ne.s32.totalorder %s406, %s408
    %p415 = scmp.eq.s32.totalorder %s27, 3
    %p416 = por %p414, %p415
    %p417 = scmp.ne.s32.totalorder %s408, %s409
    %p418 = scmp.eq.s32.totalorder %s27, 0
    %p419 = por %p417, %p418
    %p420 = scmp.ne.s32.totalorder %s408, %s409
    %p421 = scmp.eq.s32.totalorder %s28, 3
    %p422 = por %p420, %p421
    %p424 = scmp.ne.s32.totalorder %s409, %s423
    %p425 = scmp.eq.s32.totalorder %s28, 0
    %p426 = por %p424, %p425
    %s428 = sadd.s32 %s427, 1
    %p431 = scmp.eq.s32.totalorder %s22, 3
    %p432 = scmp.ne.s32.totalorder %s427, %s429
    %p433 = scmp.eq.s32.totalorder %s22, 0
    %p434 = por %p432, %p433
    %p435 = scmp.ne.s32.totalorder %s427, %s429
    %p436 = scmp.eq.s32.totalorder %s27, 3
    %p437 = por %p435, %p436
    %p438 = scmp.ne.s32.totalorder %s429, %s430
    %p439 = scmp.eq.s32.totalorder %s27, 0
    %p440 = por %p438, %p439
    %p441 = scmp.ne.s32.totalorder %s429, %s430
    %p442 = scmp.eq.s32.totalorder %s28, 3
    %p443 = por %p441, %p442
    %p445 = scmp.ne.s32.totalorder %s430, %s444
    %p446 = scmp.eq.s32.totalorder %s28, 0
    %p447 = por %p445, %p446
    %s448 = ssub.s32 %s29, %s41
    %p449 = scmp.eq.s32.totalorder %s448, 0
    %s451 = sadd.s32 %s450, 1
    %s452 = scalar_select %p449, %s450, %s451
    %p455 = pneg %p449
    %p456 = scmp.eq.s32.totalorder %s22, 3
    %p457 = por %p455, %p456
    %p458 = scmp.ne.s32.totalorder %s450, %s453
    %p459 = scmp.eq.s32.totalorder %s22, 0
    %p460 = por %p458, %p459
    %p461 = scmp.ne.s32.totalorder %s450, %s453
    %p462 = scmp.eq.s32.totalorder %s27, 3
    %p463 = por %p461, %p462
    %p464 = scmp.ne.s32.totalorder %s453, %s454
    %p465 = scmp.eq.s32.totalorder %s27, 0
    %p466 = por %p464, %p465
    %p467 = scmp.ne.s32.totalorder %s453, %s454
    %p468 = scmp.eq.s32.totalorder %s28, 3
    %p469 = por %p467, %p468
    %p471 = scmp.ne.s32.totalorder %s454, %s470
    %p472 = scmp.eq.s32.totalorder %s28, 0
    %p473 = por %p471, %p472
    %p474 = scmp.le.s32.totalorder 1, %s22
    %p475 = scmp.lt.s32.totalorder %s22, 5
    %p476 = pnand %p474, %p475
    %p477 = pneg %p476
    // Predicated region
    $region9: #{_lambda_.2} parent=5 // pred_check
      _
    $region10: #{_lambda_.2} parent=5 // pred_check_branch
      %479 = sbr.rel (%p476) target = $region12
    $region11: #{_lambda_.2} parent=5 // pred_region
      %s480 = ssub.s32 %s22, 1
      // Predicated region
      $region13: #{_lambda_.2} parent=11 // pred_check
        %p481 = pneg %p419
      $region14: #{_lambda_.2} parent=11 // pred_check_branch
        %483 = sbr.rel (%p481) target = $region16
      $region15: #{_lambda_.2} parent=11 // pred_region
        _
      $region16: #{_lambda_.2} parent=11 // pred_fallthru
        _
      // Predicated region
      $region17: #{_lambda_.2} parent=11 // pred_check
        %p484 = pneg %p440
      $region18: #{_lambda_.2} parent=11 // pred_check_branch
        %486 = sbr.rel (%p484) target = $region20
      $region19: #{_lambda_.2} parent=11 // pred_region
        _
      $region20: #{_lambda_.2} parent=11 // pred_fallthru
        _
    $region12: #{_lambda_.2} parent=5 // pred_fallthru
      _
    %p487 = scmp.lt.s32.totalorder %s22, 4
    // Predicated region
    $region21: #{_lambda_.2} parent=5 // pred_check
      %p488 = pneg %p487
    $region22: #{_lambda_.2} parent=5 // pred_check_branch
      %490 = sbr.rel (%p488) target = $region24
    $region23: #{_lambda_.2} parent=5 // pred_region
      // Predicated region
      $region25: #{_lambda_.2} parent=23 // pred_check
        %p491 = pneg %p54
      $region26: #{_lambda_.2} parent=23 // pred_check_branch
        %493 = sbr.rel (%p491) target = $region28
      $region27: #{_lambda_.2} parent=23 // pred_region
        %p494 = scmp.lt.s32.totalorder %s29, 1
        %s495 = scalar_select %p494, %s29, 1
        %s496 = smul.addr %s495, 8
        %s497 = scalar_lea.vmem %s0, %s496
      $region28: #{_lambda_.2} parent=23 // pred_fallthru
        _
      // Predicated region
      $region29: #{_lambda_.2} parent=23 // pred_check
        %p498 = pneg %p80
      $region30: #{_lambda_.2} parent=23 // pred_check_branch
        %500 = sbr.rel (%p498) target = $region32
      $region31: #{_lambda_.2} parent=23 // pred_region
        %p501 = scmp.lt.s32.totalorder %s29, 1
        %s502 = scalar_select %p501, %s29, 1
        %s503 = smul.addr %s502, 4
        %s504 = scalar_lea.vmem %s1, %s503
      $region32: #{_lambda_.2} parent=23 // pred_fallthru
        _
      // Predicated region
      $region33: #{_lambda_.2} parent=23 // pred_check
        %p505 = pneg %p106
      $region34: #{_lambda_.2} parent=23 // pred_check_branch
        %507 = sbr.rel (%p505) target = $region36
      $region35: #{_lambda_.2} parent=23 // pred_region
        %p508 = scmp.lt.s32.totalorder %s30, 1
        %s509 = scalar_select %p508, %s30, 1
        %s510 = scalar_lea.vmem %s2, %s509
      $region36: #{_lambda_.2} parent=23 // pred_fallthru
        _
      // Predicated region
      $region37: #{_lambda_.2} parent=23 // pred_check
        %p511 = pneg %p132
      $region38: #{_lambda_.2} parent=23 // pred_check_branch
        %513 = sbr.rel (%p511) target = $region40
      $region39: #{_lambda_.2} parent=23 // pred_region
        %p514 = scmp.lt.s32.totalorder %s30, 1
        %s515 = scalar_select %p514, %s30, 1
        %s516 = scalar_lea.vmem %s3, %s515
      $region40: #{_lambda_.2} parent=23 // pred_fallthru
        _
      // Predicated region
      $region41: #{_lambda_.2} parent=23 // pred_check
        %p517 = pneg %p158
      $region42: #{_lambda_.2} parent=23 // pred_check_branch
        %519 = sbr.rel (%p517) target = $region44
      $region43: #{_lambda_.2} parent=23 // pred_region
        %p520 = scmp.lt.s32.totalorder %s30, 1
        %s521 = scalar_select %p520, %s30, 1
        %s522 = smul.addr %s521, 4
        %s523 = smul.addr %s522, 4
        %s524 = scalar_lea.vmem %s4, %s523
      $region44: #{_lambda_.2} parent=23 // pred_fallthru
        _
      // Predicated region
      $region45: #{_lambda_.2} parent=23 // pred_check
        %p525 = pneg %p184
      $region46: #{_lambda_.2} parent=23 // pred_check_branch
        %527 = sbr.rel (%p525) target = $region48
      $region47: #{_lambda_.2} parent=23 // pred_region
        %p528 = scmp.lt.s32.totalorder %s30, 1
        %s529 = scalar_select %p528, %s30, 1
        %s530 = scalar_lea.vmem %s5, %s529
      $region48: #{_lambda_.2} parent=23 // pred_fallthru
        _
      // Predicated region
      $region49: #{_lambda_.2} parent=23 // pred_check
        %p531 = pneg %p210
      $region50: #{_lambda_.2} parent=23 // pred_check_branch
        %533 = sbr.rel (%p531) target = $region52
      $region51: #{_lambda_.2} parent=23 // pred_region
        %p534 = scmp.lt.s32.totalorder %s30, 1
        %s535 = scalar_select %p534, %s30, 1
        %s536 = smul.addr %s535, 4
        %s537 = smul.addr %s536, 4
        %s538 = scalar_lea.vmem %s6, %s537
      $region52: #{_lambda_.2} parent=23 // pred_fallthru
        _
      // Predicated region
      $region53: #{_lambda_.2} parent=23 // pred_check
        %p539 = pneg %p236
      $region54: #{_lambda_.2} parent=23 // pred_check_branch
        %541 = sbr.rel (%p539) target = $region56
      $region55: #{_lambda_.2} parent=23 // pred_region
        %p542 = scmp.lt.s32.totalorder %s30, 1
        %s543 = scalar_select %p542, %s30, 1
        %s544 = scalar_lea.vmem %s7, %s543
      $region56: #{_lambda_.2} parent=23 // pred_fallthru
        _
      // Predicated region
      $region57: #{_lambda_.2} parent=23 // pred_check
        %p545 = pneg %p262
      $region58: #{_lambda_.2} parent=23 // pred_check_branch
        %547 = sbr.rel (%p545) target = $region60
      $region59: #{_lambda_.2} parent=23 // pred_region
        %p548 = scmp.lt.s32.totalorder %s30, 1
        %s549 = scalar_select %p548, %s30, 1
        %s550 = scalar_lea.vmem %s8, %s549
      $region60: #{_lambda_.2} parent=23 // pred_fallthru
        _
      // Predicated region
      $region61: #{_lambda_.2} parent=23 // pred_check
        %p551 = pneg %p288
      $region62: #{_lambda_.2} parent=23 // pred_check_branch
        %553 = sbr.rel (%p551) target = $region64
      $region63: #{_lambda_.2} parent=23 // pred_region
        %p554 = scmp.lt.s32.totalorder %s30, 1
        %s555 = scalar_select %p554, %s30, 1
        %s556 = scalar_lea.vmem %s9, %s555
      $region64: #{_lambda_.2} parent=23 // pred_fallthru
        _
      // Predicated region
      $region65: #{_lambda_.2} parent=23 // pred_check
        %p557 = pneg %p314
      $region66: #{_lambda_.2} parent=23 // pred_check_branch
        %559 = sbr.rel (%p557) target = $region68
      $region67: #{_lambda_.2} parent=23 // pred_region
        %p560 = scmp.lt.s32.totalorder %s30, 1
        %s561 = scalar_select %p560, %s30, 1
        %s562 = smul.addr %s561, 4
        %s563 = smul.addr %s562, 4
        %s564 = scalar_lea.vmem %s10, %s563
      $region68: #{_lambda_.2} parent=23 // pred_fallthru
        _
      // Predicated region
      $region69: #{_lambda_.2} parent=23 // pred_check
        %p565 = pneg %p340
      $region70: #{_lambda_.2} parent=23 // pred_check_branch
        %567 = sbr.rel (%p565) target = $region72
      $region71: #{_lambda_.2} parent=23 // pred_region
        %p568 = scmp.lt.s32.totalorder %s30, 1
        %s569 = scalar_select %p568, %s30, 1
        %s570 = scalar_lea.vmem %s11, %s569
      $region72: #{_lambda_.2} parent=23 // pred_fallthru
        _
      // Predicated region
      $region73: #{_lambda_.2} parent=23 // pred_check
        %p571 = pneg %p366
      $region74: #{_lambda_.2} parent=23 // pred_check_branch
        %573 = sbr.rel (%p571) target = $region76
      $region75: #{_lambda_.2} parent=23 // pred_region
        %p574 = scmp.lt.s32.totalorder %s30, 1
        %s575 = scalar_select %p574, %s30, 1
        %s576 = smul.addr %s575, 8
        %s577 = smul.addr %s576, 4
        %s578 = scalar_lea.vmem %s12, %s577
      $region76: #{_lambda_.2} parent=23 // pred_fallthru
        _
      // Predicated region
      $region77: #{_lambda_.2} parent=23 // pred_check
        %p579 = pneg %p392
      $region78: #{_lambda_.2} parent=23 // pred_check_branch
        %581 = sbr.rel (%p579) target = $region80
      $region79: #{_lambda_.2} parent=23 // pred_region
        %p582 = scmp.lt.s32.totalorder %s30, 1
        %s583 = scalar_select %p582, %s30, 1
        %s584 = scalar_lea.vmem %s13, %s583
      $region80: #{_lambda_.2} parent=23 // pred_fallthru
        _
    $region24: #{_lambda_.2} parent=5 // pred_fallthru
      _
    %p585 = scmp.le.s32.totalorder 1, %s22
    %p586 = scmp.lt.s32.totalorder %s22, 5
    %p587 = pnand %p585, %p586
    %p588 = pneg %p587
    // Predicated region
    $region81: #{_lambda_.2} parent=5 // pred_check
      _
    $region82: #{_lambda_.2} parent=5 // pred_check_branch
      %590 = sbr.rel (%p587) target = $region84
    $region83: #{_lambda_.2} parent=5 // pred_region
      %s591 = ssub.s32 %s22, 1
      %p592 = scmp.lt.s32.totalorder %s31, 1
      %s593 = scalar_select %p592, %s31, 1
      %s594 = smul.addr %s593, 8
      %s595 = scalar_lea.vmem %s0, %s594
      %p596 = pneg %p60
      %p597 = pneg %p57
      %p598 = scmp.lt.s32.totalorder %s31, 1
      %s599 = scalar_select %p598, %s31, 1
      %s600 = smul.addr %s599, 4
      %s601 = scalar_lea.vmem %s1, %s600
      %p602 = pneg %p86
      %p603 = pneg %p83
      %p604 = scmp.lt.s32.totalorder %s32, 1
      %s605 = scalar_select %p604, %s32, 1
      %s606 = scalar_lea.vmem %s2, %s605
      %p607 = pneg %p112
      %p608 = pneg %p109
      %p609 = scmp.lt.s32.totalorder %s32, 1
      %s610 = scalar_select %p609, %s32, 1
      %s611 = scalar_lea.vmem %s3, %s610
      %p612 = pneg %p138
      %p613 = pneg %p135
      %p614 = scmp.lt.s32.totalorder %s32, 1
      %s615 = scalar_select %p614, %s32, 1
      %s616 = smul.addr %s615, 4
      %s617 = smul.addr %s616, 4
      %s618 = scalar_lea.vmem %s4, %s617
      %p619 = pneg %p164
      %p620 = pneg %p161
      %p621 = scmp.lt.s32.totalorder %s32, 1
      %s622 = scalar_select %p621, %s32, 1
      %s623 = scalar_lea.vmem %s5, %s622
      %p624 = pneg %p190
      %p625 = pneg %p187
      %p626 = scmp.lt.s32.totalorder %s32, 1
      %s627 = scalar_select %p626, %s32, 1
      %s628 = smul.addr %s627, 4
      %s629 = smul.addr %s628, 4
      %s630 = scalar_lea.vmem %s6, %s629
      %p631 = pneg %p216
      %p632 = pneg %p213
      %p633 = scmp.lt.s32.totalorder %s32, 1
      %s634 = scalar_select %p633, %s32, 1
      %s635 = scalar_lea.vmem %s7, %s634
      %p636 = pneg %p242
      %p637 = pneg %p239
      %p638 = scmp.lt.s32.totalorder %s32, 1
      %s639 = scalar_select %p638, %s32, 1
      %s640 = scalar_lea.vmem %s8, %s639
      %p641 = pneg %p268
      %p642 = pneg %p265
      %p643 = scmp.lt.s32.totalorder %s32, 1
      %s644 = scalar_select %p643, %s32, 1
      %s645 = scalar_lea.vmem %s9, %s644
      %p646 = pneg %p294
      %p647 = pneg %p291
      %p648 = scmp.lt.s32.totalorder %s32, 1
      %s649 = scalar_select %p648, %s32, 1
      %s650 = smul.addr %s649, 4
      %s651 = smul.addr %s650, 4
      %s652 = scalar_lea.vmem %s10, %s651
      %p653 = pneg %p320
      %p654 = pneg %p317
      %p655 = scmp.lt.s32.totalorder %s32, 1
      %s656 = scalar_select %p655, %s32, 1
      %s657 = scalar_lea.vmem %s11, %s656
      %p658 = pneg %p346
      %p659 = pneg %p343
      %p660 = scmp.lt.s32.totalorder %s32, 1
      %s661 = scalar_select %p660, %s32, 1
      %s662 = smul.addr %s661, 8
      %s663 = smul.addr %s662, 4
      %s664 = scalar_lea.vmem %s12, %s663
      %p665 = pneg %p372
      %p666 = pneg %p369
      %p667 = scmp.lt.s32.totalorder %s32, 1
      %s668 = scalar_select %p667, %s32, 1
      %s669 = scalar_lea.vmem %s13, %s668
      %p670 = pneg %p398
      %p671 = pneg %p395
      %p672 = pneg %p419
      %p673 = pneg %p416
      %p674 = pneg %p440
      %p675 = pneg %p437
      %p676 = pneg %p466
      %p677 = pneg %p463
      %p678 = scmp.lt.s32.totalorder %s31, 1
      %s679 = scalar_select %p678, %s31, 1
      %s680 = smul.addr %s679, 4
      %s681 = scalar_lea.vmem %s16, %s680
      %p682 = scmp.lt.s32.totalorder %s31, 1
      %s683 = scalar_select %p682, %s31, 1
      %s684 = smul.addr %s683, 8
      %s685 = scalar_lea.vmem %s0, %s684
      %p686 = scmp.lt.s32.totalorder %s31, 1
      %s687 = scalar_select %p686, %s31, 1
      %s688 = smul.addr %s687, 4
      %s689 = scalar_lea.vmem %s1, %s688
      %p690 = scmp.lt.s32.totalorder %s32, 1
      %s691 = scalar_select %p690, %s32, 1
      %s692 = scalar_lea.vmem %s2, %s691
      %p693 = scmp.lt.s32.totalorder %s32, 1
      %s694 = scalar_select %p693, %s32, 1
      %s695 = scalar_lea.vmem %s3, %s694
      %p696 = scmp.lt.s32.totalorder %s32, 1
      %s697 = scalar_select %p696, %s32, 1
      %s698 = smul.addr %s697, 4
      %s699 = smul.addr %s698, 4
      %s700 = scalar_lea.vmem %s4, %s699
      %p701 = scmp.lt.s32.totalorder %s32, 1
      %s702 = scalar_select %p701, %s32, 1
      %s703 = scalar_lea.vmem %s5, %s702
      %p704 = scmp.lt.s32.totalorder %s32, 1
      %s705 = scalar_select %p704, %s32, 1
      %s706 = smul.addr %s705, 4
      %s707 = smul.addr %s706, 4
      %s708 = scalar_lea.vmem %s6, %s707
      %p709 = scmp.lt.s32.totalorder %s32, 1
      %s710 = scalar_select %p709, %s32, 1
      %s711 = scalar_lea.vmem %s7, %s710
      %p712 = scmp.lt.s32.totalorder %s32, 1
      %s713 = scalar_select %p712, %s32, 1
      %s714 = scalar_lea.vmem %s8, %s713
      %p715 = scmp.lt.s32.totalorder %s32, 1
      %s716 = scalar_select %p715, %s32, 1
      %s717 = scalar_lea.vmem %s9, %s716
      %p718 = scmp.lt.s32.totalorder %s32, 1
      %s719 = scalar_select %p718, %s32, 1
      %s720 = smul.addr %s719, 4
      %s721 = smul.addr %s720, 4
      %s722 = scalar_lea.vmem %s10, %s721
      %p723 = scmp.lt.s32.totalorder %s32, 1
      %s724 = scalar_select %p723, %s32, 1
      %s725 = scalar_lea.vmem %s11, %s724
      %p726 = scmp.lt.s32.totalorder %s32, 1
      %s727 = scalar_select %p726, %s32, 1
      %s728 = smul.addr %s727, 8
      %s729 = smul.addr %s728, 4
      %s730 = scalar_lea.vmem %s12, %s729
      %p731 = scmp.lt.s32.totalorder %s32, 1
      %s732 = scalar_select %p731, %s32, 1
      %s733 = scalar_lea.vmem %s13, %s732
      %p734 = scmp.lt.s32.totalorder %s31, 1
      %s735 = scalar_select %p734, %s31, 1
      %s736 = smul.addr %s735, 4
      %s737 = scalar_lea.vmem %s16, %s736
      %p739 = scmp.eq.s32.totalorder %s32, 0
      // Predicated region
      $region85: #{_lambda_.2} parent=83 // pred_check
        %p740 = pneg %p739
      $region86: #{_lambda_.2} parent=83 // pred_check_branch
        %742 = sbr.rel (%p740) target = $region88
      $region87: #{_lambda_.2} parent=83 // pred_region
        %v743 = vld [vmem:[%s685] sm:$0xff]
        %vm744 = vcmask 261120
        %745 = vst.msk [vmem:[#allocation2] sm:$0xff] %vm744, %v743
        %v746 = vld [vmem:[%s689] sm:$0xf]
        %v747 = vunpack.c.l.bf16 %v746
        %vm748 = vcmask 64512
        %749 = vst.msk [vmem:[#allocation3] sm:$0xff] %vm748, %v747
        %750 = vst.msk [vmem:[#allocation3 + $0x8] sm:$0xff] %vm748, %v747
        %751 = vst.msk [vmem:[#allocation3 + $0x10] sm:$0xff] %vm748, %v747
        %752 = vst.msk [vmem:[#allocation3 + $0x18] sm:$0xff] %vm748, %v747
      $region88: #{_lambda_.2} parent=83 // pred_fallthru
        _
      %v753 = vld [vmem:[#allocation2] sm:$0xff]
      %v754 = vld [vmem:[#allocation3] sm:$0xff]
      %v755 = vld [vmem:[#allocation3 + $0x8] sm:$0xff]
      %v756 = vld [vmem:[#allocation3 + $0x10] sm:$0xff]
      %v757 = vld [vmem:[#allocation3 + $0x18] sm:$0xff]
      %v758 = vld [vmem:[%s692] sm:$0x1]
      %v759 = vld [vmem:[%s695] sm:$0x1]
      %vm760 = vcmask 261120
      %v761 = vsel %vm760, %v753, 0.0
      %762 = vadd.xlane.f32.xlu0 %v761
      %v763 = vpop.xlane.xlu0 %762
      %v764 = vrcp.pop 32.0
      %v765 = vmul.f32 %v763, %v764
      %v766 = vsub.f32 %v753, %v765
      %v767 = vmul.f32 %v766, %v766
      %v768 = vsel %vm760, %v767, 0.0
      %769 = vadd.xlane.f32.xlu0 %v768
      %v770 = vpop.xlane.xlu0 %769
      %v771 = vmul.f32 %v770, %v764
      %v772 = vadd.f32 %v771, 1e-05
      %v773 = vrsqrt.pop %v772
      %v774 = vmul.f32 %v766, %v773
      %v776 = vlaneseq
      %v777 = vshrl.u32 %v776, 7
      %v778 = vsub.s32 0, %v777
      %v779 = vrot.slane %v758, %v778
      %v781 = vmul.f32 %v774, %v779
      %v783 = vlaneseq
      %v784 = vshrl.u32 %v783, 7
      %v785 = vsub.s32 0, %v784
      %v786 = vrot.slane %v759, %v785
      %v788 = vadd.f32 %v781, %v786
      %v789 = vpack.c.bf16 %v788, %v788
      %v790 = vld [vmem:[%s700] sm:$0xf]
      %v791 = vld [vmem:[%s700 + $0x4] sm:$0xf]
      %v792 = vld [vmem:[%s700 + $0x8] sm:$0xf]
      %v793 = vld [vmem:[%s700 + $0xc] sm:$0xf]
      %v794 = vld [vmem:[%s703] sm:$0x1]
      %v796 = vlaneseq
      %v797 = vshrl.u32 %v796, 7
      %v798 = vsub.s32 0, %v797
      %v799 = vrot.slane %v794, %v798
      %v805 = vunpack.c.l.b16 %v790
      %v806 = vunpack.c.l.b16 %v791
      %v807 = vunpack.c.l.b16 %v792
      %v808 = vunpack.c.l.b16 %v793
      %v809 = vpack.c.b16 %v806, %v805
      %v810 = vpack.c.b16 %v808, %v807
      %v814 = vsel %vm760, %v789, 0
      %816 = vmatprep.subr.bf16.mxu0 0
      %817 = vmatpush1.bf16.msra.mxu0 %v809
      %818 = vmatprep.subr.bf16.mxu0 0
      %819 = vmatpush1.bf16.msra.mxu0 %v810
      %820 = vmatprep.subr.bf16.mxu0 0
      %821 = vmatpush1.bf16.msra.mxu0 0
      %822 = vmatprep.subr.bf16.mxu0 0
      %823 = vmatpush1.bf16.msra.mxu0 0
      %824 = vmatprep.subr.bf16.mxu0 0
      %825 = vmatpush1.bf16.msra.mxu0 0
      %826 = vmatprep.subr.bf16.mxu0 0
      %827 = vmatpush1.bf16.msra.mxu0 0
      %828 = vmatprep.subr.bf16.mxu0 0
      %829 = vmatpush1.bf16.msra.mxu0 0
      %830 = vmatprep.subr.bf16.mxu0 0
      %831 = vmatpush1.bf16.msra.mxu0 0
      %832 = vmatprep.subr.bf16.mxu0 0
      %833 = vmatpush1.bf16.msra.mxu0 0
      %834 = vmatprep.subr.bf16.mxu0 0
      %835 = vmatpush1.bf16.msra.mxu0 0
      %836 = vmatprep.subr.bf16.mxu0 0
      %837 = vmatpush1.bf16.msra.mxu0 0
      %838 = vmatprep.subr.bf16.mxu0 0
      %839 = vmatpush1.bf16.msra.mxu0 0
      %840 = vmatprep.subr.bf16.mxu0 0
      %841 = vmatpush1.bf16.msra.mxu0 0
      %842 = vmatprep.subr.bf16.mxu0 0
      %843 = vmatpush1.bf16.msra.mxu0 0
      %844 = vmatprep.subr.bf16.mxu0 0
      %845 = vmatpush1.bf16.msra.mxu0 0
      %846 = vmatprep.subr.bf16.mxu0 0
      %847 = vmatpush1.bf16.msra.mxu0 0
      %848 = vmatprep.mubr.bf16.mxu0 0
      %849 = vmatmul.mubr.bf16.gmra.mrb[0].mxu0 %v814
      %v850 = vpop.f32.mrb[0].mxu0
      %v851 = vadd.f32 %v799, %v850
      %v852 = vpop.f32.mrb[0].mxu0
      %v853 = vpop.f32.mrb[0].mxu0
      %v854 = vpop.f32.mrb[0].mxu0
      %855 = vdwg.mxu0
      %v856 = vmul.f32 %v851, 0.35355338
      %v857 = vld [vmem:[%s708] sm:$0xf]
      %v858 = vld [vmem:[%s708 + $0x4] sm:$0xf]
      %v859 = vld [vmem:[%s708 + $0x8] sm:$0xf]
      %v860 = vld [vmem:[%s708 + $0xc] sm:$0xf]
      %v861 = vpack.c.bf16 %v856, %v856
      %v862 = vpack.c.bf16 %v851, %v851
      %864 = vrot.lane.b32.xlu0 %v862, 96
      %v865 = vpop.permute.xlu0 %864
      %vm866 = vcmask 64512
      %v868 = vsel %vm866, %v861, 0
      %v871 = vsel %vm866, %v865, 0
      %873 = vmatprep.subr.bf16.mxu0 0
      %874 = vmatpush1.bf16.xpose.msra.mxu0 %v871
      %875 = vmatprep.subr.bf16.mxu0 0
      %876 = vmatpush1.bf16.xpose.msra.mxu0 0
      %877 = vmatprep.subr.bf16.mxu0 0
      %878 = vmatpush1.bf16.xpose.msra.mxu0 0
      %879 = vmatprep.subr.bf16.mxu0 0
      %880 = vmatpush1.bf16.xpose.msra.mxu0 0
      %881 = vmatprep.subr.bf16.mxu0 0
      %882 = vmatpush1.bf16.xpose.msra.mxu0 0
      %883 = vmatprep.subr.bf16.mxu0 0
      %884 = vmatpush1.bf16.xpose.msra.mxu0 0
      %885 = vmatprep.subr.bf16.mxu0 0
      %886 = vmatpush1.bf16.xpose.msra.mxu0 0
      %887 = vmatprep.subr.bf16.mxu0 0
      %888 = vmatpush1.bf16.xpose.msra.mxu0 0
      %889 = vmatprep.subr.bf16.mxu0 0
      %890 = vmatpush1.bf16.xpose.msra.mxu0 0
      %891 = vmatprep.subr.bf16.mxu0 0
      %892 = vmatpush1.bf16.xpose.msra.mxu0 0
      %893 = vmatprep.subr.bf16.mxu0 0
      %894 = vmatpush1.bf16.xpose.msra.mxu0 0
      %895 = vmatprep.subr.bf16.mxu0 0
      %896 = vmatpush1.bf16.xpose.msra.mxu0 0
      %897 = vmatprep.subr.bf16.mxu0 0
      %898 = vmatpush1.bf16.xpose.msra.mxu0 0
      %899 = vmatprep.subr.bf16.mxu0 0
      %900 = vmatpush1.bf16.xpose.msra.mxu0 0
      %901 = vmatprep.subr.bf16.mxu0 0
      %902 = vmatpush1.bf16.xpose.msra.mxu0 0
      %903 = vmatprep.subr.bf16.mxu0 0
      %904 = vmatpush1.bf16.xpose.msra.mxu0 0
      %905 = vmatprep.mubr.bf16.mxu0 0
      %906 = vmatmul.mubr.bf16.gmra.mrb[0].mxu0 %v868
      %v907 = vpop.f32.mrb[0].mxu0
      %v908 = vadd.f32 0.0, %v907
      %v909 = vpop.f32.mrb[0].mxu0
      %v910 = vpop.f32.mrb[0].mxu0
      %v911 = vpop.f32.mrb[0].mxu0
      %912 = vdwg.mxu0
      %914 = vrot.lane.b32.xlu0 %v861, 120
      %v915 = vpop.permute.xlu0 %914
      %916 = vrot.lane.b32.xlu0 %v862, 88
      %v917 = vpop.permute.xlu0 %916
      %v919 = vsel %vm866, %v915, 0
      %v922 = vsel %vm866, %v917, 0
      %924 = vmatprep.subr.bf16.mxu0 0
      %925 = vmatpush1.bf16.xpose.msra.mxu0 %v922
      %926 = vmatprep.subr.bf16.mxu0 0
      %927 = vmatpush1.bf16.xpose.msra.mxu0 0
      %928 = vmatprep.subr.bf16.mxu0 0
      %929 = vmatpush1.bf16.xpose.msra.mxu0 0
      %930 = vmatprep.subr.bf16.mxu0 0
      %931 = vmatpush1.bf16.xpose.msra.mxu0 0
      %932 = vmatprep.subr.bf16.mxu0 0
      %933 = vmatpush1.bf16.xpose.msra.mxu0 0
      %934 = vmatprep.subr.bf16.mxu0 0
      %935 = vmatpush1.bf16.xpose.msra.mxu0 0
      %936 = vmatprep.subr.bf16.mxu0 0
      %937 = vmatpush1.bf16.xpose.msra.mxu0 0
      %938 = vmatprep.subr.bf16.mxu0 0
      %939 = vmatpush1.bf16.xpose.msra.mxu0 0
      %940 = vmatprep.subr.bf16.mxu0 0
      %941 = vmatpush1.bf16.xpose.msra.mxu0 0
      %942 = vmatprep.subr.bf16.mxu0 0
      %943 = vmatpush1.bf16.xpose.msra.mxu0 0
      %944 = vmatprep.subr.bf16.mxu0 0
      %945 = vmatpush1.bf16.xpose.msra.mxu0 0
      %946 = vmatprep.subr.bf16.mxu0 0
      %947 = vmatpush1.bf16.xpose.msra.mxu0 0
      %948 = vmatprep.subr.bf16.mxu0 0
      %949 = vmatpush1.bf16.xpose.msra.mxu0 0
      %950 = vmatprep.subr.bf16.mxu0 0
      %951 = vmatpush1.bf16.xpose.msra.mxu0 0
      %952 = vmatprep.subr.bf16.mxu0 0
      %953 = vmatpush1.bf16.xpose.msra.mxu0 0
      %954 = vmatprep.subr.bf16.mxu0 0
      %955 = vmatpush1.bf16.xpose.msra.mxu0 0
      %956 = vmatprep.mubr.bf16.mxu0 0
      %957 = vmatmul.mubr.bf16.gmra.mrb[0].mxu0 %v919
      %v958 = vpop.f32.mrb[0].mxu0
      %v959 = vadd.f32 0.0, %v958
      %v960 = vpop.f32.mrb[0].mxu0
      %v961 = vpop.f32.mrb[0].mxu0
      %v962 = vpop.f32.mrb[0].mxu0
      %963 = vdwg.mxu0
      %964 = vrot.lane.b32.xlu0 %v861, 112
      %v965 = vpop.permute.xlu0 %964
      %966 = vrot.lane.b32.xlu0 %v862, 80
      %v967 = vpop.permute.xlu0 %966
      %v969 = vsel %vm866, %v965, 0
      %v972 = vsel %vm866, %v967, 0
      %974 = vmatprep.subr.bf16.mxu0 0
      %975 = vmatpush1.bf16.xpose.msra.mxu0 %v972
      %976 = vmatprep.subr.bf16.mxu0 0
      %977 = vmatpush1.bf16.xpose.msra.mxu0 0
      %978 = vmatprep.subr.bf16.mxu0 0
      %979 = vmatpush1.bf16.xpose.msra.mxu0 0
      %980 = vmatprep.subr.bf16.mxu0 0
      %981 = vmatpush1.bf16.xpose.msra.mxu0 0
      %982 = vmatprep.subr.bf16.mxu0 0
      %983 = vmatpush1.bf16.xpose.msra.mxu0 0
      %984 = vmatprep.subr.bf16.mxu0 0
      %985 = vmatpush1.bf16.xpose.msra.mxu0 0
      %986 = vmatprep.subr.bf16.mxu0 0
      %987 = vmatpush1.bf16.xpose.msra.mxu0 0
      %988 = vmatprep.subr.bf16.mxu0 0
      %989 = vmatpush1.bf16.xpose.msra.mxu0 0
      %990 = vmatprep.subr.bf16.mxu0 0
      %991 = vmatpush1.bf16.xpose.msra.mxu0 0
      %992 = vmatprep.subr.bf16.mxu0 0
      %993 = vmatpush1.bf16.xpose.msra.mxu0 0
      %994 = vmatprep.subr.bf16.mxu0 0
      %995 = vmatpush1.bf16.xpose.msra.mxu0 0
      %996 = vmatprep.subr.bf16.mxu0 0
      %997 = vmatpush1.bf16.xpose.msra.mxu0 0
      %998 = vmatprep.subr.bf16.mxu0 0
      %999 = vmatpush1.bf16.xpose.msra.mxu0 0
      %1000 = vmatprep.subr.bf16.mxu0 0
      %1001 = vmatpush1.bf16.xpose.msra.mxu0 0
      %1002 = vmatprep.subr.bf16.mxu0 0
      %1003 = vmatpush1.bf16.xpose.msra.mxu0 0
      %1004 = vmatprep.subr.bf16.mxu0 0
      %1005 = vmatpush1.bf16.xpose.msra.mxu0 0
      %1006 = vmatprep.mubr.bf16.mxu0 0
      %1007 = vmatmul.mubr.bf16.gmra.mrb[0].mxu0 %v969
      %v1008 = vpop.f32.mrb[0].mxu0
      %v1009 = vadd.f32 0.0, %v1008
      %v1010 = vpop.f32.mrb[0].mxu0
      %v1011 = vpop.f32.mrb[0].mxu0
      %v1012 = vpop.f32.mrb[0].mxu0
      %1013 = vdwg.mxu0
      %1014 = vrot.lane.b32.xlu0 %v861, 104
      %v1015 = vpop.permute.xlu0 %1014
      %1016 = vrot.lane.b32.xlu0 %v862, 72
      %v1017 = vpop.permute.xlu0 %1016
      %v1019 = vsel %vm866, %v1015, 0
      %v1022 = vsel %vm866, %v1017, 0
      %1024 = vmatprep.subr.bf16.mxu0 0
      %1025 = vmatpush1.bf16.xpose.msra.mxu0 %v1022
      %1026 = vmatprep.subr.bf16.mxu0 0
      %1027 = vmatpush1.bf16.xpose.msra.mxu0 0
      %1028 = vmatprep.subr.bf16.mxu0 0
      %1029 = vmatpush1.bf16.xpose.msra.mxu0 0
      %1030 = vmatprep.subr.bf16.mxu0 0
      %1031 = vmatpush1.bf16.xpose.msra.mxu0 0
      %1032 = vmatprep.subr.bf16.mxu0 0
      %1033 = vmatpush1.bf16.xpose.msra.mxu0 0
      %1034 = vmatprep.subr.bf16.mxu0 0
      %1035 = vmatpush1.bf16.xpose.msra.mxu0 0
      %1036 = vmatprep.subr.bf16.mxu0 0
      %1037 = vmatpush1.bf16.xpose.msra.mxu0 0
      %1038 = vmatprep.subr.bf16.mxu0 0
      %1039 = vmatpush1.bf16.xpose.msra.mxu0 0
      %1040 = vmatprep.subr.bf16.mxu0 0
      %1041 = vmatpush1.bf16.xpose.msra.mxu0 0
      %1042 = vmatprep.subr.bf16.mxu0 0
      %1043 = vmatpush1.bf16.xpose.msra.mxu0 0
      %1044 = vmatprep.subr.bf16.mxu0 0
      %1045 = vmatpush1.bf16.xpose.msra.mxu0 0
      %1046 = vmatprep.subr.bf16.mxu0 0
      %1047 = vmatpush1.bf16.xpose.msra.mxu0 0
      %1048 = vmatprep.subr.bf16.mxu0 0
      %1049 = vmatpush1.bf16.xpose.msra.mxu0 0
      %1050 = vmatprep.subr.bf16.mxu0 0
      %1051 = vmatpush1.bf16.xpose.msra.mxu0 0
      %1052 = vmatprep.subr.bf16.mxu0 0
      %1053 = vmatpush1.bf16.xpose.msra.mxu0 0
      %1054 = vmatprep.subr.bf16.mxu0 0
      %1055 = vmatpush1.bf16.xpose.msra.mxu0 0
      %1056 = vmatprep.mubr.bf16.mxu0 0
      %1057 = vmatmul.mubr.bf16.gmra.mrb[0].mxu0 %v1019
      %v1058 = vpop.f32.mrb[0].mxu0
      %v1059 = vadd.f32 0.0, %v1058
      %v1060 = vpop.f32.mrb[0].mxu0
      %v1061 = vpop.f32.mrb[0].mxu0
      %v1062 = vpop.f32.mrb[0].mxu0
      %1063 = vdwg.mxu0
      %v1064 = vadd.f32 %v908, %v754
      %v1065 = vadd.f32 %v959, %v755
      %v1066 = vadd.f32 %v1009, %v756
      %v1067 = vadd.f32 %v1059, %v757
      %v1068 = vsel %vm866, %v1064, -inf
      %1069 = vmax.xlane.f32.xlu0 %v1068
      %v1070 = vpop.xlane.xlu0 %1069
      %v1071 = vsel %vm866, %v1065, -inf
      %1072 = vmax.xlane.f32.xlu0 %v1071
      %v1073 = vpop.xlane.xlu0 %1072
      %v1074 = vsel %vm866, %v1066, -inf
      %1075 = vmax.xlane.f32.xlu0 %v1074
      %v1076 = vpop.xlane.xlu0 %1075
      %v1077 = vsel %vm866, %v1067, -inf
      %1078 = vmax.xlane.f32.xlu0 %v1077
      %v1079 = vpop.xlane.xlu0 %1078
      %v1080 = vsub.f32 %v1064, %v1070
      %v1081 = vsub.f32 %v1065, %v1073
      %v1082 = vsub.f32 %v1066, %v1076
      %v1083 = vsub.f32 %v1067, %v1079
      %v1084 = vmul.f32 %v1080, 1.442695
      %v1085 = vpow.pop %v1084
      %v1086 = vmul.f32 %v1081, 1.442695
      %v1087 = vpow.pop %v1086
      %v1088 = vmul.f32 %v1082, 1.442695
      %v1089 = vpow.pop %v1088
      %v1090 = vmul.f32 %v1083, 1.442695
      %v1091 = vpow.pop %v1090
      %v1092 = vsel %vm866, %v1085, 0.0
      %1093 = vadd.xlane.f32.xlu0 %v1092
      %v1094 = vpop.xlane.xlu0 %1093
      %v1095 = vsel %vm866, %v1087, 0.0
      %1096 = vadd.xlane.f32.xlu0 %v1095
      %v1097 = vpop.xlane.xlu0 %1096
      %v1098 = vsel %vm866, %v1089, 0.0
      %1099 = vadd.xlane.f32.xlu0 %v1098
      %v1100 = vpop.xlane.xlu0 %1099
      %v1101 = vsel %vm866, %v1091, 0.0
      %1102 = vadd.xlane.f32.xlu0 %v1101
      %v1103 = vpop.xlane.xlu0 %1102
      %v1104 = vrcp.pop %v1094
      %v1105 = vrcp.pop %v1097
      %v1106 = vrcp.pop %v1100
      %v1107 = vrcp.pop %v1103
      %v1108 = vmul.f32 %v1085, %v1104
      %v1109 = vmul.f32 %v1087, %v1105
      %v1110 = vmul.f32 %v1089, %v1106
      %v1111 = vmul.f32 %v1091, %v1107
      %v1112 = vpack.c.bf16 %v1109, %v1108
      %v1113 = vpack.c.bf16 %v1111, %v1110
      %1114 = vrot.lane.b32.xlu0 %v862, 64
      %v1115 = vpop.permute.xlu0 %1114
      %v1117 = vsel %vm866, %v1112, 0
      %vm1119 = vcmask 1043456
      %v1121 = vsel %vm1119, %v1115, 0
      %1123 = vmatprep.subr.bf16.mxu0 0
      %1124 = vmatpush1.bf16.msra.mxu0 %v1121
      %1125 = vmatprep.subr.bf16.mxu0 0
      %1126 = vmatpush1.bf16.msra.mxu0 0
      %1127 = vmatprep.subr.bf16.mxu0 0
      %1128 = vmatpush1.bf16.msra.mxu0 0
      %1129 = vmatprep.subr.bf16.mxu0 0
      %1130 = vmatpush1.bf16.msra.mxu0 0
      %1131 = vmatprep.subr.bf16.mxu0 0
      %1132 = vmatpush1.bf16.msra.mxu0 0
      %1133 = vmatprep.subr.bf16.mxu0 0
      %1134 = vmatpush1.bf16.msra.mxu0 0
      %1135 = vmatprep.subr.bf16.mxu0 0
      %1136 = vmatpush1.bf16.msra.mxu0 0
      %1137 = vmatprep.subr.bf16.mxu0 0
      %1138 = vmatpush1.bf16.msra.mxu0 0
      %1139 = vmatprep.subr.bf16.mxu0 0
      %1140 = vmatpush1.bf16.msra.mxu0 0
      %1141 = vmatprep.subr.bf16.mxu0 0
      %1142 = vmatpush1.bf16.msra.mxu0 0
      %1143 = vmatprep.subr.bf16.mxu0 0
      %1144 = vmatpush1.bf16.msra.mxu0 0
      %1145 = vmatprep.subr.bf16.mxu0 0
      %1146 = vmatpush1.bf16.msra.mxu0 0
      %1147 = vmatprep.subr.bf16.mxu0 0
      %1148 = vmatpush1.bf16.msra.mxu0 0
      %1149 = vmatprep.subr.bf16.mxu0 0
      %1150 = vmatpush1.bf16.msra.mxu0 0
      %1151 = vmatprep.subr.bf16.mxu0 0
      %1152 = vmatpush1.bf16.msra.mxu0 0
      %1153 = vmatprep.subr.bf16.mxu0 0
      %1154 = vmatpush1.bf16.msra.mxu0 0
      %1155 = vmatprep.mubr.bf16.mxu0 0
      %1156 = vmatmul.mubr.bf16.gmra.mrb[0].mxu0 %v1117
      %v1157 = vpop.f32.mrb[0].mxu0
      %v1158 = vadd.f32 0.0, %v1157
      %v1159 = vpop.f32.mrb[0].mxu0
      %v1160 = vpop.f32.mrb[0].mxu0
      %v1161 = vpop.f32.mrb[0].mxu0
      %1162 = vdwg.mxu0
      %v1164 = vrot.slane %v1112, 4
      %1165 = vrot.lane.b32.xlu0 %v862, 56
      %v1166 = vpop.permute.xlu0 %1165
      %v1168 = vsel %vm866, %v1164, 0
      %v1171 = vsel %vm1119, %v1166, 0
      %1173 = vmatprep.subr.bf16.mxu0 0
      %1174 = vmatpush1.bf16.msra.mxu0 %v1171
      %1175 = vmatprep.subr.bf16.mxu0 0
      %1176 = vmatpush1.bf16.msra.mxu0 0
      %1177 = vmatprep.subr.bf16.mxu0 0
      %1178 = vmatpush1.bf16.msra.mxu0 0
      %1179 = vmatprep.subr.bf16.mxu0 0
      %1180 = vmatpush1.bf16.msra.mxu0 0
      %1181 = vmatprep.subr.bf16.mxu0 0
      %1182 = vmatpush1.bf16.msra.mxu0 0
      %1183 = vmatprep.subr.bf16.mxu0 0
      %1184 = vmatpush1.bf16.msra.mxu0 0
      %1185 = vmatprep.subr.bf16.mxu0 0
      %1186 = vmatpush1.bf16.msra.mxu0 0
      %1187 = vmatprep.subr.bf16.mxu0 0
      %1188 = vmatpush1.bf16.msra.mxu0 0
      %1189 = vmatprep.subr.bf16.mxu0 0
      %1190 = vmatpush1.bf16.msra.mxu0 0
      %1191 = vmatprep.subr.bf16.mxu0 0
      %1192 = vmatpush1.bf16.msra.mxu0 0
      %1193 = vmatprep.subr.bf16.mxu0 0
      %1194 = vmatpush1.bf16.msra.mxu0 0
      %1195 = vmatprep.subr.bf16.mxu0 0
      %1196 = vmatpush1.bf16.msra.mxu0 0
      %1197 = vmatprep.subr.bf16.mxu0 0
      %1198 = vmatpush1.bf16.msra.mxu0 0
      %1199 = vmatprep.subr.bf16.mxu0 0
      %1200 = vmatpush1.bf16.msra.mxu0 0
      %1201 = vmatprep.subr.bf16.mxu0 0
      %1202 = vmatpush1.bf16.msra.mxu0 0
      %1203 = vmatprep.subr.bf16.mxu0 0
      %1204 = vmatpush1.bf16.msra.mxu0 0
      %1205 = vmatprep.mubr.bf16.mxu0 0
      %1206 = vmatmul.mubr.bf16.gmra.mrb[0].mxu0 %v1168
      %v1207 = vpop.f32.mrb[0].mxu0
      %v1208 = vadd.f32 0.0, %v1207
      %v1209 = vpop.f32.mrb[0].mxu0
      %v1210 = vpop.f32.mrb[0].mxu0
      %v1211 = vpop.f32.mrb[0].mxu0
      %1212 = vdwg.mxu0
      %1213 = vrot.lane.b32.xlu0 %v862, 48
      %v1214 = vpop.permute.xlu0 %1213
      %v1216 = vsel %vm866, %v1113, 0
      %v1219 = vsel %vm1119, %v1214, 0
      %1221 = vmatprep.subr.bf16.mxu0 0
      %1222 = vmatpush1.bf16.msra.mxu0 %v1219
      %1223 = vmatprep.subr.bf16.mxu0 0
      %1224 = vmatpush1.bf16.msra.mxu0 0
      %1225 = vmatprep.subr.bf16.mxu0 0
      %1226 = vmatpush1.bf16.msra.mxu0 0
      %1227 = vmatprep.subr.bf16.mxu0 0
      %1228 = vmatpush1.bf16.msra.mxu0 0
      %1229 = vmatprep.subr.bf16.mxu0 0
      %1230 = vmatpush1.bf16.msra.mxu0 0
      %1231 = vmatprep.subr.bf16.mxu0 0
      %1232 = vmatpush1.bf16.msra.mxu0 0
      %1233 = vmatprep.subr.bf16.mxu0 0
      %1234 = vmatpush1.bf16.msra.mxu0 0
      %1235 = vmatprep.subr.bf16.mxu0 0
      %1236 = vmatpush1.bf16.msra.mxu0 0
      %1237 = vmatprep.subr.bf16.mxu0 0
      %1238 = vmatpush1.bf16.msra.mxu0 0
      %1239 = vmatprep.subr.bf16.mxu0 0
      %1240 = vmatpush1.bf16.msra.mxu0 0
      %1241 = vmatprep.subr.bf16.mxu0 0
      %1242 = vmatpush1.bf16.msra.mxu0 0
      %1243 = vmatprep.subr.bf16.mxu0 0
      %1244 = vmatpush1.bf16.msra.mxu0 0
      %1245 = vmatprep.subr.bf16.mxu0 0
      %1246 = vmatpush1.bf16.msra.mxu0 0
      %1247 = vmatprep.subr.bf16.mxu0 0
      %1248 = vmatpush1.bf16.msra.mxu0 0
      %1249 = vmatprep.subr.bf16.mxu0 0
      %1250 = vmatpush1.bf16.msra.mxu0 0
      %1251 = vmatprep.subr.bf16.mxu0 0
      %1252 = vmatpush1.bf16.msra.mxu0 0
      %1253 = vmatprep.mubr.bf16.mxu0 0
      %1254 = vmatmul.mubr.bf16.gmra.mrb[0].mxu0 %v1216
      %v1255 = vpop.f32.mrb[0].mxu0
      %v1256 = vadd.f32 0.0, %v1255
      %v1257 = vpop.f32.mrb[0].mxu0
      %v1258 = vpop.f32.mrb[0].mxu0
      %v1259 = vpop.f32.mrb[0].mxu0
      %1260 = vdwg.mxu0
      %v1262 = vrot.slane %v1113, 4
      %1263 = vrot.lane.b32.xlu0 %v862, 40
      %v1264 = vpop.permute.xlu0 %1263
      %v1266 = vsel %vm866, %v1262, 0
      %v1269 = vsel %vm1119, %v1264, 0
      %1271 = vmatprep.subr.bf16.mxu0 0
      %1272 = vmatpush1.bf16.msra.mxu0 %v1269
      %1273 = vmatprep.subr.bf16.mxu0 0
      %1274 = vmatpush1.bf16.msra.mxu0 0
      %1275 = vmatprep.subr.bf16.mxu0 0
      %1276 = vmatpush1.bf16.msra.mxu0 0
      %1277 = vmatprep.subr.bf16.mxu0 0
      %1278 = vmatpush1.bf16.msra.mxu0 0
      %1279 = vmatprep.subr.bf16.mxu0 0
      %1280 = vmatpush1.bf16.msra.mxu0 0
      %1281 = vmatprep.subr.bf16.mxu0 0
      %1282 = vmatpush1.bf16.msra.mxu0 0
      %1283 = vmatprep.subr.bf16.mxu0 0
      %1284 = vmatpush1.bf16.msra.mxu0 0
      %1285 = vmatprep.subr.bf16.mxu0 0
      %1286 = vmatpush1.bf16.msra.mxu0 0
      %1287 = vmatprep.subr.bf16.mxu0 0
      %1288 = vmatpush1.bf16.msra.mxu0 0
      %1289 = vmatprep.subr.bf16.mxu0 0
      %1290 = vmatpush1.bf16.msra.mxu0 0
      %1291 = vmatprep.subr.bf16.mxu0 0
      %1292 = vmatpush1.bf16.msra.mxu0 0
      %1293 = vmatprep.subr.bf16.mxu0 0
      %1294 = vmatpush1.bf16.msra.mxu0 0
      %1295 = vmatprep.subr.bf16.mxu0 0
      %1296 = vmatpush1.bf16.msra.mxu0 0
      %1297 = vmatprep.subr.bf16.mxu0 0
      %1298 = vmatpush1.bf16.msra.mxu0 0
      %1299 = vmatprep.subr.bf16.mxu0 0
      %1300 = vmatpush1.bf16.msra.mxu0 0
      %1301 = vmatprep.subr.bf16.mxu0 0
      %1302 = vmatpush1.bf16.msra.mxu0 0
      %1303 = vmatprep.mubr.bf16.mxu0 0
      %1304 = vmatmul.mubr.bf16.gmra.mrb[0].mxu0 %v1266
      %v1305 = vpop.f32.mrb[0].mxu0
      %v1306 = vadd.f32 0.0, %v1305
      %v1307 = vpop.f32.mrb[0].mxu0
      %v1308 = vpop.f32.mrb[0].mxu0
      %v1309 = vpop.f32.mrb[0].mxu0
      %1310 = vdwg.mxu0
      %1312 = vrot.lane.b32.xlu0 %v1208, 8
      %v1313 = vpop.permute.xlu0 %1312
      %1316 = vrot.lane.b32.xlu0 %v1256, 16
      %v1317 = vpop.permute.xlu0 %1316
      %1320 = vrot.lane.b32.xlu0 %v1306, 24
      %v1321 = vpop.permute.xlu0 %1320
      %v1323 = vsel %vm866, %v1158, %v1313
      %vm1324 = vcmask 130048
      %v1325 = vsel %vm1324, %v1323, %v1317
      %vm1326 = vcmask 195584
      %v1327 = vsel %vm1326, %v1325, %v1321
      %v1328 = vpack.c.bf16 %v1327, %v1327
      %v1333 = vunpack.c.l.b16 %v857
      %v1334 = vunpack.c.l.b16 %v858
      %v1335 = vunpack.c.l.b16 %v859
      %v1336 = vunpack.c.l.b16 %v860
      %v1337 = vpack.c.b16 %v1334, %v1333
      %v1338 = vpack.c.b16 %v1336, %v1335
      %v1342 = vsel %vm760, %v1328, 0
      %1344 = vmatprep.subr.bf16.mxu0 0
      %1345 = vmatpush1.bf16.msra.mxu0 %v1337
      %1346 = vmatprep.subr.bf16.mxu0 0
      %1347 = vmatpush1.bf16.msra.mxu0 %v1338
      %1348 = vmatprep.subr.bf16.mxu0 0
      %1349 = vmatpush1.bf16.msra.mxu0 0
      %1350 = vmatprep.subr.bf16.mxu0 0
      %1351 = vmatpush1.bf16.msra.mxu0 0
      %1352 = vmatprep.subr.bf16.mxu0 0
      %1353 = vmatpush1.bf16.msra.mxu0 0
      %1354 = vmatprep.subr.bf16.mxu0 0
      %1355 = vmatpush1.bf16.msra.mxu0 0
      %1356 = vmatprep.subr.bf16.mxu0 0
      %1357 = vmatpush1.bf16.msra.mxu0 0
      %1358 = vmatprep.subr.bf16.mxu0 0
      %1359 = vmatpush1.bf16.msra.mxu0 0
      %1360 = vmatprep.subr.bf16.mxu0 0
      %1361 = vmatpush1.bf16.msra.mxu0 0
      %1362 = vmatprep.subr.bf16.mxu0 0
      %1363 = vmatpush1.bf16.msra.mxu0 0
      %1364 = vmatprep.subr.bf16.mxu0 0
      %1365 = vmatpush1.bf16.msra.mxu0 0
      %1366 = vmatprep.subr.bf16.mxu0 0
      %1367 = vmatpush1.bf16.msra.mxu0 0
      %1368 = vmatprep.subr.bf16.mxu0 0
      %1369 = vmatpush1.bf16.msra.mxu0 0
      %1370 = vmatprep.subr.bf16.mxu0 0
      %1371 = vmatpush1.bf16.msra.mxu0 0
      %1372 = vmatprep.subr.bf16.mxu0 0
      %1373 = vmatpush1.bf16.msra.mxu0 0
      %1374 = vmatprep.subr.bf16.mxu0 0
      %1375 = vmatpush1.bf16.msra.mxu0 0
      %1376 = vmatprep.mubr.bf16.mxu0 0
      %1377 = vmatmul.mubr.bf16.gmra.mrb[0].mxu0 %v1342
      %v1378 = vpop.f32.mrb[0].mxu0
      %v1379 = vadd.f32 0.0, %v1378
      %v1380 = vpop.f32.mrb[0].mxu0
      %v1381 = vpop.f32.mrb[0].mxu0
      %v1382 = vpop.f32.mrb[0].mxu0
      %1383 = vdwg.mxu0
      %v1384 = vadd.f32 %v753, %v1379
      %v1385 = vld [vmem:[%s711] sm:$0x1]
      %v1387 = vlaneseq
      %v1388 = vshrl.u32 %v1387, 7
      %v1389 = vsub.s32 0, %v1388
      %v1390 = vrot.slane %v1385, %v1389
      %v1392 = vadd.f32 %v1384, %v1390
      %v1393 = vld [vmem:[%s714] sm:$0x1]
      %v1394 = vld [vmem:[%s717] sm:$0x1]
      %v1395 = vsel %vm760, %v1392, 0.0
      %1396 = vadd.xlane.f32.xlu0 %v1395
      %v1397 = vpop.xlane.xlu0 %1396
      %v1398 = vmul.f32 %v1397, %v764
      %v1399 = vsub.f32 %v1392, %v1398
      %v1400 = vmul.f32 %v1399, %v1399
      %v1401 = vsel %vm760, %v1400, 0.0
      %1402 = vadd.xlane.f32.xlu0 %v1401
      %v1403 = vpop.xlane.xlu0 %1402
      %v1404 = vmul.f32 %v1403, %v764
      %v1405 = vadd.f32 %v1404, 1e-05
      %v1406 = vrsqrt.pop %v1405
      %v1407 = vmul.f32 %v1399, %v1406
      %v1409 = vlaneseq
      %v1410 = vshrl.u32 %v1409, 7
      %v1411 = vsub.s32 0, %v1410
      %v1412 = vrot.slane %v1393, %v1411
      %v1414 = vmul.f32 %v1407, %v1412
      %v1416 = vlaneseq
      %v1417 = vshrl.u32 %v1416, 7
      %v1418 = vsub.s32 0, %v1417
      %v1419 = vrot.slane %v1394, %v1418
      %v1421 = vadd.f32 %v1414, %v1419
      %v1422 = vpack.c.bf16 %v1421, %v1421
      %v1423 = vld [vmem:[%s722] sm:$0xf]
      %v1424 = vld [vmem:[%s722 + $0x4] sm:$0xf]
      %v1425 = vld [vmem:[%s722 + $0x8] sm:$0xf]
      %v1426 = vld [vmem:[%s722 + $0xc] sm:$0xf]
      %v1427 = vld [vmem:[%s725] sm:$0x1]
      %v1429 = vlaneseq
      %v1430 = vshrl.u32 %v1429, 7
      %v1431 = vsub.s32 0, %v1430
      %v1432 = vrot.slane %v1427, %v1431
      %v1438 = vunpack.c.l.b16 %v1423
      %v1439 = vunpack.c.l.b16 %v1424
      %v1440 = vunpack.c.l.b16 %v1425
      %v1441 = vunpack.c.l.b16 %v1426
      %v1442 = vpack.c.b16 %v1439, %v1438
      %v1443 = vpack.c.b16 %v1441, %v1440
      %v1447 = vsel %vm760, %v1422, 0
      %1449 = vmatprep.subr.bf16.mxu0 0
      %1450 = vmatpush1.bf16.msra.mxu0 %v1442
      %1451 = vmatprep.subr.bf16.mxu0 0
      %1452 = vmatpush1.bf16.msra.mxu0 %v1443
      %1453 = vmatprep.subr.bf16.mxu0 0
      %1454 = vmatpush1.bf16.msra.mxu0 0
      %1455 = vmatprep.subr.bf16.mxu0 0
      %1456 = vmatpush1.bf16.msra.mxu0 0
      %1457 = vmatprep.subr.bf16.mxu0 0
      %1458 = vmatpush1.bf16.msra.mxu0 0
      %1459 = vmatprep.subr.bf16.mxu0 0
      %1460 = vmatpush1.bf16.msra.mxu0 0
      %1461 = vmatprep.subr.bf16.mxu0 0
      %1462 = vmatpush1.bf16.msra.mxu0 0
      %1463 = vmatprep.subr.bf16.mxu0 0
      %1464 = vmatpush1.bf16.msra.mxu0 0
      %1465 = vmatprep.subr.bf16.mxu0 0
      %1466 = vmatpush1.bf16.msra.mxu0 0
      %1467 = vmatprep.subr.bf16.mxu0 0
      %1468 = vmatpush1.bf16.msra.mxu0 0
      %1469 = vmatprep.subr.bf16.mxu0 0
      %1470 = vmatpush1.bf16.msra.mxu0 0
      %1471 = vmatprep.subr.bf16.mxu0 0
      %1472 = vmatpush1.bf16.msra.mxu0 0
      %1473 = vmatprep.subr.bf16.mxu0 0
      %1474 = vmatpush1.bf16.msra.mxu0 0
      %1475 = vmatprep.subr.bf16.mxu0 0
      %1476 = vmatpush1.bf16.msra.mxu0 0
      %1477 = vmatprep.subr.bf16.mxu0 0
      %1478 = vmatpush1.bf16.msra.mxu0 0
      %1479 = vmatprep.subr.bf16.mxu0 0
      %1480 = vmatpush1.bf16.msra.mxu0 0
      %1481 = vmatprep.mubr.bf16.mxu0 0
      %1482 = vmatmul.mubr.bf16.gmra.mrb[0].mxu0 %v1447
      %v1483 = vpop.f32.mrb[0].mxu0
      %v1484 = vadd.f32 %v1432, %v1483
      %v1485 = vpop.f32.mrb[0].mxu0
      %v1486 = vpop.f32.mrb[0].mxu0
      %v1487 = vpop.f32.mrb[0].mxu0
      %1488 = vdwg.mxu0
      %v1489 = vmax.f32 %v1484, 0.0
      %v1490 = vpack.c.bf16 %v1489, %v1489
      %v1491 = vld [vmem:[%s730] sm:$0xf]
      %v1492 = vld [vmem:[%s730 + $0x4] sm:$0xf]
      %v1493 = vld [vmem:[%s730 + $0x8] sm:$0xf]
      %v1494 = vld [vmem:[%s730 + $0xc] sm:$0xf]
      %v1495 = vld [vmem:[%s730 + $0x10] sm:$0xf]
      %v1496 = vld [vmem:[%s730 + $0x14] sm:$0xf]
      %v1497 = vld [vmem:[%s730 + $0x18] sm:$0xf]
      %v1498 = vld [vmem:[%s730 + $0x1c] sm:$0xf]
      %v1507 = vunpack.c.l.b16 %v1491
      %v1508 = vunpack.c.l.b16 %v1492
      %v1509 = vunpack.c.l.b16 %v1493
      %v1510 = vunpack.c.l.b16 %v1494
      %v1511 = vunpack.c.l.b16 %v1495
      %v1512 = vunpack.c.l.b16 %v1496
      %v1513 = vunpack.c.l.b16 %v1497
      %v1514 = vunpack.c.l.b16 %v1498
      %v1515 = vpack.c.b16 %v1508, %v1507
      %v1516 = vpack.c.b16 %v1510, %v1509
      %v1517 = vpack.c.b16 %v1512, %v1511
      %v1518 = vpack.c.b16 %v1514, %v1513
      %vm1523 = vcmask 523264
      %v1525 = vsel %vm1523, %v1490, 0
      %1527 = vmatprep.subr.bf16.mxu0 0
      %1528 = vmatpush1.bf16.msra.mxu0 %v1515
      %1529 = vmatprep.subr.bf16.mxu0 0
      %1530 = vmatpush1.bf16.msra.mxu0 %v1516
      %1531 = vmatprep.subr.bf16.mxu0 0
      %1532 = vmatpush1.bf16.msra.mxu0 %v1517
      %1533 = vmatprep.subr.bf16.mxu0 0
      %1534 = vmatpush1.bf16.msra.mxu0 %v1518
      %1535 = vmatprep.subr.bf16.mxu0 0
      %1536 = vmatpush1.bf16.msra.mxu0 0
      %1537 = vmatprep.subr.bf16.mxu0 0
      %1538 = vmatpush1.bf16.msra.mxu0 0
      %1539 = vmatprep.subr.bf16.mxu0 0
      %1540 = vmatpush1.bf16.msra.mxu0 0
      %1541 = vmatprep.subr.bf16.mxu0 0
      %1542 = vmatpush1.bf16.msra.mxu0 0
      %1543 = vmatprep.subr.bf16.mxu0 0
      %1544 = vmatpush1.bf16.msra.mxu0 0
      %1545 = vmatprep.subr.bf16.mxu0 0
      %1546 = vmatpush1.bf16.msra.mxu0 0
      %1547 = vmatprep.subr.bf16.mxu0 0
      %1548 = vmatpush1.bf16.msra.mxu0 0
      %1549 = vmatprep.subr.bf16.mxu0 0
      %1550 = vmatpush1.bf16.msra.mxu0 0
      %1551 = vmatprep.subr.bf16.mxu0 0
      %1552 = vmatpush1.bf16.msra.mxu0 0
      %1553 = vmatprep.subr.bf16.mxu0 0
      %1554 = vmatpush1.bf16.msra.mxu0 0
      %1555 = vmatprep.subr.bf16.mxu0 0
      %1556 = vmatpush1.bf16.msra.mxu0 0
      %1557 = vmatprep.subr.bf16.mxu0 0
      %1558 = vmatpush1.bf16.msra.mxu0 0
      %1559 = vmatprep.mubr.bf16.mxu0 0
      %1560 = vmatmul.mubr.bf16.gmra.mrb[0].mxu0 %v1525
      %v1561 = vpop.f32.mrb[0].mxu0
      %v1562 = vadd.f32 0.0, %v1561
      %v1563 = vpop.f32.mrb[0].mxu0
      %v1564 = vpop.f32.mrb[0].mxu0
      %v1565 = vpop.f32.mrb[0].mxu0
      %1566 = vdwg.mxu0
      %v1567 = vadd.f32 %v1392, %v1562
      %v1568 = vld [vmem:[%s733] sm:$0x1]
      %v1570 = vlaneseq
      %v1571 = vshrl.u32 %v1570, 7
      %v1572 = vsub.s32 0, %v1571
      %v1573 = vrot.slane %v1568, %v1572
      %v1575 = vadd.f32 %v1567, %v1573
      %1576 = vst.msk [vmem:[#allocation2] sm:$0xff] %vm760, %v1575
      %p1577 = scmp.eq.s32.totalorder %s32, 1
      // Predicated region
      $region89: #{_lambda_.2} parent=83 // pred_check
        %p1578 = pneg %p1577
      $region90: #{_lambda_.2} parent=83 // pred_check_branch
        %1580 = sbr.rel (%p1578) target = $region92
      $region91: #{_lambda_.2} parent=83 // pred_region
        %v1581 = vld [vmem:[%s14] sm:$0x1]
        %v1582 = vld [vmem:[%s15] sm:$0x1]
        %v1583 = vsel %vm760, %v1575, 0.0
        %1584 = vadd.xlane.f32.xlu0 %v1583
        %v1585 = vpop.xlane.xlu0 %1584
        %v1586 = vmul.f32 %v1585, %v764
        %v1587 = vsub.f32 %v1575, %v1586
        %v1588 = vmul.f32 %v1587, %v1587
        %v1589 = vsel %vm760, %v1588, 0.0
        %1590 = vadd.xlane.f32.xlu0 %v1589
        %v1591 = vpop.xlane.xlu0 %1590
        %v1592 = vmul.f32 %v1591, %v764
        %v1593 = vadd.f32 %v1592, 1e-05
        %v1594 = vrsqrt.pop %v1593
        %v1595 = vmul.f32 %v1587, %v1594
        %v1597 = vlaneseq
        %v1598 = vshrl.u32 %v1597, 7
        %v1599 = vsub.s32 0, %v1598
        %v1600 = vrot.slane %v1581, %v1599
        %v1602 = vmul.f32 %v1595, %v1600
        %v1604 = vlaneseq
        %v1605 = vshrl.u32 %v1604, 7
        %v1606 = vsub.s32 0, %v1605
        %v1607 = vrot.slane %v1582, %v1606
        %v1609 = vadd.f32 %v1602, %v1607
        %v1610 = vpack.c.bf16 %v1609, %v1609
        %vm1611 = vcmask 257024
        %1612 = vst.msk [vmem:[%s737] sm:$0xf] %vm1611, %v1610
      $region92: #{_lambda_.2} parent=83 // pred_fallthru
        _
      %p1613 = scmp.lt.s32.totalorder %s31, 1
      %s1614 = scalar_select %p1613, %s31, 1
      %s1615 = smul.addr %s1614, 4
      %s1616 = scalar_lea.vmem %s16, %s1615
      // Predicated region
      $region93: #{_lambda_.2} parent=83 // pred_check
        %p1617 = pneg %p463
      $region94: #{_lambda_.2} parent=83 // pred_check_branch
        %1619 = sbr.rel (%p1617) target = $region96
      $region95: #{_lambda_.2} parent=83 // pred_region
        _
      $region96: #{_lambda_.2} parent=83 // pred_fallthru
        _
    $region84: #{_lambda_.2} parent=5 // pred_fallthru
      _
    %p1620 = scmp.le.s32.totalorder 2, %s22
    // Predicated region
    $region97: #{_lambda_.2} parent=5 // pred_check
      %p1621 = pneg %p1620
    $region98: #{_lambda_.2} parent=5 // pred_check_branch
      %1623 = sbr.rel (%p1621) target = $region100
    $region99: #{_lambda_.2} parent=5 // pred_region
      %s1624 = ssub.s32 %s22, 2
      // Predicated region
      $region101: #{_lambda_.2} parent=99 // pred_check
        %p1625 = pneg %p469
      $region102: #{_lambda_.2} parent=99 // pred_check_branch
        %1627 = sbr.rel (%p1625) target = $region104
      $region103: #{_lambda_.2} parent=99 // pred_region
        %p1628 = scmp.lt.s32.totalorder %s33, 1
        %s1629 = scalar_select %p1628, %s33, 1
        %s1630 = smul.addr %s1629, 4
        %s1631 = scalar_lea.vmem %s16, %s1630
      $region104: #{_lambda_.2} parent=99 // pred_fallthru
        _
    $region100: #{_lambda_.2} parent=5 // pred_fallthru
      _
  $region6: #{_lambda_.2} parent=0 // loop_footer
    %s26 = sadd.s32 1, %s22
  $region7: #{_lambda_.2} parent=0 // loop_footer_branch
    %21 = sbr.rel target = $region3
  $region8: #{_lambda_.2} parent=0 // loop_exit
    _

// kernel: _lambda_.3
$region0: #{_lambda_.3}
  #allocation0 [shape = 'u32[]', space=smem, size = 0x4, offset = 0x4, fixed_abs, tag = 'smem constant byte address 0x4 - core index']
  #allocation1 [shape = 'u32[144,128]{1,0:T(1,128)}', space=vmem, size = 0x12000, scoped, tag = 'internal scratch']
  #allocation2 [shape = 'f32[8,32]{1,0:T(8,128)}', space=vmem, size = 0x1000, scoped, tag = 'scratch operand']
  #allocation3 [shape = 'f32[32,8]{1,0:T(8,128)}', space=vmem, size = 0x4000, scoped, tag = 'scratch operand']
  #allocation4 [shape = 'f32[32,8]{1,0:T(8,128)}', space=vmem, size = 0x4000, scoped, tag = 'scratch operand']
  %s0 = inlined_call_operand.vmem [shape: f32[2,8,32], index: 0, kind: input, shape index: {}]
  %s1 = inlined_call_operand.vmem [shape: bf16[2,8,32], index: 1, kind: input, shape index: {}]
  %s2 = inlined_call_operand.vmem [shape: bf16[2,8,8], index: 2, kind: input, shape index: {}]
  %s3 = inlined_call_operand.vmem [shape: bf16[2,1,8], index: 3, kind: input, shape index: {}]
  %s4 = inlined_call_operand.vmem [shape: f32[2,1,32], index: 4, kind: input, shape index: {}, may-alias: {4,10,18}]
  %s5 = inlined_call_operand.vmem [shape: f32[2,1,32], index: 5, kind: input, shape index: {}, may-alias: {5,9,11,13,17,19,23}]
  %s6 = inlined_call_operand.vmem [shape: bf16[2,32,96], index: 6, kind: input, shape index: {}]
  %s7 = inlined_call_operand.vmem [shape: f32[2,1,96], index: 7, kind: input, shape index: {}]
  %s8 = inlined_call_operand.vmem [shape: bf16[2,32,32], index: 8, kind: input, shape index: {}]
  %s9 = inlined_call_operand.vmem [shape: f32[2,1,32], index: 9, kind: input, shape index: {}, may-alias: {5,9,11,13,17,19,23}]
  %s10 = inlined_call_operand.vmem [shape: f32[2,1,32], index: 10, kind: input, shape index: {}, may-alias: {4,10,18}]
  %s11 = inlined_call_operand.vmem [shape: f32[2,1,32], index: 11, kind: input, shape index: {}, may-alias: {5,9,11,13,17,19,23}]
  %s12 = inlined_call_operand.vmem [shape: bf16[2,32,32], index: 12, kind: input, shape index: {}]
  %s13 = inlined_call_operand.vmem [shape: f32[2,1,32], index: 13, kind: input, shape index: {}, may-alias: {5,9,11,13,17,19,23}]
  %s14 = inlined_call_operand.vmem [shape: bf16[2,32,64], index: 14, kind: input, shape index: {}]
  %s15 = inlined_call_operand.vmem [shape: f32[2,1,64], index: 15, kind: input, shape index: {}, may-alias: {15,21}]
  %s16 = inlined_call_operand.vmem [shape: bf16[2,32,32], index: 16, kind: input, shape index: {}]
  %s17 = inlined_call_operand.vmem [shape: f32[2,1,32], index: 17, kind: input, shape index: {}, may-alias: {5,9,11,13,17,19,23}]
  %s18 = inlined_call_operand.vmem [shape: f32[2,1,32], index: 18, kind: input, shape index: {}, may-alias: {4,10,18}]
  %s19 = inlined_call_operand.vmem [shape: f32[2,1,32], index: 19, kind: input, shape index: {}, may-alias: {5,9,11,13,17,19,23}]
  %s20 = inlined_call_operand.vmem [shape: bf16[2,32,64], index: 20, kind: input, shape index: {}]
  %s21 = inlined_call_operand.vmem [shape: f32[2,1,64], index: 21, kind: input, shape index: {}, may-alias: {15,21}]
  %s22 = inlined_call_operand.vmem [shape: bf16[2,64,32], index: 22, kind: input, shape index: {}]
  %s23 = inlined_call_operand.vmem [shape: f32[2,1,32], index: 23, kind: input, shape index: {}, may-alias: {5,9,11,13,17,19,23}]
  %s24 = inlined_call_operand.vmem [shape: f32[1,32], index: 24, kind: input, shape index: {}]
  %s25 = inlined_call_operand.vmem [shape: f32[1,32], index: 25, kind: input, shape index: {}]
  %s26 = inlined_call_operand.vmem [shape: bf16[32,128], index: 26, kind: input, shape index: {}]
  %s27 = inlined_call_operand.vmem [shape: f32[1,128], index: 27, kind: input, shape index: {}]
  %s28 = inlined_call_operand.vmem [shape: f32[2,8,128], index: 28, kind: output, shape index: {}]
  %s29 = sld [smem:[#allocation0]]
  $region153: #{_lambda_.3} parent=0
    _
  %s31 = ssub.s32 1, %s29
  %s32 = scalar_select 0, %s31, %s29
  loop: start=0, step=1, limit=6
  $region2: #{_lambda_.3} parent=0 // loop_pre_header
    _
  $region3: #{_lambda_.3} parent=0 // loop_header
    %s34 = sphi 0, %s38
    %p35 = scmp.ge.s32.totalorder %s34, 6
    %s41 = sphi 0, %s53
    %s42 = sphi 0, %s49
    %s43 = sphi 0, %s41
    %s44 = sphi 0, %s42
    %s45 = sphi 0, %s43
    %s46 = sphi 0, %s44
    %s56 = sphi 0, %s58
    %s59 = sphi 0, %s56
    %s60 = sphi 0, %s59
    %s76 = sphi 0, %s60
    %s82 = sphi 0, %s84
    %s85 = sphi 0, %s82
    %s86 = sphi 0, %s85
    %s102 = sphi 0, %s86
    %s108 = sphi 0, %s110
    %s111 = sphi 0, %s108
    %s112 = sphi 0, %s111
    %s128 = sphi 0, %s112
    %s134 = sphi 0, %s136
    %s137 = sphi 0, %s134
    %s138 = sphi 0, %s137
    %s154 = sphi 0, %s138
    %s160 = sphi 0, %s162
    %s163 = sphi 0, %s160
    %s164 = sphi 0, %s163
    %s180 = sphi 0, %s164
    %s186 = sphi 0, %s188
    %s189 = sphi 0, %s186
    %s190 = sphi 0, %s189
    %s206 = sphi 0, %s190
    %s212 = sphi 0, %s214
    %s215 = sphi 0, %s212
    %s216 = sphi 0, %s215
    %s232 = sphi 0, %s216
    %s238 = sphi 0, %s240
    %s241 = sphi 0, %s238
    %s242 = sphi 0, %s241
    %s258 = sphi 0, %s242
    %s264 = sphi 0, %s266
    %s267 = sphi 0, %s264
    %s268 = sphi 0, %s267
    %s284 = sphi 0, %s268
    %s290 = sphi 0, %s292
    %s293 = sphi 0, %s290
    %s294 = sphi 0, %s293
    %s310 = sphi 0, %s294
    %s316 = sphi 0, %s318
    %s319 = sphi 0, %s316
    %s320 = sphi 0, %s319
    %s336 = sphi 0, %s320
    %s342 = sphi 0, %s344
    %s345 = sphi 0, %s342
    %s346 = sphi 0, %s345
    %s362 = sphi 0, %s346
    %s368 = sphi 0, %s370
    %s371 = sphi 0, %s368
    %s372 = sphi 0, %s371
    %s388 = sphi 0, %s372
    %s394 = sphi 0, %s396
    %s397 = sphi 0, %s394
    %s398 = sphi 0, %s397
    %s414 = sphi 0, %s398
    %s420 = sphi 0, %s422
    %s423 = sphi 0, %s420
    %s424 = sphi 0, %s423
    %s440 = sphi 0, %s424
    %s446 = sphi 0, %s448
    %s449 = sphi 0, %s446
    %s450 = sphi 0, %s449
    %s466 = sphi 0, %s450
    %s472 = sphi 0, %s474
    %s475 = sphi 0, %s472
    %s476 = sphi 0, %s475
    %s492 = sphi 0, %s476
    %s498 = sphi 0, %s500
    %s501 = sphi 0, %s498
    %s502 = sphi 0, %s501
    %s518 = sphi 0, %s502
    %s524 = sphi 0, %s526
    %s527 = sphi 0, %s524
    %s528 = sphi 0, %s527
    %s544 = sphi 0, %s528
    %s550 = sphi 0, %s552
    %s553 = sphi 0, %s550
    %s554 = sphi 0, %s553
    %s570 = sphi 0, %s554
    %s576 = sphi 0, %s578
    %s579 = sphi 0, %s576
    %s580 = sphi 0, %s579
    %s596 = sphi 0, %s580
    %s602 = sphi 0, %s604
    %s605 = sphi 0, %s602
    %s606 = sphi 0, %s605
    %s622 = sphi 0, %s606
    %s628 = sphi 0, %s630
    %s631 = sphi 0, %s628
    %s632 = sphi 0, %s631
    %s648 = sphi 0, %s632
    %s654 = sphi 0, %s656
    %s657 = sphi 0, %s654
    %s658 = sphi 0, %s657
    %s674 = sphi 0, %s658
    %s678 = sphi 0, %s678
    %s680 = sphi 0, %s678
    %s681 = sphi 0, %s680
    %s695 = sphi 0, %s681
    %s699 = sphi 0, %s699
    %s701 = sphi 0, %s699
    %s702 = sphi 0, %s701
    %s716 = sphi 0, %s702
    %s720 = sphi 0, %s720
    %s722 = sphi 0, %s720
    %s723 = sphi 0, %s722
    %s737 = sphi 0, %s723
    %s741 = sphi 0, %s741
    %s743 = sphi 0, %s741
    %s744 = sphi 0, %s743
    %s758 = sphi 0, %s744
    %s764 = sphi 0, %s766
    %s767 = sphi 0, %s764
    %s768 = sphi 0, %s767
    %s784 = sphi 0, %s768
  $region4: #{_lambda_.3} parent=0 // loop_header_branch
    %37 = sbr.rel (%p35) target = $region8
  $region5: #{_lambda_.3} parent=0 // loop_body
    %s39 = ssub.s32 %s34, 1
    %s40 = ssub.s32 %s34, 2
    %s47 = sadd.s32 1, %s42
    %p48 = scmp.ge.s32.totalorder %s47, 2
    %s49 = scalar_select %p48, 0, %s47
    %s50 = sadd.s32 1, %s41
    %s51 = scalar_select %p48, %s50, %s41
    %p52 = scmp.ge.s32.totalorder %s51, 2
    %s53 = scalar_select %p52, 0, %s51
    %s54 = ssub.s32 %s41, %s53
    %p55 = scmp.eq.s32.totalorder %s54, 0
    %s57 = sadd.s32 %s56, 1
    %s58 = scalar_select %p55, %s56, %s57
    %p61 = pneg %p55
    %p62 = scmp.eq.s32.totalorder %s34, 3
    %p63 = por %p61, %p62
    %p64 = scmp.ne.s32.totalorder %s56, %s59
    %p65 = scmp.eq.s32.totalorder %s34, 0
    %p66 = por %p64, %p65
    %p67 = scmp.ne.s32.totalorder %s56, %s59
    %p68 = scmp.eq.s32.totalorder %s39, 3
    %p69 = por %p67, %p68
    %p70 = scmp.ne.s32.totalorder %s59, %s60
    %p71 = scmp.eq.s32.totalorder %s39, 0
    %p72 = por %p70, %p71
    %p73 = scmp.ne.s32.totalorder %s59, %s60
    %p74 = scmp.eq.s32.totalorder %s40, 3
    %p75 = por %p73, %p74
    %p77 = scmp.ne.s32.totalorder %s60, %s76
    %p78 = scmp.eq.s32.totalorder %s40, 0
    %p79 = por %p77, %p78
    %s80 = ssub.s32 %s41, %s53
    %p81 = scmp.eq.s32.totalorder %s80, 0
    %s83 = sadd.s32 %s82, 1
    %s84 = scalar_select %p81, %s82, %s83
    %p87 = pneg %p81
    %p88 = scmp.eq.s32.totalorder %s34, 3
    %p89 = por %p87, %p88
    %p90 = scmp.ne.s32.totalorder %s82, %s85
    %p91 = scmp.eq.s32.totalorder %s34, 0
    %p92 = por %p90, %p91
    %p93 = scmp.ne.s32.totalorder %s82, %s85
    %p94 = scmp.eq.s32.totalorder %s39, 3
    %p95 = por %p93, %p94
    %p96 = scmp.ne.s32.totalorder %s85, %s86
    %p97 = scmp.eq.s32.totalorder %s39, 0
    %p98 = por %p96, %p97
    %p99 = scmp.ne.s32.totalorder %s85, %s86
    %p100 = scmp.eq.s32.totalorder %s40, 3
    %p101 = por %p99, %p100
    %p103 = scmp.ne.s32.totalorder %s86, %s102
    %p104 = scmp.eq.s32.totalorder %s40, 0
    %p105 = por %p103, %p104
    %s106 = ssub.s32 %s41, %s53
    %p107 = scmp.eq.s32.totalorder %s106, 0
    %s109 = sadd.s32 %s108, 1
    %s110 = scalar_select %p107, %s108, %s109
    %p113 = pneg %p107
    %p114 = scmp.eq.s32.totalorder %s34, 3
    %p115 = por %p113, %p114
    %p116 = scmp.ne.s32.totalorder %s108, %s111
    %p117 = scmp.eq.s32.totalorder %s34, 0
    %p118 = por %p116, %p117
    %p119 = scmp.ne.s32.totalorder %s108, %s111
    %p120 = scmp.eq.s32.totalorder %s39, 3
    %p121 = por %p119, %p120
    %p122 = scmp.ne.s32.totalorder %s111, %s112
    %p123 = scmp.eq.s32.totalorder %s39, 0
    %p124 = por %p122, %p123
    %p125 = scmp.ne.s32.totalorder %s111, %s112
    %p126 = scmp.eq.s32.totalorder %s40, 3
    %p127 = por %p125, %p126
    %p129 = scmp.ne.s32.totalorder %s112, %s128
    %p130 = scmp.eq.s32.totalorder %s40, 0
    %p131 = por %p129, %p130
    %s132 = ssub.s32 %s41, %s53
    %p133 = scmp.eq.s32.totalorder %s132, 0
    %s135 = sadd.s32 %s134, 1
    %s136 = scalar_select %p133, %s134, %s135
    %p139 = pneg %p133
    %p140 = scmp.eq.s32.totalorder %s34, 3
    %p141 = por %p139, %p140
    %p142 = scmp.ne.s32.totalorder %s134, %s137
    %p143 = scmp.eq.s32.totalorder %s34, 0
    %p144 = por %p142, %p143
    %p145 = scmp.ne.s32.totalorder %s134, %s137
    %p146 = scmp.eq.s32.totalorder %s39, 3
    %p147 = por %p145, %p146
    %p148 = scmp.ne.s32.totalorder %s137, %s138
    %p149 = scmp.eq.s32.totalorder %s39, 0
    %p150 = por %p148, %p149
    %p151 = scmp.ne.s32.totalorder %s137, %s138
    %p152 = scmp.eq.s32.totalorder %s40, 3
    %p153 = por %p151, %p152
    %p155 = scmp.ne.s32.totalorder %s138, %s154
    %p156 = scmp.eq.s32.totalorder %s40, 0
    %p157 = por %p155, %p156
    %s158 = ssub.s32 %s42, %s49
    %p159 = scmp.eq.s32.totalorder %s158, 0
    %s161 = sadd.s32 %s160, 1
    %s162 = scalar_select %p159, %s160, %s161
    %p165 = pneg %p159
    %p166 = scmp.eq.s32.totalorder %s34, 3
    %p167 = por %p165, %p166
    %p168 = scmp.ne.s32.totalorder %s160, %s163
    %p169 = scmp.eq.s32.totalorder %s34, 0
    %p170 = por %p168, %p169
    %p171 = scmp.ne.s32.totalorder %s160, %s163
    %p172 = scmp.eq.s32.totalorder %s39, 3
    %p173 = por %p171, %p172
    %p174 = scmp.ne.s32.totalorder %s163, %s164
    %p175 = scmp.eq.s32.totalorder %s39, 0
    %p176 = por %p174, %p175
    %p177 = scmp.ne.s32.totalorder %s163, %s164
    %p178 = scmp.eq.s32.totalorder %s40, 3
    %p179 = por %p177, %p178
    %p181 = scmp.ne.s32.totalorder %s164, %s180
    %p182 = scmp.eq.s32.totalorder %s40, 0
    %p183 = por %p181, %p182
    %s184 = ssub.s32 %s42, %s49
    %p185 = scmp.eq.s32.totalorder %s184, 0
    %s187 = sadd.s32 %s186, 1
    %s188 = scalar_select %p185, %s186, %s187
    %p191 = pneg %p185
    %p192 = scmp.eq.s32.totalorder %s34, 3
    %p193 = por %p191, %p192
    %p194 = scmp.ne.s32.totalorder %s186, %s189
    %p195 = scmp.eq.s32.totalorder %s34, 0
    %p196 = por %p194, %p195
    %p197 = scmp.ne.s32.totalorder %s186, %s189
    %p198 = scmp.eq.s32.totalorder %s39, 3
    %p199 = por %p197, %p198
    %p200 = scmp.ne.s32.totalorder %s189, %s190
    %p201 = scmp.eq.s32.totalorder %s39, 0
    %p202 = por %p200, %p201
    %p203 = scmp.ne.s32.totalorder %s189, %s190
    %p204 = scmp.eq.s32.totalorder %s40, 3
    %p205 = por %p203, %p204
    %p207 = scmp.ne.s32.totalorder %s190, %s206
    %p208 = scmp.eq.s32.totalorder %s40, 0
    %p209 = por %p207, %p208
    %s210 = ssub.s32 %s42, %s49
    %p211 = scmp.eq.s32.totalorder %s210, 0
    %s213 = sadd.s32 %s212, 1
    %s214 = scalar_select %p211, %s212, %s213
    %p217 = pneg %p211
    %p218 = scmp.eq.s32.totalorder %s34, 3
    %p219 = por %p217, %p218
    %p220 = scmp.ne.s32.totalorder %s212, %s215
    %p221 = scmp.eq.s32.totalorder %s34, 0
    %p222 = por %p220, %p221
    %p223 = scmp.ne.s32.totalorder %s212, %s215
    %p224 = scmp.eq.s32.totalorder %s39, 3
    %p225 = por %p223, %p224
    %p226 = scmp.ne.s32.totalorder %s215, %s216
    %p227 = scmp.eq.s32.totalorder %s39, 0
    %p228 = por %p226, %p227
    %p229 = scmp.ne.s32.totalorder %s215, %s216
    %p230 = scmp.eq.s32.totalorder %s40, 3
    %p231 = por %p229, %p230
    %p233 = scmp.ne.s32.totalorder %s216, %s232
    %p234 = scmp.eq.s32.totalorder %s40, 0
    %p235 = por %p233, %p234
    %s236 = ssub.s32 %s42, %s49
    %p237 = scmp.eq.s32.totalorder %s236, 0
    %s239 = sadd.s32 %s238, 1
    %s240 = scalar_select %p237, %s238, %s239
    %p243 = pneg %p237
    %p244 = scmp.eq.s32.totalorder %s34, 3
    %p245 = por %p243, %p244
    %p246 = scmp.ne.s32.totalorder %s238, %s241
    %p247 = scmp.eq.s32.totalorder %s34, 0
    %p248 = por %p246, %p247
    %p249 = scmp.ne.s32.totalorder %s238, %s241
    %p250 = scmp.eq.s32.totalorder %s39, 3
    %p251 = por %p249, %p250
    %p252 = scmp.ne.s32.totalorder %s241, %s242
    %p253 = scmp.eq.s32.totalorder %s39, 0
    %p254 = por %p252, %p253
    %p255 = scmp.ne.s32.totalorder %s241, %s242
    %p256 = scmp.eq.s32.totalorder %s40, 3
    %p257 = por %p255, %p256
    %p259 = scmp.ne.s32.totalorder %s242, %s258
    %p260 = scmp.eq.s32.totalorder %s40, 0
    %p261 = por %p259, %p260
    %s262 = ssub.s32 %s42, %s49
    %p263 = scmp.eq.s32.totalorder %s262, 0
    %s265 = sadd.s32 %s264, 1
    %s266 = scalar_select %p263, %s264, %s265
    %p269 = pneg %p263
    %p270 = scmp.eq.s32.totalorder %s34, 3
    %p271 = por %p269, %p270
    %p272 = scmp.ne.s32.totalorder %s264, %s267
    %p273 = scmp.eq.s32.totalorder %s34, 0
    %p274 = por %p272, %p273
    %p275 = scmp.ne.s32.totalorder %s264, %s267
    %p276 = scmp.eq.s32.totalorder %s39, 3
    %p277 = por %p275, %p276
    %p278 = scmp.ne.s32.totalorder %s267, %s268
    %p279 = scmp.eq.s32.totalorder %s39, 0
    %p280 = por %p278, %p279
    %p281 = scmp.ne.s32.totalorder %s267, %s268
    %p282 = scmp.eq.s32.totalorder %s40, 3
    %p283 = por %p281, %p282
    %p285 = scmp.ne.s32.totalorder %s268, %s284
    %p286 = scmp.eq.s32.totalorder %s40, 0
    %p287 = por %p285, %p286
    %s288 = ssub.s32 %s42, %s49
    %p289 = scmp.eq.s32.totalorder %s288, 0
    %s291 = sadd.s32 %s290, 1
    %s292 = scalar_select %p289, %s290, %s291
    %p295 = pneg %p289
    %p296 = scmp.eq.s32.totalorder %s34, 3
    %p297 = por %p295, %p296
    %p298 = scmp.ne.s32.totalorder %s290, %s293
    %p299 = scmp.eq.s32.totalorder %s34, 0
    %p300 = por %p298, %p299
    %p301 = scmp.ne.s32.totalorder %s290, %s293
    %p302 = scmp.eq.s32.totalorder %s39, 3
    %p303 = por %p301, %p302
    %p304 = scmp.ne.s32.totalorder %s293, %s294
    %p305 = scmp.eq.s32.totalorder %s39, 0
    %p306 = por %p304, %p305
    %p307 = scmp.ne.s32.totalorder %s293, %s294
    %p308 = scmp.eq.s32.totalorder %s40, 3
    %p309 = por %p307, %p308
    %p311 = scmp.ne.s32.totalorder %s294, %s310
    %p312 = scmp.eq.s32.totalorder %s40, 0
    %p313 = por %p311, %p312
    %s314 = ssub.s32 %s42, %s49
    %p315 = scmp.eq.s32.totalorder %s314, 0
    %s317 = sadd.s32 %s316, 1
    %s318 = scalar_select %p315, %s316, %s317
    %p321 = pneg %p315
    %p322 = scmp.eq.s32.totalorder %s34, 3
    %p323 = por %p321, %p322
    %p324 = scmp.ne.s32.totalorder %s316, %s319
    %p325 = scmp.eq.s32.totalorder %s34, 0
    %p326 = por %p324, %p325
    %p327 = scmp.ne.s32.totalorder %s316, %s319
    %p328 = scmp.eq.s32.totalorder %s39, 3
    %p329 = por %p327, %p328
    %p330 = scmp.ne.s32.totalorder %s319, %s320
    %p331 = scmp.eq.s32.totalorder %s39, 0
    %p332 = por %p330, %p331
    %p333 = scmp.ne.s32.totalorder %s319, %s320
    %p334 = scmp.eq.s32.totalorder %s40, 3
    %p335 = por %p333, %p334
    %p337 = scmp.ne.s32.totalorder %s320, %s336
    %p338 = scmp.eq.s32.totalorder %s40, 0
    %p339 = por %p337, %p338
    %s340 = ssub.s32 %s42, %s49
    %p341 = scmp.eq.s32.totalorder %s340, 0
    %s343 = sadd.s32 %s342, 1
    %s344 = scalar_select %p341, %s342, %s343
    %p347 = pneg %p341
    %p348 = scmp.eq.s32.totalorder %s34, 3
    %p349 = por %p347, %p348
    %p350 = scmp.ne.s32.totalorder %s342, %s345
    %p351 = scmp.eq.s32.totalorder %s34, 0
    %p352 = por %p350, %p351
    %p353 = scmp.ne.s32.totalorder %s342, %s345
    %p354 = scmp.eq.s32.totalorder %s39, 3
    %p355 = por %p353, %p354
    %p356 = scmp.ne.s32.totalorder %s345, %s346
    %p357 = scmp.eq.s32.totalorder %s39, 0
    %p358 = por %p356, %p357
    %p359 = scmp.ne.s32.totalorder %s345, %s346
    %p360 = scmp.eq.s32.totalorder %s40, 3
    %p361 = por %p359, %p360
    %p363 = scmp.ne.s32.totalorder %s346, %s362
    %p364 = scmp.eq.s32.totalorder %s40, 0
    %p365 = por %p363, %p364
    %s366 = ssub.s32 %s42, %s49
    %p367 = scmp.eq.s32.totalorder %s366, 0
    %s369 = sadd.s32 %s368, 1
    %s370 = scalar_select %p367, %s368, %s369
    %p373 = pneg %p367
    %p374 = scmp.eq.s32.totalorder %s34, 3
    %p375 = por %p373, %p374
    %p376 = scmp.ne.s32.totalorder %s368, %s371
    %p377 = scmp.eq.s32.totalorder %s34, 0
    %p378 = por %p376, %p377
    %p379 = scmp.ne.s32.totalorder %s368, %s371
    %p380 = scmp.eq.s32.totalorder %s39, 3
    %p381 = por %p379, %p380
    %p382 = scmp.ne.s32.totalorder %s371, %s372
    %p383 = scmp.eq.s32.totalorder %s39, 0
    %p384 = por %p382, %p383
    %p385 = scmp.ne.s32.totalorder %s371, %s372
    %p386 = scmp.eq.s32.totalorder %s40, 3
    %p387 = por %p385, %p386
    %p389 = scmp.ne.s32.totalorder %s372, %s388
    %p390 = scmp.eq.s32.totalorder %s40, 0
    %p391 = por %p389, %p390
    %s392 = ssub.s32 %s42, %s49
    %p393 = scmp.eq.s32.totalorder %s392, 0
    %s395 = sadd.s32 %s394, 1
    %s396 = scalar_select %p393, %s394, %s395
    %p399 = pneg %p393
    %p400 = scmp.eq.s32.totalorder %s34, 3
    %p401 = por %p399, %p400
    %p402 = scmp.ne.s32.totalorder %s394, %s397
    %p403 = scmp.eq.s32.totalorder %s34, 0
    %p404 = por %p402, %p403
    %p405 = scmp.ne.s32.totalorder %s394, %s397
    %p406 = scmp.eq.s32.totalorder %s39, 3
    %p407 = por %p405, %p406
    %p408 = scmp.ne.s32.totalorder %s397, %s398
    %p409 = scmp.eq.s32.totalorder %s39, 0
    %p410 = por %p408, %p409
    %p411 = scmp.ne.s32.totalorder %s397, %s398
    %p412 = scmp.eq.s32.totalorder %s40, 3
    %p413 = por %p411, %p412
    %p415 = scmp.ne.s32.totalorder %s398, %s414
    %p416 = scmp.eq.s32.totalorder %s40, 0
    %p417 = por %p415, %p416
    %s418 = ssub.s32 %s42, %s49
    %p419 = scmp.eq.s32.totalorder %s418, 0
    %s421 = sadd.s32 %s420, 1
    %s422 = scalar_select %p419, %s420, %s421
    %p425 = pneg %p419
    %p426 = scmp.eq.s32.totalorder %s34, 3
    %p427 = por %p425, %p426
    %p428 = scmp.ne.s32.totalorder %s420, %s423
    %p429 = scmp.eq.s32.totalorder %s34, 0
    %p430 = por %p428, %p429
    %p431 = scmp.ne.s32.totalorder %s420, %s423
    %p432 = scmp.eq.s32.totalorder %s39, 3
    %p433 = por %p431, %p432
    %p434 = scmp.ne.s32.totalorder %s423, %s424
    %p435 = scmp.eq.s32.totalorder %s39, 0
    %p436 = por %p434, %p435
    %p437 = scmp.ne.s32.totalorder %s423, %s424
    %p438 = scmp.eq.s32.totalorder %s40, 3
    %p439 = por %p437, %p438
    %p441 = scmp.ne.s32.totalorder %s424, %s440
    %p442 = scmp.eq.s32.totalorder %s40, 0
    %p443 = por %p441, %p442
    %s444 = ssub.s32 %s42, %s49
    %p445 = scmp.eq.s32.totalorder %s444, 0
    %s447 = sadd.s32 %s446, 1
    %s448 = scalar_select %p445, %s446, %s447
    %p451 = pneg %p445
    %p452 = scmp.eq.s32.totalorder %s34, 3
    %p453 = por %p451, %p452
    %p454 = scmp.ne.s32.totalorder %s446, %s449
    %p455 = scmp.eq.s32.totalorder %s34, 0
    %p456 = por %p454, %p455
    %p457 = scmp.ne.s32.totalorder %s446, %s449
    %p458 = scmp.eq.s32.totalorder %s39, 3
    %p459 = por %p457, %p458
    %p460 = scmp.ne.s32.totalorder %s449, %s450
    %p461 = scmp.eq.s32.totalorder %s39, 0
    %p462 = por %p460, %p461
    %p463 = scmp.ne.s32.totalorder %s449, %s450
    %p464 = scmp.eq.s32.totalorder %s40, 3
    %p465 = por %p463, %p464
    %p467 = scmp.ne.s32.totalorder %s450, %s466
    %p468 = scmp.eq.s32.totalorder %s40, 0
    %p469 = por %p467, %p468
    %s470 = ssub.s32 %s42, %s49
    %p471 = scmp.eq.s32.totalorder %s470, 0
    %s473 = sadd.s32 %s472, 1
    %s474 = scalar_select %p471, %s472, %s473
    %p477 = pneg %p471
    %p478 = scmp.eq.s32.totalorder %s34, 3
    %p479 = por %p477, %p478
    %p480 = scmp.ne.s32.totalorder %s472, %s475
    %p481 = scmp.eq.s32.totalorder %s34, 0
    %p482 = por %p480, %p481
    %p483 = scmp.ne.s32.totalorder %s472, %s475
    %p484 = scmp.eq.s32.totalorder %s39, 3
    %p485 = por %p483, %p484
    %p486 = scmp.ne.s32.totalorder %s475, %s476
    %p487 = scmp.eq.s32.totalorder %s39, 0
    %p488 = por %p486, %p487
    %p489 = scmp.ne.s32.totalorder %s475, %s476
    %p490 = scmp.eq.s32.totalorder %s40, 3
    %p491 = por %p489, %p490
    %p493 = scmp.ne.s32.totalorder %s476, %s492
    %p494 = scmp.eq.s32.totalorder %s40, 0
    %p495 = por %p493, %p494
    %s496 = ssub.s32 %s42, %s49
    %p497 = scmp.eq.s32.totalorder %s496, 0
    %s499 = sadd.s32 %s498, 1
    %s500 = scalar_select %p497, %s498, %s499
    %p503 = pneg %p497
    %p504 = scmp.eq.s32.totalorder %s34, 3
    %p505 = por %p503, %p504
    %p506 = scmp.ne.s32.totalorder %s498, %s501
    %p507 = scmp.eq.s32.totalorder %s34, 0
    %p508 = por %p506, %p507
    %p509 = scmp.ne.s32.totalorder %s498, %s501
    %p510 = scmp.eq.s32.totalorder %s39, 3
    %p511 = por %p509, %p510
    %p512 = scmp.ne.s32.totalorder %s501, %s502
    %p513 = scmp.eq.s32.totalorder %s39, 0
    %p514 = por %p512, %p513
    %p515 = scmp.ne.s32.totalorder %s501, %s502
    %p516 = scmp.eq.s32.totalorder %s40, 3
    %p517 = por %p515, %p516
    %p519 = scmp.ne.s32.totalorder %s502, %s518
    %p520 = scmp.eq.s32.totalorder %s40, 0
    %p521 = por %p519, %p520
    %s522 = ssub.s32 %s42, %s49
    %p523 = scmp.eq.s32.totalorder %s522, 0
    %s525 = sadd.s32 %s524, 1
    %s526 = scalar_select %p523, %s524, %s525
    %p529 = pneg %p523
    %p530 = scmp.eq.s32.totalorder %s34, 3
    %p531 = por %p529, %p530
    %p532 = scmp.ne.s32.totalorder %s524, %s527
    %p533 = scmp.eq.s32.totalorder %s34, 0
    %p534 = por %p532, %p533
    %p535 = scmp.ne.s32.totalorder %s524, %s527
    %p536 = scmp.eq.s32.totalorder %s39, 3
    %p537 = por %p535, %p536
    %p538 = scmp.ne.s32.totalorder %s527, %s528
    %p539 = scmp.eq.s32.totalorder %s39, 0
    %p540 = por %p538, %p539
    %p541 = scmp.ne.s32.totalorder %s527, %s528
    %p542 = scmp.eq.s32.totalorder %s40, 3
    %p543 = por %p541, %p542
    %p545 = scmp.ne.s32.totalorder %s528, %s544
    %p546 = scmp.eq.s32.totalorder %s40, 0
    %p547 = por %p545, %p546
    %s548 = ssub.s32 %s42, %s49
    %p549 = scmp.eq.s32.totalorder %s548, 0
    %s551 = sadd.s32 %s550, 1
    %s552 = scalar_select %p549, %s550, %s551
    %p555 = pneg %p549
    %p556 = scmp.eq.s32.totalorder %s34, 3
    %p557 = por %p555, %p556
    %p558 = scmp.ne.s32.totalorder %s550, %s553
    %p559 = scmp.eq.s32.totalorder %s34, 0
    %p560 = por %p558, %p559
    %p561 = scmp.ne.s32.totalorder %s550, %s553
    %p562 = scmp.eq.s32.totalorder %s39, 3
    %p563 = por %p561, %p562
    %p564 = scmp.ne.s32.totalorder %s553, %s554
    %p565 = scmp.eq.s32.totalorder %s39, 0
    %p566 = por %p564, %p565
    %p567 = scmp.ne.s32.totalorder %s553, %s554
    %p568 = scmp.eq.s32.totalorder %s40, 3
    %p569 = por %p567, %p568
    %p571 = scmp.ne.s32.totalorder %s554, %s570
    %p572 = scmp.eq.s32.totalorder %s40, 0
    %p573 = por %p571, %p572
    %s574 = ssub.s32 %s42, %s49
    %p575 = scmp.eq.s32.totalorder %s574, 0
    %s577 = sadd.s32 %s576, 1
    %s578 = scalar_select %p575, %s576, %s577
    %p581 = pneg %p575
    %p582 = scmp.eq.s32.totalorder %s34, 3
    %p583 = por %p581, %p582
    %p584 = scmp.ne.s32.totalorder %s576, %s579
    %p585 = scmp.eq.s32.totalorder %s34, 0
    %p586 = por %p584, %p585
    %p587 = scmp.ne.s32.totalorder %s576, %s579
    %p588 = scmp.eq.s32.totalorder %s39, 3
    %p589 = por %p587, %p588
    %p590 = scmp.ne.s32.totalorder %s579, %s580
    %p591 = scmp.eq.s32.totalorder %s39, 0
    %p592 = por %p590, %p591
    %p593 = scmp.ne.s32.totalorder %s579, %s580
    %p594 = scmp.eq.s32.totalorder %s40, 3
    %p595 = por %p593, %p594
    %p597 = scmp.ne.s32.totalorder %s580, %s596
    %p598 = scmp.eq.s32.totalorder %s40, 0
    %p599 = por %p597, %p598
    %s600 = ssub.s32 %s42, %s49
    %p601 = scmp.eq.s32.totalorder %s600, 0
    %s603 = sadd.s32 %s602, 1
    %s604 = scalar_select %p601, %s602, %s603
    %p607 = pneg %p601
    %p608 = scmp.eq.s32.totalorder %s34, 3
    %p609 = por %p607, %p608
    %p610 = scmp.ne.s32.totalorder %s602, %s605
    %p611 = scmp.eq.s32.totalorder %s34, 0
    %p612 = por %p610, %p611
    %p613 = scmp.ne.s32.totalorder %s602, %s605
    %p614 = scmp.eq.s32.totalorder %s39, 3
    %p615 = por %p613, %p614
    %p616 = scmp.ne.s32.totalorder %s605, %s606
    %p617 = scmp.eq.s32.totalorder %s39, 0
    %p618 = por %p616, %p617
    %p619 = scmp.ne.s32.totalorder %s605, %s606
    %p620 = scmp.eq.s32.totalorder %s40, 3
    %p621 = por %p619, %p620
    %p623 = scmp.ne.s32.totalorder %s606, %s622
    %p624 = scmp.eq.s32.totalorder %s40, 0
    %p625 = por %p623, %p624
    %s626 = ssub.s32 %s42, %s49
    %p627 = scmp.eq.s32.totalorder %s626, 0
    %s629 = sadd.s32 %s628, 1
    %s630 = scalar_select %p627, %s628, %s629
    %p633 = pneg %p627
    %p634 = scmp.eq.s32.totalorder %s34, 3
    %p635 = por %p633, %p634
    %p636 = scmp.ne.s32.totalorder %s628, %s631
    %p637 = scmp.eq.s32.totalorder %s34, 0
    %p638 = por %p636, %p637
    %p639 = scmp.ne.s32.totalorder %s628, %s631
    %p640 = scmp.eq.s32.totalorder %s39, 3
    %p641 = por %p639, %p640
    %p642 = scmp.ne.s32.totalorder %s631, %s632
    %p643 = scmp.eq.s32.totalorder %s39, 0
    %p644 = por %p642, %p643
    %p645 = scmp.ne.s32.totalorder %s631, %s632
    %p646 = scmp.eq.s32.totalorder %s40, 3
    %p647 = por %p645, %p646
    %p649 = scmp.ne.s32.totalorder %s632, %s648
    %p650 = scmp.eq.s32.totalorder %s40, 0
    %p651 = por %p649, %p650
    %s652 = ssub.s32 %s42, %s49
    %p653 = scmp.eq.s32.totalorder %s652, 0
    %s655 = sadd.s32 %s654, 1
    %s656 = scalar_select %p653, %s654, %s655
    %p659 = pneg %p653
    %p660 = scmp.eq.s32.totalorder %s34, 3
    %p661 = por %p659, %p660
    %p662 = scmp.ne.s32.totalorder %s654, %s657
    %p663 = scmp.eq.s32.totalorder %s34, 0
    %p664 = por %p662, %p663
    %p665 = scmp.ne.s32.totalorder %s654, %s657
    %p666 = scmp.eq.s32.totalorder %s39, 3
    %p667 = por %p665, %p666
    %p668 = scmp.ne.s32.totalorder %s657, %s658
    %p669 = scmp.eq.s32.totalorder %s39, 0
    %p670 = por %p668, %p669
    %p671 = scmp.ne.s32.totalorder %s657, %s658
    %p672 = scmp.eq.s32.totalorder %s40, 3
    %p673 = por %p671, %p672
    %p675 = scmp.ne.s32.totalorder %s658, %s674
    %p676 = scmp.eq.s32.totalorder %s40, 0
    %p677 = por %p675, %p676
    %s679 = sadd.s32 %s678, 1
    %p682 = scmp.eq.s32.totalorder %s34, 3
    %p683 = scmp.ne.s32.totalorder %s678, %s680
    %p684 = scmp.eq.s32.totalorder %s34, 0
    %p685 = por %p683, %p684
    %p686 = scmp.ne.s32.totalorder %s678, %s680
    %p687 = scmp.eq.s32.totalorder %s39, 3
    %p688 = por %p686, %p687
    %p689 = scmp.ne.s32.totalorder %s680, %s681
    %p690 = scmp.eq.s32.totalorder %s39, 0
    %p691 = por %p689, %p690
    %p692 = scmp.ne.s32.totalorder %s680, %s681
    %p693 = scmp.eq.s32.totalorder %s40, 3
    %p694 = por %p692, %p693
    %p696 = scmp.ne.s32.totalorder %s681, %s695
    %p697 = scmp.eq.s32.totalorder %s40, 0
    %p698 = por %p696, %p697
    %s700 = sadd.s32 %s699, 1
    %p703 = scmp.eq.s32.totalorder %s34, 3
    %p704 = scmp.ne.s32.totalorder %s699, %s701
    %p705 = scmp.eq.s32.totalorder %s34, 0
    %p706 = por %p704, %p705
    %p707 = scmp.ne.s32.totalorder %s699, %s701
    %p708 = scmp.eq.s32.totalorder %s39, 3
    %p709 = por %p707, %p708
    %p710 = scmp.ne.s32.totalorder %s701, %s702
    %p711 = scmp.eq.s32.totalorder %s39, 0
    %p712 = por %p710, %p711
    %p713 = scmp.ne.s32.totalorder %s701, %s702
    %p714 = scmp.eq.s32.totalorder %s40, 3
    %p715 = por %p713, %p714
    %p717 = scmp.ne.s32.totalorder %s702, %s716
    %p718 = scmp.eq.s32.totalorder %s40, 0
    %p719 = por %p717, %p718
    %s721 = sadd.s32 %s720, 1
    %p724 = scmp.eq.s32.totalorder %s34, 3
    %p725 = scmp.ne.s32.totalorder %s720, %s722
    %p726 = scmp.eq.s32.totalorder %s34, 0
    %p727 = por %p725, %p726
    %p728 = scmp.ne.s32.totalorder %s720, %s722
    %p729 = scmp.eq.s32.totalorder %s39, 3
    %p730 = por %p728, %p729
    %p731 = scmp.ne.s32.totalorder %s722, %s723
    %p732 = scmp.eq.s32.totalorder %s39, 0
    %p733 = por %p731, %p732
    %p734 = scmp.ne.s32.totalorder %s722, %s723
    %p735 = scmp.eq.s32.totalorder %s40, 3
    %p736 = por %p734, %p735
    %p738 = scmp.ne.s32.totalorder %s723, %s737
    %p739 = scmp.eq.s32.totalorder %s40, 0
    %p740 = por %p738, %p739
    %s742 = sadd.s32 %s741, 1
    %p745 = scmp.eq.s32.totalorder %s34, 3
    %p746 = scmp.ne.s32.totalorder %s741, %s743
    %p747 = scmp.eq.s32.totalorder %s34, 0
    %p748 = por %p746, %p747
    %p749 = scmp.ne.s32.totalorder %s741, %s743
    %p750 = scmp.eq.s32.totalorder %s39, 3
    %p751 = por %p749, %p750
    %p752 = scmp.ne.s32.totalorder %s743, %s744
    %p753 = scmp.eq.s32.totalorder %s39, 0
    %p754 = por %p752, %p753
    %p755 = scmp.ne.s32.totalorder %s743, %s744
    %p756 = scmp.eq.s32.totalorder %s40, 3
    %p757 = por %p755, %p756
    %p759 = scmp.ne.s32.totalorder %s744, %s758
    %p760 = scmp.eq.s32.totalorder %s40, 0
    %p761 = por %p759, %p760
    %s762 = ssub.s32 %s41, %s53
    %p763 = scmp.eq.s32.totalorder %s762, 0
    %s765 = sadd.s32 %s764, 1
    %s766 = scalar_select %p763, %s764, %s765
    %p769 = pneg %p763
    %p770 = scmp.eq.s32.totalorder %s34, 3
    %p771 = por %p769, %p770
    %p772 = scmp.ne.s32.totalorder %s764, %s767
    %p773 = scmp.eq.s32.totalorder %s34, 0
    %p774 = por %p772, %p773
    %p775 = scmp.ne.s32.totalorder %s764, %s767
    %p776 = scmp.eq.s32.totalorder %s39, 3
    %p777 = por %p775, %p776
    %p778 = scmp.ne.s32.totalorder %s767, %s768
    %p779 = scmp.eq.s32.totalorder %s39, 0
    %p780 = por %p778, %p779
    %p781 = scmp.ne.s32.totalorder %s767, %s768
    %p782 = scmp.eq.s32.totalorder %s40, 3
    %p783 = por %p781, %p782
    %p785 = scmp.ne.s32.totalorder %s768, %s784
    %p786 = scmp.eq.s32.totalorder %s40, 0
    %p787 = por %p785, %p786
    %p788 = scmp.le.s32.totalorder 1, %s34
    %p789 = scmp.lt.s32.totalorder %s34, 5
    %p790 = pnand %p788, %p789
    %p791 = pneg %p790
    // Predicated region
    $region9: #{_lambda_.3} parent=5 // pred_check
      _
    $region10: #{_lambda_.3} parent=5 // pred_check_branch
      %793 = sbr.rel (%p790) target = $region12
    $region11: #{_lambda_.3} parent=5 // pred_region
      %s794 = ssub.s32 %s34, 1
      // Predicated region
      $region13: #{_lambda_.3} parent=11 // pred_check
        %p795 = pneg %p691
      $region14: #{_lambda_.3} parent=11 // pred_check_branch
        %797 = sbr.rel (%p795) target = $region16
      $region15: #{_lambda_.3} parent=11 // pred_region
        _
      $region16: #{_lambda_.3} parent=11 // pred_fallthru
        _
      // Predicated region
      $region17: #{_lambda_.3} parent=11 // pred_check
        %p798 = pneg %p712
      $region18: #{_lambda_.3} parent=11 // pred_check_branch
        %800 = sbr.rel (%p798) target = $region20
      $region19: #{_lambda_.3} parent=11 // pred_region
        _
      $region20: #{_lambda_.3} parent=11 // pred_fallthru
        _
      // Predicated region
      $region21: #{_lambda_.3} parent=11 // pred_check
        %p801 = pneg %p733
      $region22: #{_lambda_.3} parent=11 // pred_check_branch
        %803 = sbr.rel (%p801) target = $region24
      $region23: #{_lambda_.3} parent=11 // pred_region
        _
      $region24: #{_lambda_.3} parent=11 // pred_fallthru
        _
      // Predicated region
      $region25: #{_lambda_.3} parent=11 // pred_check
        %p804 = pneg %p754
      $region26: #{_lambda_.3} parent=11 // pred_check_branch
        %806 = sbr.rel (%p804) target = $region28
      $region27: #{_lambda_.3} parent=11 // pred_region
        _
      $region28: #{_lambda_.3} parent=11 // pred_fallthru
        _
    $region12: #{_lambda_.3} parent=5 // pred_fallthru
      _
    %p807 = scmp.lt.s32.totalorder %s34, 4
    // Predicated region
    $region29: #{_lambda_.3} parent=5 // pred_check
      %p808 = pneg %p807
    $region30: #{_lambda_.3} parent=5 // pred_check_branch
      %810 = sbr.rel (%p808) target = $region32
    $region31: #{_lambda_.3} parent=5 // pred_region
      // Predicated region
      $region33: #{_lambda_.3} parent=31 // pred_check
        %p811 = pneg %p66
      $region34: #{_lambda_.3} parent=31 // pred_check_branch
        %813 = sbr.rel (%p811) target = $region36
      $region35: #{_lambda_.3} parent=31 // pred_region
        %p814 = scmp.lt.s32.totalorder %s41, 1
        %s815 = scalar_select %p814, %s41, 1
        %s816 = smul.addr %s815, 8
        %s817 = scalar_lea.vmem %s0, %s816
      $region36: #{_lambda_.3} parent=31 // pred_fallthru
        _
      // Predicated region
      $region37: #{_lambda_.3} parent=31 // pred_check
        %p818 = pneg %p92
      $region38: #{_lambda_.3} parent=31 // pred_check_branch
        %820 = sbr.rel (%p818) target = $region40
      $region39: #{_lambda_.3} parent=31 // pred_region
        %p821 = scmp.lt.s32.totalorder %s41, 1
        %s822 = scalar_select %p821, %s41, 1
        %s823 = smul.addr %s822, 4
        %s824 = scalar_lea.vmem %s1, %s823
      $region40: #{_lambda_.3} parent=31 // pred_fallthru
        _
      // Predicated region
      $region41: #{_lambda_.3} parent=31 // pred_check
        %p825 = pneg %p118
      $region42: #{_lambda_.3} parent=31 // pred_check_branch
        %827 = sbr.rel (%p825) target = $region44
      $region43: #{_lambda_.3} parent=31 // pred_region
        %p828 = scmp.lt.s32.totalorder %s41, 1
        %s829 = scalar_select %p828, %s41, 1
        %s830 = smul.addr %s829, 4
        %s831 = scalar_lea.vmem %s2, %s830
      $region44: #{_lambda_.3} parent=31 // pred_fallthru
        _
      // Predicated region
      $region45: #{_lambda_.3} parent=31 // pred_check
        %p832 = pneg %p144
      $region46: #{_lambda_.3} parent=31 // pred_check_branch
        %834 = sbr.rel (%p832) target = $region48
      $region47: #{_lambda_.3} parent=31 // pred_region
        %p835 = scmp.lt.s32.totalorder %s41, 1
        %s836 = scalar_select %p835, %s41, 1
        %s837 = scalar_lea.vmem %s3, %s836
      $region48: #{_lambda_.3} parent=31 // pred_fallthru
        _
      // Predicated region
      $region49: #{_lambda_.3} parent=31 // pred_check
        %p838 = pneg %p170
      $region50: #{_lambda_.3} parent=31 // pred_check_branch
        %840 = sbr.rel (%p838) target = $region52
      $region51: #{_lambda_.3} parent=31 // pred_region
        %p841 = scmp.lt.s32.totalorder %s42, 1
        %s842 = scalar_select %p841, %s42, 1
        %s843 = scalar_lea.vmem %s4, %s842
      $region52: #{_lambda_.3} parent=31 // pred_fallthru
        _
      // Predicated region
      $region53: #{_lambda_.3} parent=31 // pred_check
        %p844 = pneg %p196
      $region54: #{_lambda_.3} parent=31 // pred_check_branch
        %846 = sbr.rel (%p844) target = $region56
      $region55: #{_lambda_.3} parent=31 // pred_region
        %p847 = scmp.lt.s32.totalorder %s42, 1
        %s848 = scalar_select %p847, %s42, 1
        %s849 = scalar_lea.vmem %s5, %s848
      $region56: #{_lambda_.3} parent=31 // pred_fallthru
        _
      // Predicated region
      $region57: #{_lambda_.3} parent=31 // pred_check
        %p850 = pneg %p222
      $region58: #{_lambda_.3} parent=31 // pred_check_branch
        %852 = sbr.rel (%p850) target = $region60
      $region59: #{_lambda_.3} parent=31 // pred_region
        %p853 = scmp.lt.s32.totalorder %s42, 1
        %s854 = scalar_select %p853, %s42, 1
        %s855 = smul.addr %s854, 4
        %s856 = smul.addr %s855, 4
        %s857 = scalar_lea.vmem %s6, %s856
      $region60: #{_lambda_.3} parent=31 // pred_fallthru
        _
      // Predicated region
      $region61: #{_lambda_.3} parent=31 // pred_check
        %p858 = pneg %p248
      $region62: #{_lambda_.3} parent=31 // pred_check_branch
        %860 = sbr.rel (%p858) target = $region64
      $region63: #{_lambda_.3} parent=31 // pred_region
        %p861 = scmp.lt.s32.totalorder %s42, 1
        %s862 = scalar_select %p861, %s42, 1
        %s863 = scalar_lea.vmem %s7, %s862
      $region64: #{_lambda_.3} parent=31 // pred_fallthru
        _
      // Predicated region
      $region65: #{_lambda_.3} parent=31 // pred_check
        %p864 = pneg %p274
      $region66: #{_lambda_.3} parent=31 // pred_check_branch
        %866 = sbr.rel (%p864) target = $region68
      $region67: #{_lambda_.3} parent=31 // pred_region
        %p867 = scmp.lt.s32.totalorder %s42, 1
        %s868 = scalar_select %p867, %s42, 1
        %s869 = smul.addr %s868, 4
        %s870 = smul.addr %s869, 4
        %s871 = scalar_lea.vmem %s8, %s870
      $region68: #{_lambda_.3} parent=31 // pred_fallthru
        _
      // Predicated region
      $region69: #{_lambda_.3} parent=31 // pred_check
        %p872 = pneg %p300
      $region70: #{_lambda_.3} parent=31 // pred_check_branch
        %874 = sbr.rel (%p872) target = $region72
      $region71: #{_lambda_.3} parent=31 // pred_region
        %p875 = scmp.lt.s32.totalorder %s42, 1
        %s876 = scalar_select %p875, %s42, 1
        %s877 = scalar_lea.vmem %s9, %s876
      $region72: #{_lambda_.3} parent=31 // pred_fallthru
        _
      // Predicated region
      $region73: #{_lambda_.3} parent=31 // pred_check
        %p878 = pneg %p326
      $region74: #{_lambda_.3} parent=31 // pred_check_branch
        %880 = sbr.rel (%p878) target = $region76
      $region75: #{_lambda_.3} parent=31 // pred_region
        %p881 = scmp.lt.s32.totalorder %s42, 1
        %s882 = scalar_select %p881, %s42, 1
        %s883 = scalar_lea.vmem %s10, %s882
      $region76: #{_lambda_.3} parent=31 // pred_fallthru
        _
      // Predicated region
      $region77: #{_lambda_.3} parent=31 // pred_check
        %p884 = pneg %p352
      $region78: #{_lambda_.3} parent=31 // pred_check_branch
        %886 = sbr.rel (%p884) target = $region80
      $region79: #{_lambda_.3} parent=31 // pred_region
        %p887 = scmp.lt.s32.totalorder %s42, 1
        %s888 = scalar_select %p887, %s42, 1
        %s889 = scalar_lea.vmem %s11, %s888
      $region80: #{_lambda_.3} parent=31 // pred_fallthru
        _
      // Predicated region
      $region81: #{_lambda_.3} parent=31 // pred_check
        %p890 = pneg %p378
      $region82: #{_lambda_.3} parent=31 // pred_check_branch
        %892 = sbr.rel (%p890) target = $region84
      $region83: #{_lambda_.3} parent=31 // pred_region
        %p893 = scmp.lt.s32.totalorder %s42, 1
        %s894 = scalar_select %p893, %s42, 1
        %s895 = smul.addr %s894, 4
        %s896 = smul.addr %s895, 4
        %s897 = scalar_lea.vmem %s12, %s896
      $region84: #{_lambda_.3} parent=31 // pred_fallthru
        _
      // Predicated region
      $region85: #{_lambda_.3} parent=31 // pred_check
        %p898 = pneg %p404
      $region86: #{_lambda_.3} parent=31 // pred_check_branch
        %900 = sbr.rel (%p898) target = $region88
      $region87: #{_lambda_.3} parent=31 // pred_region
        %p901 = scmp.lt.s32.totalorder %s42, 1
        %s902 = scalar_select %p901, %s42, 1
        %s903 = scalar_lea.vmem %s13, %s902
      $region88: #{_lambda_.3} parent=31 // pred_fallthru
        _
      // Predicated region
      $region89: #{_lambda_.3} parent=31 // pred_check
        %p904 = pneg %p430
      $region90: #{_lambda_.3} parent=31 // pred_check_branch
        %906 = sbr.rel (%p904) target = $region92
      $region91: #{_lambda_.3} parent=31 // pred_region
        %p907 = scmp.lt.s32.totalorder %s42, 1
        %s908 = scalar_select %p907, %s42, 1
        %s909 = smul.addr %s908, 4
        %s910 = smul.addr %s909, 4
        %s911 = scalar_lea.vmem %s14, %s910
      $region92: #{_lambda_.3} parent=31 // pred_fallthru
        _
      // Predicated region
      $region93: #{_lambda_.3} parent=31 // pred_check
        %p912 = pneg %p456
      $region94: #{_lambda_.3} parent=31 // pred_check_branch
        %914 = sbr.rel (%p912) target = $region96
      $region95: #{_lambda_.3} parent=31 // pred_region
        %p915 = scmp.lt.s32.totalorder %s42, 1
        %s916 = scalar_select %p915, %s42, 1
        %s917 = scalar_lea.vmem %s15, %s916
      $region96: #{_lambda_.3} parent=31 // pred_fallthru
        _
      // Predicated region
      $region97: #{_lambda_.3} parent=31 // pred_check
        %p918 = pneg %p482
      $region98: #{_lambda_.3} parent=31 // pred_check_branch
        %920 = sbr.rel (%p918) target = $region100
      $region99: #{_lambda_.3} parent=31 // pred_region
        %p921 = scmp.lt.s32.totalorder %s42, 1
        %s922 = scalar_select %p921, %s42, 1
        %s923 = smul.addr %s922, 4
        %s924 = smul.addr %s923, 4
        %s925 = scalar_lea.vmem %s16, %s924
      $region100: #{_lambda_.3} parent=31 // pred_fallthru
        _
      // Predicated region
      $region101: #{_lambda_.3} parent=31 // pred_check
        %p926 = pneg %p508
      $region102: #{_lambda_.3} parent=31 // pred_check_branch
        %928 = sbr.rel (%p926) target = $region104
      $region103: #{_lambda_.3} parent=31 // pred_region
        %p929 = scmp.lt.s32.totalorder %s42, 1
        %s930 = scalar_select %p929, %s42, 1
        %s931 = scalar_lea.vmem %s17, %s930
      $region104: #{_lambda_.3} parent=31 // pred_fallthru
        _
      // Predicated region
      $region105: #{_lambda_.3} parent=31 // pred_check
        %p932 = pneg %p534
      $region106: #{_lambda_.3} parent=31 // pred_check_branch
        %934 = sbr.rel (%p932) target = $region108
      $region107: #{_lambda_.3} parent=31 // pred_region
        %p935 = scmp.lt.s32.totalorder %s42, 1
        %s936 = scalar_select %p935, %s42, 1
        %s937 = scalar_lea.vmem %s18, %s936
      $region108: #{_lambda_.3} parent=31 // pred_fallthru
        _
      // Predicated region
      $region109: #{_lambda_.3} parent=31 // pred_check
        %p938 = pneg %p560
      $region110: #{_lambda_.3} parent=31 // pred_check_branch
        %940 = sbr.rel (%p938) target = $region112
      $region111: #{_lambda_.3} parent=31 // pred_region
        %p941 = scmp.lt.s32.totalorder %s42, 1
        %s942 = scalar_select %p941, %s42, 1
        %s943 = scalar_lea.vmem %s19, %s942
      $region112: #{_lambda_.3} parent=31 // pred_fallthru
        _
      // Predicated region
      $region113: #{_lambda_.3} parent=31 // pred_check
        %p944 = pneg %p586
      $region114: #{_lambda_.3} parent=31 // pred_check_branch
        %946 = sbr.rel (%p944) target = $region116
      $region115: #{_lambda_.3} parent=31 // pred_region
        %p947 = scmp.lt.s32.totalorder %s42, 1
        %s948 = scalar_select %p947, %s42, 1
        %s949 = smul.addr %s948, 4
        %s950 = smul.addr %s949, 4
        %s951 = scalar_lea.vmem %s20, %s950
      $region116: #{_lambda_.3} parent=31 // pred_fallthru
        _
      // Predicated region
      $region117: #{_lambda_.3} parent=31 // pred_check
        %p952 = pneg %p612
      $region118: #{_lambda_.3} parent=31 // pred_check_branch
        %954 = sbr.rel (%p952) target = $region120
      $region119: #{_lambda_.3} parent=31 // pred_region
        %p955 = scmp.lt.s32.totalorder %s42, 1
        %s956 = scalar_select %p955, %s42, 1
        %s957 = scalar_lea.vmem %s21, %s956
      $region120: #{_lambda_.3} parent=31 // pred_fallthru
        _
      // Predicated region
      $region121: #{_lambda_.3} parent=31 // pred_check
        %p958 = pneg %p638
      $region122: #{_lambda_.3} parent=31 // pred_check_branch
        %960 = sbr.rel (%p958) target = $region124
      $region123: #{_lambda_.3} parent=31 // pred_region
        %p961 = scmp.lt.s32.totalorder %s42, 1
        %s962 = scalar_select %p961, %s42, 1
        %s963 = smul.addr %s962, 8
        %s964 = smul.addr %s963, 4
        %s965 = scalar_lea.vmem %s22, %s964
      $region124: #{_lambda_.3} parent=31 // pred_fallthru
        _
      // Predicated region
      $region125: #{_lambda_.3} parent=31 // pred_check
        %p966 = pneg %p664
      $region126: #{_lambda_.3} parent=31 // pred_check_branch
        %968 = sbr.rel (%p966) target = $region128
      $region127: #{_lambda_.3} parent=31 // pred_region
        %p969 = scmp.lt.s32.totalorder %s42, 1
        %s970 = scalar_select %p969, %s42, 1
        %s971 = scalar_lea.vmem %s23, %s970
      $region128: #{_lambda_.3} parent=31 // pred_fallthru
        _
    $region32: #{_lambda_.3} parent=5 // pred_fallthru
      _
    %p972 = scmp.le.s32.totalorder 1, %s34
    %p973 = scmp.lt.s32.totalorder %s34, 5
    %p974 = pnand %p972, %p973
    %p975 = pneg %p974
    // Predicated region
    $region129: #{_lambda_.3} parent=5 // pred_check
      _
    $region130: #{_lambda_.3} parent=5 // pred_check_branch
      %977 = sbr.rel (%p974) target = $region132
    $region131: #{_lambda_.3} parent=5 // pred_region
      %s978 = ssub.s32 %s34, 1
      %p979 = scmp.lt.s32.totalorder %s43, 1
      %s980 = scalar_select %p979, %s43, 1
      %s981 = smul.addr %s980, 8
      %s982 = scalar_lea.vmem %s0, %s981
      %p983 = pneg %p72
      %p984 = pneg %p69
      %p985 = scmp.lt.s32.totalorder %s43, 1
      %s986 = scalar_select %p985, %s43, 1
      %s987 = smul.addr %s986, 4
      %s988 = scalar_lea.vmem %s1, %s987
      %p989 = pneg %p98
      %p990 = pneg %p95
      %p991 = scmp.lt.s32.totalorder %s43, 1
      %s992 = scalar_select %p991, %s43, 1
      %s993 = smul.addr %s992, 4
      %s994 = scalar_lea.vmem %s2, %s993
      %p995 = pneg %p124
      %p996 = pneg %p121
      %p997 = scmp.lt.s32.totalorder %s43, 1
      %s998 = scalar_select %p997, %s43, 1
      %s999 = scalar_lea.vmem %s3, %s998
      %p1000 = pneg %p150
      %p1001 = pneg %p147
      %p1002 = scmp.lt.s32.totalorder %s44, 1
      %s1003 = scalar_select %p1002, %s44, 1
      %s1004 = scalar_lea.vmem %s4, %s1003
      %p1005 = pneg %p176
      %p1006 = pneg %p173
      %p1007 = scmp.lt.s32.totalorder %s44, 1
      %s1008 = scalar_select %p1007, %s44, 1
      %s1009 = scalar_lea.vmem %s5, %s1008
      %p1010 = pneg %p202
      %p1011 = pneg %p199
      %p1012 = scmp.lt.s32.totalorder %s44, 1
      %s1013 = scalar_select %p1012, %s44, 1
      %s1014 = smul.addr %s1013, 4
      %s1015 = smul.addr %s1014, 4
      %s1016 = scalar_lea.vmem %s6, %s1015
      %p1017 = pneg %p228
      %p1018 = pneg %p225
      %p1019 = scmp.lt.s32.totalorder %s44, 1
      %s1020 = scalar_select %p1019, %s44, 1
      %s1021 = scalar_lea.vmem %s7, %s1020
      %p1022 = pneg %p254
      %p1023 = pneg %p251
      %p1024 = scmp.lt.s32.totalorder %s44, 1
      %s1025 = scalar_select %p1024, %s44, 1
      %s1026 = smul.addr %s1025, 4
      %s1027 = smul.addr %s1026, 4
      %s1028 = scalar_lea.vmem %s8, %s1027
      %p1029 = pneg %p280
      %p1030 = pneg %p277
      %p1031 = scmp.lt.s32.totalorder %s44, 1
      %s1032 = scalar_select %p1031, %s44, 1
      %s1033 = scalar_lea.vmem %s9, %s1032
      %p1034 = pneg %p306
      %p1035 = pneg %p303
      %p1036 = scmp.lt.s32.totalorder %s44, 1
      %s1037 = scalar_select %p1036, %s44, 1
      %s1038 = scalar_lea.vmem %s10, %s1037
      %p1039 = pneg %p332
      %p1040 = pneg %p329
      %p1041 = scmp.lt.s32.totalorder %s44, 1
      %s1042 = scalar_select %p1041, %s44, 1
      %s1043 = scalar_lea.vmem %s11, %s1042
      %p1044 = pneg %p358
      %p1045 = pneg %p355
      %p1046 = scmp.lt.s32.totalorder %s44, 1
      %s1047 = scalar_select %p1046, %s44, 1
      %s1048 = smul.addr %s1047, 4
      %s1049 = smul.addr %s1048, 4
      %s1050 = scalar_lea.vmem %s12, %s1049
      %p1051 = pneg %p384
      %p1052 = pneg %p381
      %p1053 = scmp.lt.s32.totalorder %s44, 1
      %s1054 = scalar_select %p1053, %s44, 1
      %s1055 = scalar_lea.vmem %s13, %s1054
      %p1056 = pneg %p410
      %p1057 = pneg %p407
      %p1058 = scmp.lt.s32.totalorder %s44, 1
      %s1059 = scalar_select %p1058, %s44, 1
      %s1060 = smul.addr %s1059, 4
      %s1061 = smul.addr %s1060, 4
      %s1062 = scalar_lea.vmem %s14, %s1061
      %p1063 = pneg %p436
      %p1064 = pneg %p433
      %p1065 = scmp.lt.s32.totalorder %s44, 1
      %s1066 = scalar_select %p1065, %s44, 1
      %s1067 = scalar_lea.vmem %s15, %s1066
      %p1068 = pneg %p462
      %p1069 = pneg %p459
      %p1070 = scmp.lt.s32.totalorder %s44, 1
      %s1071 = scalar_select %p1070, %s44, 1
      %s1072 = smul.addr %s1071, 4
      %s1073 = smul.addr %s1072, 4
      %s1074 = scalar_lea.vmem %s16, %s1073
      %p1075 = pneg %p488
      %p1076 = pneg %p485
      %p1077 = scmp.lt.s32.totalorder %s44, 1
      %s1078 = scalar_select %p1077, %s44, 1
      %s1079 = scalar_lea.vmem %s17, %s1078
      %p1080 = pneg %p514
      %p1081 = pneg %p511
      %p1082 = scmp.lt.s32.totalorder %s44, 1
      %s1083 = scalar_select %p1082, %s44, 1
      %s1084 = scalar_lea.vmem %s18, %s1083
      %p1085 = pneg %p540
      %p1086 = pneg %p537
      %p1087 = scmp.lt.s32.totalorder %s44, 1
      %s1088 = scalar_select %p1087, %s44, 1
      %s1089 = scalar_lea.vmem %s19, %s1088
      %p1090 = pneg %p566
      %p1091 = pneg %p563
      %p1092 = scmp.lt.s32.totalorder %s44, 1
      %s1093 = scalar_select %p1092, %s44, 1
      %s1094 = smul.addr %s1093, 4
      %s1095 = smul.addr %s1094, 4
      %s1096 = scalar_lea.vmem %s20, %s1095
      %p1097 = pneg %p592
      %p1098 = pneg %p589
      %p1099 = scmp.lt.s32.totalorder %s44, 1
      %s1100 = scalar_select %p1099, %s44, 1
      %s1101 = scalar_lea.vmem %s21, %s1100
      %p1102 = pneg %p618
      %p1103 = pneg %p615
      %p1104 = scmp.lt.s32.totalorder %s44, 1
      %s1105 = scalar_select %p1104, %s44, 1
      %s1106 = smul.addr %s1105, 8
      %s1107 = smul.addr %s1106, 4
      %s1108 = scalar_lea.vmem %s22, %s1107
      %p1109 = pneg %p644
      %p1110 = pneg %p641
      %p1111 = scmp.lt.s32.totalorder %s44, 1
      %s1112 = scalar_select %p1111, %s44, 1
      %s1113 = scalar_lea.vmem %s23, %s1112
      %p1114 = pneg %p670
      %p1115 = pneg %p667
      %p1116 = pneg %p691
      %p1117 = pneg %p688
      %p1118 = pneg %p712
      %p1119 = pneg %p709
      %p1120 = pneg %p733
      %p1121 = pneg %p730
      %p1122 = pneg %p754
      %p1123 = pneg %p751
      %p1124 = pneg %p780
      %p1125 = pneg %p777
      %p1126 = scmp.lt.s32.totalorder %s43, 1
      %s1127 = scalar_select %p1126, %s43, 1
      %s1128 = smul.addr %s1127, 8
      %s1129 = scalar_lea.vmem %s28, %s1128
      %p1130 = scmp.lt.s32.totalorder %s43, 1
      %s1131 = scalar_select %p1130, %s43, 1
      %s1132 = smul.addr %s1131, 8
      %s1133 = scalar_lea.vmem %s0, %s1132
      %p1134 = scmp.lt.s32.totalorder %s43, 1
      %s1135 = scalar_select %p1134, %s43, 1
      %s1136 = smul.addr %s1135, 4
      %s1137 = scalar_lea.vmem %s1, %s1136
      %p1138 = scmp.lt.s32.totalorder %s43, 1
      %s1139 = scalar_select %p1138, %s43, 1
      %s1140 = smul.addr %s1139, 4
      %s1141 = scalar_lea.vmem %s2, %s1140
      %p1142 = scmp.lt.s32.totalorder %s43, 1
      %s1143 = scalar_select %p1142, %s43, 1
      %s1144 = scalar_lea.vmem %s3, %s1143
      %p1145 = scmp.lt.s32.totalorder %s44, 1
      %s1146 = scalar_select %p1145, %s44, 1
      %s1147 = scalar_lea.vmem %s4, %s1146
      %p1148 = scmp.lt.s32.totalorder %s44, 1
      %s1149 = scalar_select %p1148, %s44, 1
      %s1150 = scalar_lea.vmem %s5, %s1149
      %p1151 = scmp.lt.s32.totalorder %s44, 1
      %s1152 = scalar_select %p1151, %s44, 1
      %s1153 = smul.addr %s1152, 4
      %s1154 = smul.addr %s1153, 4
      %s1155 = scalar_lea.vmem %s6, %s1154
      %p1156 = scmp.lt.s32.totalorder %s44, 1
      %s1157 = scalar_select %p1156, %s44, 1
      %s1158 = scalar_lea.vmem %s7, %s1157
      %p1159 = scmp.lt.s32.totalorder %s44, 1
      %s1160 = scalar_select %p1159, %s44, 1
      %s1161 = smul.addr %s1160, 4
      %s1162 = smul.addr %s1161, 4
      %s1163 = scalar_lea.vmem %s8, %s1162
      %p1164 = scmp.lt.s32.totalorder %s44, 1
      %s1165 = scalar_select %p1164, %s44, 1
      %s1166 = scalar_lea.vmem %s9, %s1165
      %p1167 = scmp.lt.s32.totalorder %s44, 1
      %s1168 = scalar_select %p1167, %s44, 1
      %s1169 = scalar_lea.vmem %s10, %s1168
      %p1170 = scmp.lt.s32.totalorder %s44, 1
      %s1171 = scalar_select %p1170, %s44, 1
      %s1172 = scalar_lea.vmem %s11, %s1171
      %p1173 = scmp.lt.s32.totalorder %s44, 1
      %s1174 = scalar_select %p1173, %s44, 1
      %s1175 = smul.addr %s1174, 4
      %s1176 = smul.addr %s1175, 4
      %s1177 = scalar_lea.vmem %s12, %s1176
      %p1178 = scmp.lt.s32.totalorder %s44, 1
      %s1179 = scalar_select %p1178, %s44, 1
      %s1180 = scalar_lea.vmem %s13, %s1179
      %p1181 = scmp.lt.s32.totalorder %s44, 1
      %s1182 = scalar_select %p1181, %s44, 1
      %s1183 = smul.addr %s1182, 4
      %s1184 = smul.addr %s1183, 4
      %s1185 = scalar_lea.vmem %s14, %s1184
      %p1186 = scmp.lt.s32.totalorder %s44, 1
      %s1187 = scalar_select %p1186, %s44, 1
      %s1188 = scalar_lea.vmem %s15, %s1187
      %p1189 = scmp.lt.s32.totalorder %s44, 1
      %s1190 = scalar_select %p1189, %s44, 1
      %s1191 = smul.addr %s1190, 4
      %s1192 = smul.addr %s1191, 4
      %s1193 = scalar_lea.vmem %s16, %s1192
      %p1194 = scmp.lt.s32.totalorder %s44, 1
      %s1195 = scalar_select %p1194, %s44, 1
      %s1196 = scalar_lea.vmem %s17, %s1195
      %p1197 = scmp.lt.s32.totalorder %s44, 1
      %s1198 = scalar_select %p1197, %s44, 1
      %s1199 = scalar_lea.vmem %s18, %s1198
      %p1200 = scmp.lt.s32.totalorder %s44, 1
      %s1201 = scalar_select %p1200, %s44, 1
      %s1202 = scalar_lea.vmem %s19, %s1201
      %p1203 = scmp.lt.s32.totalorder %s44, 1
      %s1204 = scalar_select %p1203, %s44, 1
      %s1205 = smul.addr %s1204, 4
      %s1206 = smul.addr %s1205, 4
      %s1207 = scalar_lea.vmem %s20, %s1206
      %p1208 = scmp.lt.s32.totalorder %s44, 1
      %s1209 = scalar_select %p1208, %s44, 1
      %s1210 = scalar_lea.vmem %s21, %s1209
      %p1211 = scmp.lt.s32.totalorder %s44, 1
      %s1212 = scalar_select %p1211, %s44, 1
      %s1213 = smul.addr %s1212, 8
      %s1214 = smul.addr %s1213, 4
      %s1215 = scalar_lea.vmem %s22, %s1214
      %p1216 = scmp.lt.s32.totalorder %s44, 1
      %s1217 = scalar_select %p1216, %s44, 1
      %s1218 = scalar_lea.vmem %s23, %s1217
      %p1219 = scmp.lt.s32.totalorder %s43, 1
      %s1220 = scalar_select %p1219, %s43, 1
      %s1221 = smul.addr %s1220, 8
      %s1222 = scalar_lea.vmem %s28, %s1221
      %p1224 = scmp.eq.s32.totalorder %s44, 0
      // Predicated region
      $region133: #{_lambda_.3} parent=131 // pred_check
        %p1225 = pneg %p1224
      $region134: #{_lambda_.3} parent=131 // pred_check_branch
        %1227 = sbr.rel (%p1225) target = $region136
      $region135: #{_lambda_.3} parent=131 // pred_region
        %v1228 = vld [vmem:[%s1133] sm:$0xff]
        %vm1229 = vcmask 261120
        %1230 = vst.msk [vmem:[#allocation2] sm:$0xff] %vm1229, %v1228
        %v1231 = vld [vmem:[%s1141] sm:$0xf]
        %v1232 = vunpack.c.l.bf16 %v1231
        %vm1233 = vcmask 64512
        %1234 = vst.msk [vmem:[#allocation3] sm:$0xff] %vm1233, %v1232
        %1235 = vst.msk [vmem:[#allocation3 + $0x8] sm:$0xff] %vm1233, %v1232
        %1236 = vst.msk [vmem:[#allocation3 + $0x10] sm:$0xff] %vm1233, %v1232
        %1237 = vst.msk [vmem:[#allocation3 + $0x18] sm:$0xff] %vm1233, %v1232
        %v1238 = vld [vmem:[%s1144] sm:$0x1]
        %v1239 = vunpack.c.l.bf16 %v1238
        %v1240 = vlaneseq
        %v1241 = vshrl.u32 %v1240, 7
        %v1242 = vsub.s32 0, %v1241
        %v1243 = vrot.slane %v1239, %v1242
        %1244 = vst.msk [vmem:[#allocation4] sm:$0xff] %vm1233, %v1243
        %1245 = vst.msk [vmem:[#allocation4 + $0x8] sm:$0xff] %vm1233, %v1243
        %1246 = vst.msk [vmem:[#allocation4 + $0x10] sm:$0xff] %vm1233, %v1243
        %1247 = vst.msk [vmem:[#allocation4 + $0x18] sm:$0xff] %vm1233, %v1243
      $region136: #{_lambda_.3} parent=131 // pred_fallthru
        _
      %v1248 = vld [vmem:[#allocation2] sm:$0xff]
      %v1249 = vld [vmem:[%s1137] sm:$0xf]
      %v1250 = vld [vmem:[%s1147] sm:$0x1]
      %v1251 = vld [vmem:[%s1150] sm:$0x1]
      %vm1252 = vcmask 261120
      %v1253 = vsel %vm1252, %v1248, 0.0
      %1254 = vadd.xlane.f32.xlu0 %v1253
      %v1255 = vpop.xlane.xlu0 %1254
      %v1256 = vrcp.pop 32.0
      %v1257 = vmul.f32 %v1255, %v1256
      %v1258 = vsub.f32 %v1248, %v1257
      %v1259 = vmul.f32 %v1258, %v1258
      %v1260 = vsel %vm1252, %v1259, 0.0
      %1261 = vadd.xlane.f32.xlu0 %v1260
      %v1262 = vpop.xlane.xlu0 %1261
      %v1263 = vmul.f32 %v1262, %v1256
      %v1264 = vadd.f32 %v1263, 1e-05
      %v1265 = vrsqrt.pop %v1264
      %v1266 = vmul.f32 %v1258, %v1265
      %v1268 = vlaneseq
      %v1269 = vshrl.u32 %v1268, 7
      %v1270 = vsub.s32 0, %v1269
      %v1271 = vrot.slane %v1250, %v1270
      %v1273 = vmul.f32 %v1266, %v1271
      %v1275 = vlaneseq
      %v1276 = vshrl.u32 %v1275, 7
      %v1277 = vsub.s32 0, %v1276
      %v1278 = vrot.slane %v1251, %v1277
      %v1280 = vadd.f32 %v1273, %v1278
      %v1281 = vpack.c.bf16 %v1280, %v1280
      %v1282 = vld [vmem:[%s1155] sm:$0xf]
      %v1283 = vld [vmem:[%s1155 + $0x4] sm:$0xf]
      %v1284 = vld [vmem:[%s1155 + $0x8] sm:$0xf]
      %v1285 = vld [vmem:[%s1155 + $0xc] sm:$0xf]
      %v1286 = vld [vmem:[%s1158] sm:$0x1]
      %v1288 = vlaneseq
      %v1289 = vshrl.u32 %v1288, 7
      %v1290 = vsub.s32 0, %v1289
      %v1291 = vrot.slane %v1286, %v1290
      %v1297 = vunpack.c.l.b16 %v1282
      %v1298 = vunpack.c.l.b16 %v1283
      %v1299 = vunpack.c.l.b16 %v1284
      %v1300 = vunpack.c.l.b16 %v1285
      %v1301 = vpack.c.b16 %v1298, %v1297
      %v1302 = vpack.c.b16 %v1300, %v1299
      %v1306 = vsel %vm1252, %v1281, 0
      %1308 = vmatprep.subr.bf16.mxu0 0
      %1309 = vmatpush1.bf16.msra.mxu0 %v1301
      %1310 = vmatprep.subr.bf16.mxu0 0
      %1311 = vmatpush1.bf16.msra.mxu0 %v1302
      %1312 = vmatprep.subr.bf16.mxu0 0
      %1313 = vmatpush1.bf16.msra.mxu0 0
      %1314 = vmatprep.subr.bf16.mxu0 0
      %1315 = vmatpush1.bf16.msra.mxu0 0
      %1316 = vmatprep.subr.bf16.mxu0 0
      %1317 = vmatpush1.bf16.msra.mxu0 0
      %1318 = vmatprep.subr.bf16.mxu0 0
      %1319 = vmatpush1.bf16.msra.mxu0 0
      %1320 = vmatprep.subr.bf16.mxu0 0
      %1321 = vmatpush1.bf16.msra.mxu0 0
      %1322 = vmatprep.subr.bf16.mxu0 0
      %1323 = vmatpush1.bf16.msra.mxu0 0
      %1324 = vmatprep.subr.bf16.mxu0 0
      %1325 = vmatpush1.bf16.msra.mxu0 0
      %1326 = vmatprep.subr.bf16.mxu0 0
      %1327 = vmatpush1.bf16.msra.mxu0 0
      %1328 = vmatprep.subr.bf16.mxu0 0
      %1329 = vmatpush1.bf16.msra.mxu0 0
      %1330 = vmatprep.subr.bf16.mxu0 0
      %1331 = vmatpush1.bf16.msra.mxu0 0
      %1332 = vmatprep.subr.bf16.mxu0 0
      %1333 = vmatpush1.bf16.msra.mxu0 0
      %1334 = vmatprep.subr.bf16.mxu0 0
      %1335 = vmatpush1.bf16.msra.mxu0 0
      %1336 = vmatprep.subr.bf16.mxu0 0
      %1337 = vmatpush1.bf16.msra.mxu0 0
      %1338 = vmatprep.subr.bf16.mxu0 0
      %1339 = vmatpush1.bf16.msra.mxu0 0
      %1340 = vmatprep.mubr.bf16.mxu0 0
      %1341 = vmatmul.mubr.bf16.gmra.mrb[0].mxu0 %v1306
      %v1342 = vpop.f32.mrb[0].mxu0
      %v1343 = vadd.f32 %v1291, %v1342
      %v1344 = vpop.f32.mrb[0].mxu0
      %v1345 = vpop.f32.mrb[0].mxu0
      %v1346 = vpop.f32.mrb[0].mxu0
      %1347 = vdwg.mxu0
      %v1348 = vmul.f32 %v1343, 0.35355338
      %v1349 = vld [vmem:[%s1163] sm:$0xf]
      %v1350 = vld [vmem:[%s1163 + $0x4] sm:$0xf]
      %v1351 = vld [vmem:[%s1163 + $0x8] sm:$0xf]
      %v1352 = vld [vmem:[%s1163 + $0xc] sm:$0xf]
      %v1353 = vld [vmem:[#allocation3] sm:$0xff]
      %v1354 = vld [vmem:[#allocation3 + $0x8] sm:$0xff]
      %v1355 = vld [vmem:[#allocation3 + $0x10] sm:$0xff]
      %v1356 = vld [vmem:[#allocation3 + $0x18] sm:$0xff]
      %v1357 = vpack.c.bf16 %v1348, %v1348
      %v1358 = vpack.c.bf16 %v1343, %v1343
      %1360 = vrot.lane.b32.xlu0 %v1358, 96
      %v1361 = vpop.permute.xlu0 %1360
      %vm1362 = vcmask 64512
      %v1364 = vsel %vm1362, %v1357, 0
      %v1367 = vsel %vm1362, %v1361, 0
      %1369 = vmatprep.subr.bf16.mxu0 0
      %1370 = vmatpush1.bf16.xpose.msra.mxu0 %v1367
      %1371 = vmatprep.subr.bf16.mxu0 0
      %1372 = vmatpush1.bf16.xpose.msra.mxu0 0
      %1373 = vmatprep.subr.bf16.mxu0 0
      %1374 = vmatpush1.bf16.xpose.msra.mxu0 0
      %1375 = vmatprep.subr.bf16.mxu0 0
      %1376 = vmatpush1.bf16.xpose.msra.mxu0 0
      %1377 = vmatprep.subr.bf16.mxu0 0
      %1378 = vmatpush1.bf16.xpose.msra.mxu0 0
      %1379 = vmatprep.subr.bf16.mxu0 0
      %1380 = vmatpush1.bf16.xpose.msra.mxu0 0
      %1381 = vmatprep.subr.bf16.mxu0 0
      %1382 = vmatpush1.bf16.xpose.msra.mxu0 0
      %1383 = vmatprep.subr.bf16.mxu0 0
      %1384 = vmatpush1.bf16.xpose.msra.mxu0 0
      %1385 = vmatprep.subr.bf16.mxu0 0
      %1386 = vmatpush1.bf16.xpose.msra.mxu0 0
      %1387 = vmatprep.subr.bf16.mxu0 0
      %1388 = vmatpush1.bf16.xpose.msra.mxu0 0
      %1389 = vmatprep.subr.bf16.mxu0 0
      %1390 = vmatpush1.bf16.xpose.msra.mxu0 0
      %1391 = vmatprep.subr.bf16.mxu0 0
      %1392 = vmatpush1.bf16.xpose.msra.mxu0 0
      %1393 = vmatprep.subr.bf16.mxu0 0
      %1394 = vmatpush1.bf16.xpose.msra.mxu0 0
      %1395 = vmatprep.subr.bf16.mxu0 0
      %1396 = vmatpush1.bf16.xpose.msra.mxu0 0
      %1397 = vmatprep.subr.bf16.mxu0 0
      %1398 = vmatpush1.bf16.xpose.msra.mxu0 0
      %1399 = vmatprep.subr.bf16.mxu0 0
      %1400 = vmatpush1.bf16.xpose.msra.mxu0 0
      %1401 = vmatprep.mubr.bf16.mxu0 0
      %1402 = vmatmul.mubr.bf16.gmra.mrb[0].mxu0 %v1364
      %v1403 = vpop.f32.mrb[0].mxu0
      %v1404 = vadd.f32 0.0, %v1403
      %v1405 = vpop.f32.mrb[0].mxu0
      %v1406 = vpop.f32.mrb[0].mxu0
      %v1407 = vpop.f32.mrb[0].mxu0
      %1408 = vdwg.mxu0
      %1410 = vrot.lane.b32.xlu0 %v1357, 120
      %v1411 = vpop.permute.xlu0 %1410
      %1412 = vrot.lane.b32.xlu0 %v1358, 88
      %v1413 = vpop.permute.xlu0 %1412
      %v1415 = vsel %vm1362, %v1411, 0
      %v1418 = vsel %vm1362, %v1413, 0
      %1420 = vmatprep.subr.bf16.mxu0 0
      %1421 = vmatpush1.bf16.xpose.msra.mxu0 %v1418
      %1422 = vmatprep.subr.bf16.mxu0 0
      %1423 = vmatpush1.bf16.xpose.msra.mxu0 0
      %1424 = vmatprep.subr.bf16.mxu0 0
      %1425 = vmatpush1.bf16.xpose.msra.mxu0 0
      %1426 = vmatprep.subr.bf16.mxu0 0
      %1427 = vmatpush1.bf16.xpose.msra.mxu0 0
      %1428 = vmatprep.subr.bf16.mxu0 0
      %1429 = vmatpush1.bf16.xpose.msra.mxu0 0
      %1430 = vmatprep.subr.bf16.mxu0 0
      %1431 = vmatpush1.bf16.xpose.msra.mxu0 0
      %1432 = vmatprep.subr.bf16.mxu0 0
      %1433 = vmatpush1.bf16.xpose.msra.mxu0 0
      %1434 = vmatprep.subr.bf16.mxu0 0
      %1435 = vmatpush1.bf16.xpose.msra.mxu0 0
      %1436 = vmatprep.subr.bf16.mxu0 0
      %1437 = vmatpush1.bf16.xpose.msra.mxu0 0
      %1438 = vmatprep.subr.bf16.mxu0 0
      %1439 = vmatpush1.bf16.xpose.msra.mxu0 0
      %1440 = vmatprep.subr.bf16.mxu0 0
      %1441 = vmatpush1.bf16.xpose.msra.mxu0 0
      %1442 = vmatprep.subr.bf16.mxu0 0
      %1443 = vmatpush1.bf16.xpose.msra.mxu0 0
      %1444 = vmatprep.subr.bf16.mxu0 0
      %1445 = vmatpush1.bf16.xpose.msra.mxu0 0
      %1446 = vmatprep.subr.bf16.mxu0 0
      %1447 = vmatpush1.bf16.xpose.msra.mxu0 0
      %1448 = vmatprep.subr.bf16.mxu0 0
      %1449 = vmatpush1.bf16.xpose.msra.mxu0 0
      %1450 = vmatprep.subr.bf16.mxu0 0
      %1451 = vmatpush1.bf16.xpose.msra.mxu0 0
      %1452 = vmatprep.mubr.bf16.mxu0 0
      %1453 = vmatmul.mubr.bf16.gmra.mrb[0].mxu0 %v1415
      %v1454 = vpop.f32.mrb[0].mxu0
      %v1455 = vadd.f32 0.0, %v1454
      %v1456 = vpop.f32.mrb[0].mxu0
      %v1457 = vpop.f32.mrb[0].mxu0
      %v1458 = vpop.f32.mrb[0].mxu0
      %1459 = vdwg.mxu0
      %1460 = vrot.lane.b32.xlu0 %v1357, 112
      %v1461 = vpop.permute.xlu0 %1460
      %1462 = vrot.lane.b32.xlu0 %v1358, 80
      %v1463 = vpop.permute.xlu0 %1462
      %v1465 = vsel %vm1362, %v1461, 0
      %v1468 = vsel %vm1362, %v1463, 0
      %1470 = vmatprep.subr.bf16.mxu0 0
      %1471 = vmatpush1.bf16.xpose.msra.mxu0 %v1468
      %1472 = vmatprep.subr.bf16.mxu0 0
      %1473 = vmatpush1.bf16.xpose.msra.mxu0 0
      %1474 = vmatprep.subr.bf16.mxu0 0
      %1475 = vmatpush1.bf16.xpose.msra.mxu0 0
      %1476 = vmatprep.subr.bf16.mxu0 0
      %1477 = vmatpush1.bf16.xpose.msra.mxu0 0
      %1478 = vmatprep.subr.bf16.mxu0 0
      %1479 = vmatpush1.bf16.xpose.msra.mxu0 0
      %1480 = vmatprep.subr.bf16.mxu0 0
      %1481 = vmatpush1.bf16.xpose.msra.mxu0 0
      %1482 = vmatprep.subr.bf16.mxu0 0
      %1483 = vmatpush1.bf16.xpose.msra.mxu0 0
      %1484 = vmatprep.subr.bf16.mxu0 0
      %1485 = vmatpush1.bf16.xpose.msra.mxu0 0
      %1486 = vmatprep.subr.bf16.mxu0 0
      %1487 = vmatpush1.bf16.xpose.msra.mxu0 0
      %1488 = vmatprep.subr.bf16.mxu0 0
      %1489 = vmatpush1.bf16.xpose.msra.mxu0 0
      %1490 = vmatprep.subr.bf16.mxu0 0
      %1491 = vmatpush1.bf16.xpose.msra.mxu0 0
      %1492 = vmatprep.subr.bf16.mxu0 0
      %1493 = vmatpush1.bf16.xpose.msra.mxu0 0
      %1494 = vmatprep.subr.bf16.mxu0 0
      %1495 = vmatpush1.bf16.xpose.msra.mxu0 0
      %1496 = vmatprep.subr.bf16.mxu0 0
      %1497 = vmatpush1.bf16.xpose.msra.mxu0 0
      %1498 = vmatprep.subr.bf16.mxu0 0
      %1499 = vmatpush1.bf16.xpose.msra.mxu0 0
      %1500 = vmatprep.subr.bf16.mxu0 0
      %1501 = vmatpush1.bf16.xpose.msra.mxu0 0
      %1502 = vmatprep.mubr.bf16.mxu0 0
      %1503 = vmatmul.mubr.bf16.gmra.mrb[0].mxu0 %v1465
      %v1504 = vpop.f32.mrb[0].mxu0
      %v1505 = vadd.f32 0.0, %v1504
      %v1506 = vpop.f32.mrb[0].mxu0
      %v1507 = vpop.f32.mrb[0].mxu0
      %v1508 = vpop.f32.mrb[0].mxu0
      %1509 = vdwg.mxu0
      %1510 = vrot.lane.b32.xlu0 %v1357, 104
      %v1511 = vpop.permute.xlu0 %1510
      %1512 = vrot.lane.b32.xlu0 %v1358, 72
      %v1513 = vpop.permute.xlu0 %1512
      %v1515 = vsel %vm1362, %v1511, 0
      %v1518 = vsel %vm1362, %v1513, 0
      %1520 = vmatprep.subr.bf16.mxu0 0
      %1521 = vmatpush1.bf16.xpose.msra.mxu0 %v1518
      %1522 = vmatprep.subr.bf16.mxu0 0
      %1523 = vmatpush1.bf16.xpose.msra.mxu0 0
      %1524 = vmatprep.subr.bf16.mxu0 0
      %1525 = vmatpush1.bf16.xpose.msra.mxu0 0
      %1526 = vmatprep.subr.bf16.mxu0 0
      %1527 = vmatpush1.bf16.xpose.msra.mxu0 0
      %1528 = vmatprep.subr.bf16.mxu0 0
      %1529 = vmatpush1.bf16.xpose.msra.mxu0 0
      %1530 = vmatprep.subr.bf16.mxu0 0
      %1531 = vmatpush1.bf16.xpose.msra.mxu0 0
      %1532 = vmatprep.subr.bf16.mxu0 0
      %1533 = vmatpush1.bf16.xpose.msra.mxu0 0
      %1534 = vmatprep.subr.bf16.mxu0 0
      %1535 = vmatpush1.bf16.xpose.msra.mxu0 0
      %1536 = vmatprep.subr.bf16.mxu0 0
      %1537 = vmatpush1.bf16.xpose.msra.mxu0 0
      %1538 = vmatprep.subr.bf16.mxu0 0
      %1539 = vmatpush1.bf16.xpose.msra.mxu0 0
      %1540 = vmatprep.subr.bf16.mxu0 0
      %1541 = vmatpush1.bf16.xpose.msra.mxu0 0
      %1542 = vmatprep.subr.bf16.mxu0 0
      %1543 = vmatpush1.bf16.xpose.msra.mxu0 0
      %1544 = vmatprep.subr.bf16.mxu0 0
      %1545 = vmatpush1.bf16.xpose.msra.mxu0 0
      %1546 = vmatprep.subr.bf16.mxu0 0
      %1547 = vmatpush1.bf16.xpose.msra.mxu0 0
      %1548 = vmatprep.subr.bf16.mxu0 0
      %1549 = vmatpush1.bf16.xpose.msra.mxu0 0
      %1550 = vmatprep.subr.bf16.mxu0 0
      %1551 = vmatpush1.bf16.xpose.msra.mxu0 0
      %1552 = vmatprep.mubr.bf16.mxu0 0
      %1553 = vmatmul.mubr.bf16.gmra.mrb[0].mxu0 %v1515
      %v1554 = vpop.f32.mrb[0].mxu0
      %v1555 = vadd.f32 0.0, %v1554
      %v1556 = vpop.f32.mrb[0].mxu0
      %v1557 = vpop.f32.mrb[0].mxu0
      %v1558 = vpop.f32.mrb[0].mxu0
      %1559 = vdwg.mxu0
      %v1560 = vadd.f32 %v1404, %v1353
      %v1561 = vadd.f32 %v1455, %v1354
      %v1562 = vadd.f32 %v1505, %v1355
      %v1563 = vadd.f32 %v1555, %v1356
      %v1564 = vsel %vm1362, %v1560, -inf
      %1565 = vmax.xlane.f32.xlu0 %v1564
      %v1566 = vpop.xlane.xlu0 %1565
      %v1567 = vsel %vm1362, %v1561, -inf
      %1568 = vmax.xlane.f32.xlu0 %v1567
      %v1569 = vpop.xlane.xlu0 %1568
      %v1570 = vsel %vm1362, %v1562, -inf
      %1571 = vmax.xlane.f32.xlu0 %v1570
      %v1572 = vpop.xlane.xlu0 %1571
      %v1573 = vsel %vm1362, %v1563, -inf
      %1574 = vmax.xlane.f32.xlu0 %v1573
      %v1575 = vpop.xlane.xlu0 %1574
      %v1576 = vsub.f32 %v1560, %v1566
      %v1577 = vsub.f32 %v1561, %v1569
      %v1578 = vsub.f32 %v1562, %v1572
      %v1579 = vsub.f32 %v1563, %v1575
      %v1580 = vmul.f32 %v1576, 1.442695
      %v1581 = vpow.pop %v1580
      %v1582 = vmul.f32 %v1577, 1.442695
      %v1583 = vpow.pop %v1582
      %v1584 = vmul.f32 %v1578, 1.442695
      %v1585 = vpow.pop %v1584
      %v1586 = vmul.f32 %v1579, 1.442695
      %v1587 = vpow.pop %v1586
      %v1588 = vsel %vm1362, %v1581, 0.0
      %1589 = vadd.xlane.f32.xlu0 %v1588
      %v1590 = vpop.xlane.xlu0 %1589
      %v1591 = vsel %vm1362, %v1583, 0.0
      %1592 = vadd.xlane.f32.xlu0 %v1591
      %v1593 = vpop.xlane.xlu0 %1592
      %v1594 = vsel %vm1362, %v1585, 0.0
      %1595 = vadd.xlane.f32.xlu0 %v1594
      %v1596 = vpop.xlane.xlu0 %1595
      %v1597 = vsel %vm1362, %v1587, 0.0
      %1598 = vadd.xlane.f32.xlu0 %v1597
      %v1599 = vpop.xlane.xlu0 %1598
      %v1600 = vrcp.pop %v1590
      %v1601 = vrcp.pop %v1593
      %v1602 = vrcp.pop %v1596
      %v1603 = vrcp.pop %v1599
      %v1604 = vmul.f32 %v1581, %v1600
      %v1605 = vmul.f32 %v1583, %v1601
      %v1606 = vmul.f32 %v1585, %v1602
      %v1607 = vmul.f32 %v1587, %v1603
      %v1608 = vpack.c.bf16 %v1605, %v1604
      %v1609 = vpack.c.bf16 %v1607, %v1606
      %1610 = vrot.lane.b32.xlu0 %v1358, 64
      %v1611 = vpop.permute.xlu0 %1610
      %v1613 = vsel %vm1362, %v1608, 0
      %vm1615 = vcmask 1043456
      %v1617 = vsel %vm1615, %v1611, 0
      %1619 = vmatprep.subr.bf16.mxu0 0
      %1620 = vmatpush1.bf16.msra.mxu0 %v1617
      %1621 = vmatprep.subr.bf16.mxu0 0
      %1622 = vmatpush1.bf16.msra.mxu0 0
      %1623 = vmatprep.subr.bf16.mxu0 0
      %1624 = vmatpush1.bf16.msra.mxu0 0
      %1625 = vmatprep.subr.bf16.mxu0 0
      %1626 = vmatpush1.bf16.msra.mxu0 0
      %1627 = vmatprep.subr.bf16.mxu0 0
      %1628 = vmatpush1.bf16.msra.mxu0 0
      %1629 = vmatprep.subr.bf16.mxu0 0
      %1630 = vmatpush1.bf16.msra.mxu0 0
      %1631 = vmatprep.subr.bf16.mxu0 0
      %1632 = vmatpush1.bf16.msra.mxu0 0
      %1633 = vmatprep.subr.bf16.mxu0 0
      %1634 = vmatpush1.bf16.msra.mxu0 0
      %1635 = vmatprep.subr.bf16.mxu0 0
      %1636 = vmatpush1.bf16.msra.mxu0 0
      %1637 = vmatprep.subr.bf16.mxu0 0
      %1638 = vmatpush1.bf16.msra.mxu0 0
      %1639 = vmatprep.subr.bf16.mxu0 0
      %1640 = vmatpush1.bf16.msra.mxu0 0
      %1641 = vmatprep.subr.bf16.mxu0 0
      %1642 = vmatpush1.bf16.msra.mxu0 0
      %1643 = vmatprep.subr.bf16.mxu0 0
      %1644 = vmatpush1.bf16.msra.mxu0 0
      %1645 = vmatprep.subr.bf16.mxu0 0
      %1646 = vmatpush1.bf16.msra.mxu0 0
      %1647 = vmatprep.subr.bf16.mxu0 0
      %1648 = vmatpush1.bf16.msra.mxu0 0
      %1649 = vmatprep.subr.bf16.mxu0 0
      %1650 = vmatpush1.bf16.msra.mxu0 0
      %1651 = vmatprep.mubr.bf16.mxu0 0
      %1652 = vmatmul.mubr.bf16.gmra.mrb[0].mxu0 %v1613
      %v1653 = vpop.f32.mrb[0].mxu0
      %v1654 = vadd.f32 0.0, %v1653
      %v1655 = vpop.f32.mrb[0].mxu0
      %v1656 = vpop.f32.mrb[0].mxu0
      %v1657 = vpop.f32.mrb[0].mxu0
      %1658 = vdwg.mxu0
      %v1660 = vrot.slane %v1608, 4
      %1661 = vrot.lane.b32.xlu0 %v1358, 56
      %v1662 = vpop.permute.xlu0 %1661
      %v1664 = vsel %vm1362, %v1660, 0
      %v1667 = vsel %vm1615, %v1662, 0
      %1669 = vmatprep.subr.bf16.mxu0 0
      %1670 = vmatpush1.bf16.msra.mxu0 %v1667
      %1671 = vmatprep.subr.bf16.mxu0 0
      %1672 = vmatpush1.bf16.msra.mxu0 0
      %1673 = vmatprep.subr.bf16.mxu0 0
      %1674 = vmatpush1.bf16.msra.mxu0 0
      %1675 = vmatprep.subr.bf16.mxu0 0
      %1676 = vmatpush1.bf16.msra.mxu0 0
      %1677 = vmatprep.subr.bf16.mxu0 0
      %1678 = vmatpush1.bf16.msra.mxu0 0
      %1679 = vmatprep.subr.bf16.mxu0 0
      %1680 = vmatpush1.bf16.msra.mxu0 0
      %1681 = vmatprep.subr.bf16.mxu0 0
      %1682 = vmatpush1.bf16.msra.mxu0 0
      %1683 = vmatprep.subr.bf16.mxu0 0
      %1684 = vmatpush1.bf16.msra.mxu0 0
      %1685 = vmatprep.subr.bf16.mxu0 0
      %1686 = vmatpush1.bf16.msra.mxu0 0
      %1687 = vmatprep.subr.bf16.mxu0 0
      %1688 = vmatpush1.bf16.msra.mxu0 0
      %1689 = vmatprep.subr.bf16.mxu0 0
      %1690 = vmatpush1.bf16.msra.mxu0 0
      %1691 = vmatprep.subr.bf16.mxu0 0
      %1692 = vmatpush1.bf16.msra.mxu0 0
      %1693 = vmatprep.subr.bf16.mxu0 0
      %1694 = vmatpush1.bf16.msra.mxu0 0
      %1695 = vmatprep.subr.bf16.mxu0 0
      %1696 = vmatpush1.bf16.msra.mxu0 0
      %1697 = vmatprep.subr.bf16.mxu0 0
      %1698 = vmatpush1.bf16.msra.mxu0 0
      %1699 = vmatprep.subr.bf16.mxu0 0
      %1700 = vmatpush1.bf16.msra.mxu0 0
      %1701 = vmatprep.mubr.bf16.mxu0 0
      %1702 = vmatmul.mubr.bf16.gmra.mrb[0].mxu0 %v1664
      %v1703 = vpop.f32.mrb[0].mxu0
      %v1704 = vadd.f32 0.0, %v1703
      %v1705 = vpop.f32.mrb[0].mxu0
      %v1706 = vpop.f32.mrb[0].mxu0
      %v1707 = vpop.f32.mrb[0].mxu0
      %1708 = vdwg.mxu0
      %1709 = vrot.lane.b32.xlu0 %v1358, 48
      %v1710 = vpop.permute.xlu0 %1709
      %v1712 = vsel %vm1362, %v1609, 0
      %v1715 = vsel %vm1615, %v1710, 0
      %1717 = vmatprep.subr.bf16.mxu0 0
      %1718 = vmatpush1.bf16.msra.mxu0 %v1715
      %1719 = vmatprep.subr.bf16.mxu0 0
      %1720 = vmatpush1.bf16.msra.mxu0 0
      %1721 = vmatprep.subr.bf16.mxu0 0
      %1722 = vmatpush1.bf16.msra.mxu0 0
      %1723 = vmatprep.subr.bf16.mxu0 0
      %1724 = vmatpush1.bf16.msra.mxu0 0
      %1725 = vmatprep.subr.bf16.mxu0 0
      %1726 = vmatpush1.bf16.msra.mxu0 0
      %1727 = vmatprep.subr.bf16.mxu0 0
      %1728 = vmatpush1.bf16.msra.mxu0 0
      %1729 = vmatprep.subr.bf16.mxu0 0
      %1730 = vmatpush1.bf16.msra.mxu0 0
      %1731 = vmatprep.subr.bf16.mxu0 0
      %1732 = vmatpush1.bf16.msra.mxu0 0
      %1733 = vmatprep.subr.bf16.mxu0 0
      %1734 = vmatpush1.bf16.msra.mxu0 0
      %1735 = vmatprep.subr.bf16.mxu0 0
      %1736 = vmatpush1.bf16.msra.mxu0 0
      %1737 = vmatprep.subr.bf16.mxu0 0
      %1738 = vmatpush1.bf16.msra.mxu0 0
      %1739 = vmatprep.subr.bf16.mxu0 0
      %1740 = vmatpush1.bf16.msra.mxu0 0
      %1741 = vmatprep.subr.bf16.mxu0 0
      %1742 = vmatpush1.bf16.msra.mxu0 0
      %1743 = vmatprep.subr.bf16.mxu0 0
      %1744 = vmatpush1.bf16.msra.mxu0 0
      %1745 = vmatprep.subr.bf16.mxu0 0
      %1746 = vmatpush1.bf16.msra.mxu0 0
      %1747 = vmatprep.subr.bf16.mxu0 0
      %1748 = vmatpush1.bf16.msra.mxu0 0
      %1749 = vmatprep.mubr.bf16.mxu0 0
      %1750 = vmatmul.mubr.bf16.gmra.mrb[0].mxu0 %v1712
      %v1751 = vpop.f32.mrb[0].mxu0
      %v1752 = vadd.f32 0.0, %v1751
      %v1753 = vpop.f32.mrb[0].mxu0
      %v1754 = vpop.f32.mrb[0].mxu0
      %v1755 = vpop.f32.mrb[0].mxu0
      %1756 = vdwg.mxu0
      %v1758 = vrot.slane %v1609, 4
      %1759 = vrot.lane.b32.xlu0 %v1358, 40
      %v1760 = vpop.permute.xlu0 %1759
      %v1762 = vsel %vm1362, %v1758, 0
      %v1765 = vsel %vm1615, %v1760, 0
      %1767 = vmatprep.subr.bf16.mxu0 0
      %1768 = vmatpush1.bf16.msra.mxu0 %v1765
      %1769 = vmatprep.subr.bf16.mxu0 0
      %1770 = vmatpush1.bf16.msra.mxu0 0
      %1771 = vmatprep.subr.bf16.mxu0 0
      %1772 = vmatpush1.bf16.msra.mxu0 0
      %1773 = vmatprep.subr.bf16.mxu0 0
      %1774 = vmatpush1.bf16.msra.mxu0 0
      %1775 = vmatprep.subr.bf16.mxu0 0
      %1776 = vmatpush1.bf16.msra.mxu0 0
      %1777 = vmatprep.subr.bf16.mxu0 0
      %1778 = vmatpush1.bf16.msra.mxu0 0
      %1779 = vmatprep.subr.bf16.mxu0 0
      %1780 = vmatpush1.bf16.msra.mxu0 0
      %1781 = vmatprep.subr.bf16.mxu0 0
      %1782 = vmatpush1.bf16.msra.mxu0 0
      %1783 = vmatprep.subr.bf16.mxu0 0
      %1784 = vmatpush1.bf16.msra.mxu0 0
      %1785 = vmatprep.subr.bf16.mxu0 0
      %1786 = vmatpush1.bf16.msra.mxu0 0
      %1787 = vmatprep.subr.bf16.mxu0 0
      %1788 = vmatpush1.bf16.msra.mxu0 0
      %1789 = vmatprep.subr.bf16.mxu0 0
      %1790 = vmatpush1.bf16.msra.mxu0 0
      %1791 = vmatprep.subr.bf16.mxu0 0
      %1792 = vmatpush1.bf16.msra.mxu0 0
      %1793 = vmatprep.subr.bf16.mxu0 0
      %1794 = vmatpush1.bf16.msra.mxu0 0
      %1795 = vmatprep.subr.bf16.mxu0 0
      %1796 = vmatpush1.bf16.msra.mxu0 0
      %1797 = vmatprep.subr.bf16.mxu0 0
      %1798 = vmatpush1.bf16.msra.mxu0 0
      %1799 = vmatprep.mubr.bf16.mxu0 0
      %1800 = vmatmul.mubr.bf16.gmra.mrb[0].mxu0 %v1762
      %v1801 = vpop.f32.mrb[0].mxu0
      %v1802 = vadd.f32 0.0, %v1801
      %v1803 = vpop.f32.mrb[0].mxu0
      %v1804 = vpop.f32.mrb[0].mxu0
      %v1805 = vpop.f32.mrb[0].mxu0
      %1806 = vdwg.mxu0
      %1808 = vrot.lane.b32.xlu0 %v1704, 8
      %v1809 = vpop.permute.xlu0 %1808
      %1812 = vrot.lane.b32.xlu0 %v1752, 16
      %v1813 = vpop.permute.xlu0 %1812
      %1816 = vrot.lane.b32.xlu0 %v1802, 24
      %v1817 = vpop.permute.xlu0 %1816
      %v1819 = vsel %vm1362, %v1654, %v1809
      %vm1820 = vcmask 130048
      %v1821 = vsel %vm1820, %v1819, %v1813
      %vm1822 = vcmask 195584
      %v1823 = vsel %vm1822, %v1821, %v1817
      %v1824 = vpack.c.bf16 %v1823, %v1823
      %v1829 = vunpack.c.l.b16 %v1349
      %v1830 = vunpack.c.l.b16 %v1350
      %v1831 = vunpack.c.l.b16 %v1351
      %v1832 = vunpack.c.l.b16 %v1352
      %v1833 = vpack.c.b16 %v1830, %v1829
      %v1834 = vpack.c.b16 %v1832, %v1831
      %v1838 = vsel %vm1252, %v1824, 0
      %1840 = vmatprep.subr.bf16.mxu0 0
      %1841 = vmatpush1.bf16.msra.mxu0 %v1833
      %1842 = vmatprep.subr.bf16.mxu0 0
      %1843 = vmatpush1.bf16.msra.mxu0 %v1834
      %1844 = vmatprep.subr.bf16.mxu0 0
      %1845 = vmatpush1.bf16.msra.mxu0 0
      %1846 = vmatprep.subr.bf16.mxu0 0
      %1847 = vmatpush1.bf16.msra.mxu0 0
      %1848 = vmatprep.subr.bf16.mxu0 0
      %1849 = vmatpush1.bf16.msra.mxu0 0
      %1850 = vmatprep.subr.bf16.mxu0 0
      %1851 = vmatpush1.bf16.msra.mxu0 0
      %1852 = vmatprep.subr.bf16.mxu0 0
      %1853 = vmatpush1.bf16.msra.mxu0 0
      %1854 = vmatprep.subr.bf16.mxu0 0
      %1855 = vmatpush1.bf16.msra.mxu0 0
      %1856 = vmatprep.subr.bf16.mxu0 0
      %1857 = vmatpush1.bf16.msra.mxu0 0
      %1858 = vmatprep.subr.bf16.mxu0 0
      %1859 = vmatpush1.bf16.msra.mxu0 0
      %1860 = vmatprep.subr.bf16.mxu0 0
      %1861 = vmatpush1.bf16.msra.mxu0 0
      %1862 = vmatprep.subr.bf16.mxu0 0
      %1863 = vmatpush1.bf16.msra.mxu0 0
      %1864 = vmatprep.subr.bf16.mxu0 0
      %1865 = vmatpush1.bf16.msra.mxu0 0
      %1866 = vmatprep.subr.bf16.mxu0 0
      %1867 = vmatpush1.bf16.msra.mxu0 0
      %1868 = vmatprep.subr.bf16.mxu0 0
      %1869 = vmatpush1.bf16.msra.mxu0 0
      %1870 = vmatprep.subr.bf16.mxu0 0
      %1871 = vmatpush1.bf16.msra.mxu0 0
      %1872 = vmatprep.mubr.bf16.mxu0 0
      %1873 = vmatmul.mubr.bf16.gmra.mrb[0].mxu0 %v1838
      %v1874 = vpop.f32.mrb[0].mxu0
      %v1875 = vadd.f32 0.0, %v1874
      %v1876 = vpop.f32.mrb[0].mxu0
      %v1877 = vpop.f32.mrb[0].mxu0
      %v1878 = vpop.f32.mrb[0].mxu0
      %1879 = vdwg.mxu0
      %v1880 = vadd.f32 %v1248, %v1875
      %v1881 = vld [vmem:[%s1166] sm:$0x1]
      %v1883 = vlaneseq
      %v1884 = vshrl.u32 %v1883, 7
      %v1885 = vsub.s32 0, %v1884
      %v1886 = vrot.slane %v1881, %v1885
      %v1888 = vadd.f32 %v1880, %v1886
      %v1889 = vld [vmem:[%s1169] sm:$0x1]
      %v1890 = vld [vmem:[%s1172] sm:$0x1]
      %v1891 = vsel %vm1252, %v1888, 0.0
      %1892 = vadd.xlane.f32.xlu0 %v1891
      %v1893 = vpop.xlane.xlu0 %1892
      %v1894 = vmul.f32 %v1893, %v1256
      %v1895 = vsub.f32 %v1888, %v1894
      %v1896 = vmul.f32 %v1895, %v1895
      %v1897 = vsel %vm1252, %v1896, 0.0
      %1898 = vadd.xlane.f32.xlu0 %v1897
      %v1899 = vpop.xlane.xlu0 %1898
      %v1900 = vmul.f32 %v1899, %v1256
      %v1901 = vadd.f32 %v1900, 1e-05
      %v1902 = vrsqrt.pop %v1901
      %v1903 = vmul.f32 %v1895, %v1902
      %v1905 = vlaneseq
      %v1906 = vshrl.u32 %v1905, 7
      %v1907 = vsub.s32 0, %v1906
      %v1908 = vrot.slane %v1889, %v1907
      %v1910 = vmul.f32 %v1903, %v1908
      %v1912 = vlaneseq
      %v1913 = vshrl.u32 %v1912, 7
      %v1914 = vsub.s32 0, %v1913
      %v1915 = vrot.slane %v1890, %v1914
      %v1917 = vadd.f32 %v1910, %v1915
      %v1918 = vpack.c.bf16 %v1917, %v1917
      %v1919 = vld [vmem:[%s1177] sm:$0xf]
      %v1920 = vld [vmem:[%s1177 + $0x4] sm:$0xf]
      %v1921 = vld [vmem:[%s1177 + $0x8] sm:$0xf]
      %v1922 = vld [vmem:[%s1177 + $0xc] sm:$0xf]
      %v1923 = vld [vmem:[%s1180] sm:$0x1]
      %v1925 = vlaneseq
      %v1926 = vshrl.u32 %v1925, 7
      %v1927 = vsub.s32 0, %v1926
      %v1928 = vrot.slane %v1923, %v1927
      %v1934 = vunpack.c.l.b16 %v1919
      %v1935 = vunpack.c.l.b16 %v1920
      %v1936 = vunpack.c.l.b16 %v1921
      %v1937 = vunpack.c.l.b16 %v1922
      %v1938 = vpack.c.b16 %v1935, %v1934
      %v1939 = vpack.c.b16 %v1937, %v1936
      %v1943 = vsel %vm1252, %v1918, 0
      %1945 = vmatprep.subr.bf16.mxu0 0
      %1946 = vmatpush1.bf16.msra.mxu0 %v1938
      %1947 = vmatprep.subr.bf16.mxu0 0
      %1948 = vmatpush1.bf16.msra.mxu0 %v1939
      %1949 = vmatprep.subr.bf16.mxu0 0
      %1950 = vmatpush1.bf16.msra.mxu0 0
      %1951 = vmatprep.subr.bf16.mxu0 0
      %1952 = vmatpush1.bf16.msra.mxu0 0
      %1953 = vmatprep.subr.bf16.mxu0 0
      %1954 = vmatpush1.bf16.msra.mxu0 0
      %1955 = vmatprep.subr.bf16.mxu0 0
      %1956 = vmatpush1.bf16.msra.mxu0 0
      %1957 = vmatprep.subr.bf16.mxu0 0
      %1958 = vmatpush1.bf16.msra.mxu0 0
      %1959 = vmatprep.subr.bf16.mxu0 0
      %1960 = vmatpush1.bf16.msra.mxu0 0
      %1961 = vmatprep.subr.bf16.mxu0 0
      %1962 = vmatpush1.bf16.msra.mxu0 0
      %1963 = vmatprep.subr.bf16.mxu0 0
      %1964 = vmatpush1.bf16.msra.mxu0 0
      %1965 = vmatprep.subr.bf16.mxu0 0
      %1966 = vmatpush1.bf16.msra.mxu0 0
      %1967 = vmatprep.subr.bf16.mxu0 0
      %1968 = vmatpush1.bf16.msra.mxu0 0
      %1969 = vmatprep.subr.bf16.mxu0 0
      %1970 = vmatpush1.bf16.msra.mxu0 0
      %1971 = vmatprep.subr.bf16.mxu0 0
      %1972 = vmatpush1.bf16.msra.mxu0 0
      %1973 = vmatprep.subr.bf16.mxu0 0
      %1974 = vmatpush1.bf16.msra.mxu0 0
      %1975 = vmatprep.subr.bf16.mxu0 0
      %1976 = vmatpush1.bf16.msra.mxu0 0
      %1977 = vmatprep.mubr.bf16.mxu0 0
      %1978 = vmatmul.mubr.bf16.gmra.mrb[0].mxu0 %v1943
      %v1979 = vpop.f32.mrb[0].mxu0
      %v1980 = vadd.f32 %v1928, %v1979
      %v1981 = vpop.f32.mrb[0].mxu0
      %v1982 = vpop.f32.mrb[0].mxu0
      %v1983 = vpop.f32.mrb[0].mxu0
      %1984 = vdwg.mxu0
      %v1985 = vld [vmem:[%s1185] sm:$0xf]
      %v1986 = vld [vmem:[%s1185 + $0x4] sm:$0xf]
      %v1987 = vld [vmem:[%s1185 + $0x8] sm:$0xf]
      %v1988 = vld [vmem:[%s1185 + $0xc] sm:$0xf]
      %v1989 = vld [vmem:[%s1188] sm:$0x1]
      %v1991 = vlaneseq
      %v1992 = vshrl.u32 %v1991, 7
      %v1993 = vsub.s32 0, %v1992
      %v1994 = vrot.slane %v1989, %v1993
      %v2000 = vunpack.c.l.b16 %v1985
      %v2001 = vunpack.c.l.b16 %v1986
      %v2002 = vunpack.c.l.b16 %v1987
      %v2003 = vunpack.c.l.b16 %v1988
      %v2004 = vpack.c.b16 %v2001, %v2000
      %v2005 = vpack.c.b16 %v2003, %v2002
      %v2009 = vsel %vm1252, %v1249, 0
      %2011 = vmatprep.subr.bf16.mxu0 0
      %2012 = vmatpush1.bf16.msra.mxu0 %v2004
      %2013 = vmatprep.subr.bf16.mxu0 0
      %2014 = vmatpush1.bf16.msra.mxu0 %v2005
      %2015 = vmatprep.subr.bf16.mxu0 0
      %2016 = vmatpush1.bf16.msra.mxu0 0
      %2017 = vmatprep.subr.bf16.mxu0 0
      %2018 = vmatpush1.bf16.msra.mxu0 0
      %2019 = vmatprep.subr.bf16.mxu0 0
      %2020 = vmatpush1.bf16.msra.mxu0 0
      %2021 = vmatprep.subr.bf16.mxu0 0
      %2022 = vmatpush1.bf16.msra.mxu0 0
      %2023 = vmatprep.subr.bf16.mxu0 0
      %2024 = vmatpush1.bf16.msra.mxu0 0
      %2025 = vmatprep.subr.bf16.mxu0 0
      %2026 = vmatpush1.bf16.msra.mxu0 0
      %2027 = vmatprep.subr.bf16.mxu0 0
      %2028 = vmatpush1.bf16.msra.mxu0 0
      %2029 = vmatprep.subr.bf16.mxu0 0
      %2030 = vmatpush1.bf16.msra.mxu0 0
      %2031 = vmatprep.subr.bf16.mxu0 0
      %2032 = vmatpush1.bf16.msra.mxu0 0
      %2033 = vmatprep.subr.bf16.mxu0 0
      %2034 = vmatpush1.bf16.msra.mxu0 0
      %2035 = vmatprep.subr.bf16.mxu0 0
      %2036 = vmatpush1.bf16.msra.mxu0 0
      %2037 = vmatprep.subr.bf16.mxu0 0
      %2038 = vmatpush1.bf16.msra.mxu0 0
      %2039 = vmatprep.subr.bf16.mxu0 0
      %2040 = vmatpush1.bf16.msra.mxu0 0
      %2041 = vmatprep.subr.bf16.mxu0 0
      %2042 = vmatpush1.bf16.msra.mxu0 0
      %2043 = vmatprep.mubr.bf16.mxu0 0
      %2044 = vmatmul.mubr.bf16.gmra.mrb[0].mxu0 %v2009
      %v2045 = vpop.f32.mrb[0].mxu0
      %v2046 = vadd.f32 %v1994, %v2045
      %v2047 = vpop.f32.mrb[0].mxu0
      %v2048 = vpop.f32.mrb[0].mxu0
      %v2049 = vpop.f32.mrb[0].mxu0
      %2050 = vdwg.mxu0
      %v2051 = vmul.f32 %v1980, 0.35355338
      %v2052 = vld [vmem:[%s1193] sm:$0xf]
      %v2053 = vld [vmem:[%s1193 + $0x4] sm:$0xf]
      %v2054 = vld [vmem:[%s1193 + $0x8] sm:$0xf]
      %v2055 = vld [vmem:[%s1193 + $0xc] sm:$0xf]
      %v2056 = vld [vmem:[#allocation4] sm:$0xff]
      %v2057 = vld [vmem:[#allocation4 + $0x8] sm:$0xff]
      %v2058 = vld [vmem:[#allocation4 + $0x10] sm:$0xff]
      %v2059 = vld [vmem:[#allocation4 + $0x18] sm:$0xff]
      %v2060 = vpack.c.bf16 %v2051, %v2051
      %v2061 = vpack.c.bf16 %v2046, %v2046
      %v2063 = vsel %vm1362, %v2060, 0
      %v2066 = vsel %vm1362, %v2061, 0
      %2068 = vmatprep.subr.bf16.mxu0 0
      %2069 = vmatpush1.bf16.xpose.msra.mxu0 %v2066
      %2070 = vmatprep.subr.bf16.mxu0 0
      %2071 = vmatpush1.bf16.xpose.msra.mxu0 0
      %2072 = vmatprep.subr.bf16.mxu0 0
      %2073 = vmatpush1.bf16.xpose.msra.mxu0 0
      %2074 = vmatprep.subr.bf16.mxu0 0
      %2075 = vmatpush1.bf16.xpose.msra.mxu0 0
      %2076 = vmatprep.subr.bf16.mxu0 0
      %2077 = vmatpush1.bf16.xpose.msra.mxu0 0
      %2078 = vmatprep.subr.bf16.mxu0 0
      %2079 = vmatpush1.bf16.xpose.msra.mxu0 0
      %2080 = vmatprep.subr.bf16.mxu0 0
      %2081 = vmatpush1.bf16.xpose.msra.mxu0 0
      %2082 = vmatprep.subr.bf16.mxu0 0
      %2083 = vmatpush1.bf16.xpose.msra.mxu0 0
      %2084 = vmatprep.subr.bf16.mxu0 0
      %2085 = vmatpush1.bf16.xpose.msra.mxu0 0
      %2086 = vmatprep.subr.bf16.mxu0 0
      %2087 = vmatpush1.bf16.xpose.msra.mxu0 0
      %2088 = vmatprep.subr.bf16.mxu0 0
      %2089 = vmatpush1.bf16.xpose.msra.mxu0 0
      %2090 = vmatprep.subr.bf16.mxu0 0
      %2091 = vmatpush1.bf16.xpose.msra.mxu0 0
      %2092 = vmatprep.subr.bf16.mxu0 0
      %2093 = vmatpush1.bf16.xpose.msra.mxu0 0
      %2094 = vmatprep.subr.bf16.mxu0 0
      %2095 = vmatpush1.bf16.xpose.msra.mxu0 0
      %2096 = vmatprep.subr.bf16.mxu0 0
      %2097 = vmatpush1.bf16.xpose.msra.mxu0 0
      %2098 = vmatprep.subr.bf16.mxu0 0
      %2099 = vmatpush1.bf16.xpose.msra.mxu0 0
      %2100 = vmatprep.mubr.bf16.mxu0 0
      %2101 = vmatmul.mubr.bf16.gmra.mrb[0].mxu0 %v2063
      %v2102 = vpop.f32.mrb[0].mxu0
      %v2103 = vadd.f32 0.0, %v2102
      %v2104 = vpop.f32.mrb[0].mxu0
      %v2105 = vpop.f32.mrb[0].mxu0
      %v2106 = vpop.f32.mrb[0].mxu0
      %2107 = vdwg.mxu0
      %2109 = vrot.lane.b32.xlu0 %v2060, 120
      %v2110 = vpop.permute.xlu0 %2109
      %2112 = vrot.lane.b32.xlu0 %v2061, 120
      %v2113 = vpop.permute.xlu0 %2112
      %v2115 = vsel %vm1362, %v2110, 0
      %v2118 = vsel %vm1362, %v2113, 0
      %2120 = vmatprep.subr.bf16.mxu0 0
      %2121 = vmatpush1.bf16.xpose.msra.mxu0 %v2118
      %2122 = vmatprep.subr.bf16.mxu0 0
      %2123 = vmatpush1.bf16.xpose.msra.mxu0 0
      %2124 = vmatprep.subr.bf16.mxu0 0
      %2125 = vmatpush1.bf16.xpose.msra.mxu0 0
      %2126 = vmatprep.subr.bf16.mxu0 0
      %2127 = vmatpush1.bf16.xpose.msra.mxu0 0
      %2128 = vmatprep.subr.bf16.mxu0 0
      %2129 = vmatpush1.bf16.xpose.msra.mxu0 0
      %2130 = vmatprep.subr.bf16.mxu0 0
      %2131 = vmatpush1.bf16.xpose.msra.mxu0 0
      %2132 = vmatprep.subr.bf16.mxu0 0
      %2133 = vmatpush1.bf16.xpose.msra.mxu0 0
      %2134 = vmatprep.subr.bf16.mxu0 0
      %2135 = vmatpush1.bf16.xpose.msra.mxu0 0
      %2136 = vmatprep.subr.bf16.mxu0 0
      %2137 = vmatpush1.bf16.xpose.msra.mxu0 0
      %2138 = vmatprep.subr.bf16.mxu0 0
      %2139 = vmatpush1.bf16.xpose.msra.mxu0 0
      %2140 = vmatprep.subr.bf16.mxu0 0
      %2141 = vmatpush1.bf16.xpose.msra.mxu0 0
      %2142 = vmatprep.subr.bf16.mxu0 0
      %2143 = vmatpush1.bf16.xpose.msra.mxu0 0
      %2144 = vmatprep.subr.bf16.mxu0 0
      %2145 = vmatpush1.bf16.xpose.msra.mxu0 0
      %2146 = vmatprep.subr.bf16.mxu0 0
      %2147 = vmatpush1.bf16.xpose.msra.mxu0 0
      %2148 = vmatprep.subr.bf16.mxu0 0
      %2149 = vmatpush1.bf16.xpose.msra.mxu0 0
      %2150 = vmatprep.subr.bf16.mxu0 0
      %2151 = vmatpush1.bf16.xpose.msra.mxu0 0
      %2152 = vmatprep.mubr.bf16.mxu0 0
      %2153 = vmatmul.mubr.bf16.gmra.mrb[0].mxu0 %v2115
      %v2154 = vpop.f32.mrb[0].mxu0
      %v2155 = vadd.f32 0.0, %v2154
      %v2156 = vpop.f32.mrb[0].mxu0
      %v2157 = vpop.f32.mrb[0].mxu0
      %v2158 = vpop.f32.mrb[0].mxu0
      %2159 = vdwg.mxu0
      %2160 = vrot.lane.b32.xlu0 %v2060, 112
      %v2161 = vpop.permute.xlu0 %2160
      %2162 = vrot.lane.b32.xlu0 %v2061, 112
      %v2163 = vpop.permute.xlu0 %2162
      %v2165 = vsel %vm1362, %v2161, 0
      %v2168 = vsel %vm1362, %v2163, 0
      %2170 = vmatprep.subr.bf16.mxu0 0
      %2171 = vmatpush1.bf16.xpose.msra.mxu0 %v2168
      %2172 = vmatprep.subr.bf16.mxu0 0
      %2173 = vmatpush1.bf16.xpose.msra.mxu0 0
      %2174 = vmatprep.subr.bf16.mxu0 0
      %2175 = vmatpush1.bf16.xpose.msra.mxu0 0
      %2176 = vmatprep.subr.bf16.mxu0 0
      %2177 = vmatpush1.bf16.xpose.msra.mxu0 0
      %2178 = vmatprep.subr.bf16.mxu0 0
      %2179 = vmatpush1.bf16.xpose.msra.mxu0 0
      %2180 = vmatprep.subr.bf16.mxu0 0
      %2181 = vmatpush1.bf16.xpose.msra.mxu0 0
      %2182 = vmatprep.subr.bf16.mxu0 0
      %2183 = vmatpush1.bf16.xpose.msra.mxu0 0
      %2184 = vmatprep.subr.bf16.mxu0 0
      %2185 = vmatpush1.bf16.xpose.msra.mxu0 0
      %2186 = vmatprep.subr.bf16.mxu0 0
      %2187 = vmatpush1.bf16.xpose.msra.mxu0 0
      %2188 = vmatprep.subr.bf16.mxu0 0
      %2189 = vmatpush1.bf16.xpose.msra.mxu0 0
      %2190 = vmatprep.subr.bf16.mxu0 0
      %2191 = vmatpush1.bf16.xpose.msra.mxu0 0
      %2192 = vmatprep.subr.bf16.mxu0 0
      %2193 = vmatpush1.bf16.xpose.msra.mxu0 0
      %2194 = vmatprep.subr.bf16.mxu0 0
      %2195 = vmatpush1.bf16.xpose.msra.mxu0 0
      %2196 = vmatprep.subr.bf16.mxu0 0
      %2197 = vmatpush1.bf16.xpose.msra.mxu0 0
      %2198 = vmatprep.subr.bf16.mxu0 0
      %2199 = vmatpush1.bf16.xpose.msra.mxu0 0
      %2200 = vmatprep.subr.bf16.mxu0 0
      %2201 = vmatpush1.bf16.xpose.msra.mxu0 0
      %2202 = vmatprep.mubr.bf16.mxu0 0
      %2203 = vmatmul.mubr.bf16.gmra.mrb[0].mxu0 %v2165
      %v2204 = vpop.f32.mrb[0].mxu0
      %v2205 = vadd.f32 0.0, %v2204
      %v2206 = vpop.f32.mrb[0].mxu0
      %v2207 = vpop.f32.mrb[0].mxu0
      %v2208 = vpop.f32.mrb[0].mxu0
      %2209 = vdwg.mxu0
      %2210 = vrot.lane.b32.xlu0 %v2060, 104
      %v2211 = vpop.permute.xlu0 %2210
      %2212 = vrot.lane.b32.xlu0 %v2061, 104
      %v2213 = vpop.permute.xlu0 %2212
      %v2215 = vsel %vm1362, %v2211, 0
      %v2218 = vsel %vm1362, %v2213, 0
      %2220 = vmatprep.subr.bf16.mxu0 0
      %2221 = vmatpush1.bf16.xpose.msra.mxu0 %v2218
      %2222 = vmatprep.subr.bf16.mxu0 0
      %2223 = vmatpush1.bf16.xpose.msra.mxu0 0
      %2224 = vmatprep.subr.bf16.mxu0 0
      %2225 = vmatpush1.bf16.xpose.msra.mxu0 0
      %2226 = vmatprep.subr.bf16.mxu0 0
      %2227 = vmatpush1.bf16.xpose.msra.mxu0 0
      %2228 = vmatprep.subr.bf16.mxu0 0
      %2229 = vmatpush1.bf16.xpose.msra.mxu0 0
      %2230 = vmatprep.subr.bf16.mxu0 0
      %2231 = vmatpush1.bf16.xpose.msra.mxu0 0
      %2232 = vmatprep.subr.bf16.mxu0 0
      %2233 = vmatpush1.bf16.xpose.msra.mxu0 0
      %2234 = vmatprep.subr.bf16.mxu0 0
      %2235 = vmatpush1.bf16.xpose.msra.mxu0 0
      %2236 = vmatprep.subr.bf16.mxu0 0
      %2237 = vmatpush1.bf16.xpose.msra.mxu0 0
      %2238 = vmatprep.subr.bf16.mxu0 0
      %2239 = vmatpush1.bf16.xpose.msra.mxu0 0
      %2240 = vmatprep.subr.bf16.mxu0 0
      %2241 = vmatpush1.bf16.xpose.msra.mxu0 0
      %2242 = vmatprep.subr.bf16.mxu0 0
      %2243 = vmatpush1.bf16.xpose.msra.mxu0 0
      %2244 = vmatprep.subr.bf16.mxu0 0
      %2245 = vmatpush1.bf16.xpose.msra.mxu0 0
      %2246 = vmatprep.subr.bf16.mxu0 0
      %2247 = vmatpush1.bf16.xpose.msra.mxu0 0
      %2248 = vmatprep.subr.bf16.mxu0 0
      %2249 = vmatpush1.bf16.xpose.msra.mxu0 0
      %2250 = vmatprep.subr.bf16.mxu0 0
      %2251 = vmatpush1.bf16.xpose.msra.mxu0 0
      %2252 = vmatprep.mubr.bf16.mxu0 0
      %2253 = vmatmul.mubr.bf16.gmra.mrb[0].mxu0 %v2215
      %v2254 = vpop.f32.mrb[0].mxu0
      %v2255 = vadd.f32 0.0, %v2254
      %v2256 = vpop.f32.mrb[0].mxu0
      %v2257 = vpop.f32.mrb[0].mxu0
      %v2258 = vpop.f32.mrb[0].mxu0
      %2259 = vdwg.mxu0
      %v2260 = vadd.f32 %v2103, %v2056
      %v2261 = vadd.f32 %v2155, %v2057
      %v2262 = vadd.f32 %v2205, %v2058
      %v2263 = vadd.f32 %v2255, %v2059
      %v2264 = vsel %vm1362, %v2260, -inf
      %2265 = vmax.xlane.f32.xlu0 %v2264
      %v2266 = vpop.xlane.xlu0 %2265
      %v2267 = vsel %vm1362, %v2261, -inf
      %2268 = vmax.xlane.f32.xlu0 %v2267
      %v2269 = vpop.xlane.xlu0 %2268
      %v2270 = vsel %vm1362, %v2262, -inf
      %2271 = vmax.xlane.f32.xlu0 %v2270
      %v2272 = vpop.xlane.xlu0 %2271
      %v2273 = vsel %vm1362, %v2263, -inf
      %2274 = vmax.xlane.f32.xlu0 %v2273
      %v2275 = vpop.xlane.xlu0 %2274
      %v2276 = vsub.f32 %v2260, %v2266
      %v2277 = vsub.f32 %v2261, %v2269
      %v2278 = vsub.f32 %v2262, %v2272
      %v2279 = vsub.f32 %v2263, %v2275
      %v2280 = vmul.f32 %v2276, 1.442695
      %v2281 = vpow.pop %v2280
      %v2282 = vmul.f32 %v2277, 1.442695
      %v2283 = vpow.pop %v2282
      %v2284 = vmul.f32 %v2278, 1.442695
      %v2285 = vpow.pop %v2284
      %v2286 = vmul.f32 %v2279, 1.442695
      %v2287 = vpow.pop %v2286
      %v2288 = vsel %vm1362, %v2281, 0.0
      %2289 = vadd.xlane.f32.xlu0 %v2288
      %v2290 = vpop.xlane.xlu0 %2289
      %v2291 = vsel %vm1362, %v2283, 0.0
      %2292 = vadd.xlane.f32.xlu0 %v2291
      %v2293 = vpop.xlane.xlu0 %2292
      %v2294 = vsel %vm1362, %v2285, 0.0
      %2295 = vadd.xlane.f32.xlu0 %v2294
      %v2296 = vpop.xlane.xlu0 %2295
      %v2297 = vsel %vm1362, %v2287, 0.0
      %2298 = vadd.xlane.f32.xlu0 %v2297
      %v2299 = vpop.xlane.xlu0 %2298
      %v2300 = vrcp.pop %v2290
      %v2301 = vrcp.pop %v2293
      %v2302 = vrcp.pop %v2296
      %v2303 = vrcp.pop %v2299
      %v2304 = vmul.f32 %v2281, %v2300
      %v2305 = vmul.f32 %v2283, %v2301
      %v2306 = vmul.f32 %v2285, %v2302
      %v2307 = vmul.f32 %v2287, %v2303
      %v2308 = vpack.c.bf16 %v2305, %v2304
      %v2309 = vpack.c.bf16 %v2307, %v2306
      %2310 = vrot.lane.b32.xlu0 %v2061, 96
      %v2311 = vpop.permute.xlu0 %2310
      %v2313 = vsel %vm1362, %v2308, 0
      %v2316 = vsel %vm1615, %v2311, 0
      %2318 = vmatprep.subr.bf16.mxu0 0
      %2319 = vmatpush1.bf16.msra.mxu0 %v2316
      %2320 = vmatprep.subr.bf16.mxu0 0
      %2321 = vmatpush1.bf16.msra.mxu0 0
      %2322 = vmatprep.subr.bf16.mxu0 0
      %2323 = vmatpush1.bf16.msra.mxu0 0
      %2324 = vmatprep.subr.bf16.mxu0 0
      %2325 = vmatpush1.bf16.msra.mxu0 0
      %2326 = vmatprep.subr.bf16.mxu0 0
      %2327 = vmatpush1.bf16.msra.mxu0 0
      %2328 = vmatprep.subr.bf16.mxu0 0
      %2329 = vmatpush1.bf16.msra.mxu0 0
      %2330 = vmatprep.subr.bf16.mxu0 0
      %2331 = vmatpush1.bf16.msra.mxu0 0
      %2332 = vmatprep.subr.bf16.mxu0 0
      %2333 = vmatpush1.bf16.msra.mxu0 0
      %2334 = vmatprep.subr.bf16.mxu0 0
      %2335 = vmatpush1.bf16.msra.mxu0 0
      %2336 = vmatprep.subr.bf16.mxu0 0
      %2337 = vmatpush1.bf16.msra.mxu0 0
      %2338 = vmatprep.subr.bf16.mxu0 0
      %2339 = vmatpush1.bf16.msra.mxu0 0
      %2340 = vmatprep.subr.bf16.mxu0 0
      %2341 = vmatpush1.bf16.msra.mxu0 0
      %2342 = vmatprep.subr.bf16.mxu0 0
      %2343 = vmatpush1.bf16.msra.mxu0 0
      %2344 = vmatprep.subr.bf16.mxu0 0
      %2345 = vmatpush1.bf16.msra.mxu0 0
      %2346 = vmatprep.subr.bf16.mxu0 0
      %2347 = vmatpush1.bf16.msra.mxu0 0
      %2348 = vmatprep.subr.bf16.mxu0 0
      %2349 = vmatpush1.bf16.msra.mxu0 0
      %2350 = vmatprep.mubr.bf16.mxu0 0
      %2351 = vmatmul.mubr.bf16.gmra.mrb[0].mxu0 %v2313
      %v2352 = vpop.f32.mrb[0].mxu0
      %v2353 = vadd.f32 0.0, %v2352
      %v2354 = vpop.f32.mrb[0].mxu0
      %v2355 = vpop.f32.mrb[0].mxu0
      %v2356 = vpop.f32.mrb[0].mxu0
      %2357 = vdwg.mxu0
      %v2359 = vrot.slane %v2308, 4
      %2360 = vrot.lane.b32.xlu0 %v2061, 88
      %v2361 = vpop.permute.xlu0 %2360
      %v2363 = vsel %vm1362, %v2359, 0
      %v2366 = vsel %vm1615, %v2361, 0
      %2368 = vmatprep.subr.bf16.mxu0 0
      %2369 = vmatpush1.bf16.msra.mxu0 %v2366
      %2370 = vmatprep.subr.bf16.mxu0 0
      %2371 = vmatpush1.bf16.msra.mxu0 0
      %2372 = vmatprep.subr.bf16.mxu0 0
      %2373 = vmatpush1.bf16.msra.mxu0 0
      %2374 = vmatprep.subr.bf16.mxu0 0
      %2375 = vmatpush1.bf16.msra.mxu0 0
      %2376 = vmatprep.subr.bf16.mxu0 0
      %2377 = vmatpush1.bf16.msra.mxu0 0
      %2378 = vmatprep.subr.bf16.mxu0 0
      %2379 = vmatpush1.bf16.msra.mxu0 0
      %2380 = vmatprep.subr.bf16.mxu0 0
      %2381 = vmatpush1.bf16.msra.mxu0 0
      %2382 = vmatprep.subr.bf16.mxu0 0
      %2383 = vmatpush1.bf16.msra.mxu0 0
      %2384 = vmatprep.subr.bf16.mxu0 0
      %2385 = vmatpush1.bf16.msra.mxu0 0
      %2386 = vmatprep.subr.bf16.mxu0 0
      %2387 = vmatpush1.bf16.msra.mxu0 0
      %2388 = vmatprep.subr.bf16.mxu0 0
      %2389 = vmatpush1.bf16.msra.mxu0 0
      %2390 = vmatprep.subr.bf16.mxu0 0
      %2391 = vmatpush1.bf16.msra.mxu0 0
      %2392 = vmatprep.subr.bf16.mxu0 0
      %2393 = vmatpush1.bf16.msra.mxu0 0
      %2394 = vmatprep.subr.bf16.mxu0 0
      %2395 = vmatpush1.bf16.msra.mxu0 0
      %2396 = vmatprep.subr.bf16.mxu0 0
      %2397 = vmatpush1.bf16.msra.mxu0 0
      %2398 = vmatprep.subr.bf16.mxu0 0
      %2399 = vmatpush1.bf16.msra.mxu0 0
      %2400 = vmatprep.mubr.bf16.mxu0 0
      %2401 = vmatmul.mubr.bf16.gmra.mrb[0].mxu0 %v2363
      %v2402 = vpop.f32.mrb[0].mxu0
      %v2403 = vadd.f32 0.0, %v2402
      %v2404 = vpop.f32.mrb[0].mxu0
      %v2405 = vpop.f32.mrb[0].mxu0
      %v2406 = vpop.f32.mrb[0].mxu0
      %2407 = vdwg.mxu0
      %2408 = vrot.lane.b32.xlu0 %v2061, 80
      %v2409 = vpop.permute.xlu0 %2408
      %v2411 = vsel %vm1362, %v2309, 0
      %v2414 = vsel %vm1615, %v2409, 0
      %2416 = vmatprep.subr.bf16.mxu0 0
      %2417 = vmatpush1.bf16.msra.mxu0 %v2414
      %2418 = vmatprep.subr.bf16.mxu0 0
      %2419 = vmatpush1.bf16.msra.mxu0 0
      %2420 = vmatprep.subr.bf16.mxu0 0
      %2421 = vmatpush1.bf16.msra.mxu0 0
      %2422 = vmatprep.subr.bf16.mxu0 0
      %2423 = vmatpush1.bf16.msra.mxu0 0
      %2424 = vmatprep.subr.bf16.mxu0 0
      %2425 = vmatpush1.bf16.msra.mxu0 0
      %2426 = vmatprep.subr.bf16.mxu0 0
      %2427 = vmatpush1.bf16.msra.mxu0 0
      %2428 = vmatprep.subr.bf16.mxu0 0
      %2429 = vmatpush1.bf16.msra.mxu0 0
      %2430 = vmatprep.subr.bf16.mxu0 0
      %2431 = vmatpush1.bf16.msra.mxu0 0
      %2432 = vmatprep.subr.bf16.mxu0 0
      %2433 = vmatpush1.bf16.msra.mxu0 0
      %2434 = vmatprep.subr.bf16.mxu0 0
      %2435 = vmatpush1.bf16.msra.mxu0 0
      %2436 = vmatprep.subr.bf16.mxu0 0
      %2437 = vmatpush1.bf16.msra.mxu0 0
      %2438 = vmatprep.subr.bf16.mxu0 0
      %2439 = vmatpush1.bf16.msra.mxu0 0
      %2440 = vmatprep.subr.bf16.mxu0 0
      %2441 = vmatpush1.bf16.msra.mxu0 0
      %2442 = vmatprep.subr.bf16.mxu0 0
      %2443 = vmatpush1.bf16.msra.mxu0 0
      %2444 = vmatprep.subr.bf16.mxu0 0
      %2445 = vmatpush1.bf16.msra.mxu0 0
      %2446 = vmatprep.subr.bf16.mxu0 0
      %2447 = vmatpush1.bf16.msra.mxu0 0
      %2448 = vmatprep.mubr.bf16.mxu0 0
      %2449 = vmatmul.mubr.bf16.gmra.mrb[0].mxu0 %v2411
      %v2450 = vpop.f32.mrb[0].mxu0
      %v2451 = vadd.f32 0.0, %v2450
      %v2452 = vpop.f32.mrb[0].mxu0
      %v2453 = vpop.f32.mrb[0].mxu0
      %v2454 = vpop.f32.mrb[0].mxu0
      %2455 = vdwg.mxu0
      %v2457 = vrot.slane %v2309, 4
      %2458 = vrot.lane.b32.xlu0 %v2061, 72
      %v2459 = vpop.permute.xlu0 %2458
      %v2461 = vsel %vm1362, %v2457, 0
      %v2464 = vsel %vm1615, %v2459, 0
      %2466 = vmatprep.subr.bf16.mxu0 0
      %2467 = vmatpush1.bf16.msra.mxu0 %v2464
      %2468 = vmatprep.subr.bf16.mxu0 0
      %2469 = vmatpush1.bf16.msra.mxu0 0
      %2470 = vmatprep.subr.bf16.mxu0 0
      %2471 = vmatpush1.bf16.msra.mxu0 0
      %2472 = vmatprep.subr.bf16.mxu0 0
      %2473 = vmatpush1.bf16.msra.mxu0 0
      %2474 = vmatprep.subr.bf16.mxu0 0
      %2475 = vmatpush1.bf16.msra.mxu0 0
      %2476 = vmatprep.subr.bf16.mxu0 0
      %2477 = vmatpush1.bf16.msra.mxu0 0
      %2478 = vmatprep.subr.bf16.mxu0 0
      %2479 = vmatpush1.bf16.msra.mxu0 0
      %2480 = vmatprep.subr.bf16.mxu0 0
      %2481 = vmatpush1.bf16.msra.mxu0 0
      %2482 = vmatprep.subr.bf16.mxu0 0
      %2483 = vmatpush1.bf16.msra.mxu0 0
      %2484 = vmatprep.subr.bf16.mxu0 0
      %2485 = vmatpush1.bf16.msra.mxu0 0
      %2486 = vmatprep.subr.bf16.mxu0 0
      %2487 = vmatpush1.bf16.msra.mxu0 0
      %2488 = vmatprep.subr.bf16.mxu0 0
      %2489 = vmatpush1.bf16.msra.mxu0 0
      %2490 = vmatprep.subr.bf16.mxu0 0
      %2491 = vmatpush1.bf16.msra.mxu0 0
      %2492 = vmatprep.subr.bf16.mxu0 0
      %2493 = vmatpush1.bf16.msra.mxu0 0
      %2494 = vmatprep.subr.bf16.mxu0 0
      %2495 = vmatpush1.bf16.msra.mxu0 0
      %2496 = vmatprep.subr.bf16.mxu0 0
      %2497 = vmatpush1.bf16.msra.mxu0 0
      %2498 = vmatprep.mubr.bf16.mxu0 0
      %2499 = vmatmul.mubr.bf16.gmra.mrb[0].mxu0 %v2461
      %v2500 = vpop.f32.mrb[0].mxu0
      %v2501 = vadd.f32 0.0, %v2500
      %v2502 = vpop.f32.mrb[0].mxu0
      %v2503 = vpop.f32.mrb[0].mxu0
      %v2504 = vpop.f32.mrb[0].mxu0
      %2505 = vdwg.mxu0
      %2507 = vrot.lane.b32.xlu0 %v2403, 8
      %v2508 = vpop.permute.xlu0 %2507
      %2511 = vrot.lane.b32.xlu0 %v2451, 16
      %v2512 = vpop.permute.xlu0 %2511
      %2515 = vrot.lane.b32.xlu0 %v2501, 24
      %v2516 = vpop.permute.xlu0 %2515
      %v2518 = vsel %vm1362, %v2353, %v2508
      %v2519 = vsel %vm1820, %v2518, %v2512
      %v2520 = vsel %vm1822, %v2519, %v2516
      %v2521 = vpack.c.bf16 %v2520, %v2520
      %v2526 = vunpack.c.l.b16 %v2052
      %v2527 = vunpack.c.l.b16 %v2053
      %v2528 = vunpack.c.l.b16 %v2054
      %v2529 = vunpack.c.l.b16 %v2055
      %v2530 = vpack.c.b16 %v2527, %v2526
      %v2531 = vpack.c.b16 %v2529, %v2528
      %v2535 = vsel %vm1252, %v2521, 0
      %2537 = vmatprep.subr.bf16.mxu0 0
      %2538 = vmatpush1.bf16.msra.mxu0 %v2530
      %2539 = vmatprep.subr.bf16.mxu0 0
      %2540 = vmatpush1.bf16.msra.mxu0 %v2531
      %2541 = vmatprep.subr.bf16.mxu0 0
      %2542 = vmatpush1.bf16.msra.mxu0 0
      %2543 = vmatprep.subr.bf16.mxu0 0
      %2544 = vmatpush1.bf16.msra.mxu0 0
      %2545 = vmatprep.subr.bf16.mxu0 0
      %2546 = vmatpush1.bf16.msra.mxu0 0
      %2547 = vmatprep.subr.bf16.mxu0 0
      %2548 = vmatpush1.bf16.msra.mxu0 0
      %2549 = vmatprep.subr.bf16.mxu0 0
      %2550 = vmatpush1.bf16.msra.mxu0 0
      %2551 = vmatprep.subr.bf16.mxu0 0
      %2552 = vmatpush1.bf16.msra.mxu0 0
      %2553 = vmatprep.subr.bf16.mxu0 0
      %2554 = vmatpush1.bf16.msra.mxu0 0
      %2555 = vmatprep.subr.bf16.mxu0 0
      %2556 = vmatpush1.bf16.msra.mxu0 0
      %2557 = vmatprep.subr.bf16.mxu0 0
      %2558 = vmatpush1.bf16.msra.mxu0 0
      %2559 = vmatprep.subr.bf16.mxu0 0
      %2560 = vmatpush1.bf16.msra.mxu0 0
      %2561 = vmatprep.subr.bf16.mxu0 0
      %2562 = vmatpush1.bf16.msra.mxu0 0
      %2563 = vmatprep.subr.bf16.mxu0 0
      %2564 = vmatpush1.bf16.msra.mxu0 0
      %2565 = vmatprep.subr.bf16.mxu0 0
      %2566 = vmatpush1.bf16.msra.mxu0 0
      %2567 = vmatprep.subr.bf16.mxu0 0
      %2568 = vmatpush1.bf16.msra.mxu0 0
      %2569 = vmatprep.mubr.bf16.mxu0 0
      %2570 = vmatmul.mubr.bf16.gmra.mrb[0].mxu0 %v2535
      %v2571 = vpop.f32.mrb[0].mxu0
      %v2572 = vadd.f32 0.0, %v2571
      %v2573 = vpop.f32.mrb[0].mxu0
      %v2574 = vpop.f32.mrb[0].mxu0
      %v2575 = vpop.f32.mrb[0].mxu0
      %2576 = vdwg.mxu0
      %v2577 = vadd.f32 %v1888, %v2572
      %v2578 = vld [vmem:[%s1196] sm:$0x1]
      %v2580 = vlaneseq
      %v2581 = vshrl.u32 %v2580, 7
      %v2582 = vsub.s32 0, %v2581
      %v2583 = vrot.slane %v2578, %v2582
      %v2585 = vadd.f32 %v2577, %v2583
      %v2586 = vld [vmem:[%s1199] sm:$0x1]
      %v2587 = vld [vmem:[%s1202] sm:$0x1]
      %v2588 = vsel %vm1252, %v2585, 0.0
      %2589 = vadd.xlane.f32.xlu0 %v2588
      %v2590 = vpop.xlane.xlu0 %2589
      %v2591 = vmul.f32 %v2590, %v1256
      %v2592 = vsub.f32 %v2585, %v2591
      %v2593 = vmul.f32 %v2592, %v2592
      %v2594 = vsel %vm1252, %v2593, 0.0
      %2595 = vadd.xlane.f32.xlu0 %v2594
      %v2596 = vpop.xlane.xlu0 %2595
      %v2597 = vmul.f32 %v2596, %v1256
      %v2598 = vadd.f32 %v2597, 1e-05
      %v2599 = vrsqrt.pop %v2598
      %v2600 = vmul.f32 %v2592, %v2599
      %v2602 = vlaneseq
      %v2603 = vshrl.u32 %v2602, 7
      %v2604 = vsub.s32 0, %v2603
      %v2605 = vrot.slane %v2586, %v2604
      %v2607 = vmul.f32 %v2600, %v2605
      %v2609 = vlaneseq
      %v2610 = vshrl.u32 %v2609, 7
      %v2611 = vsub.s32 0, %v2610
      %v2612 = vrot.slane %v2587, %v2611
      %v2614 = vadd.f32 %v2607, %v2612
      %v2615 = vpack.c.bf16 %v2614, %v2614
      %v2616 = vld [vmem:[%s1207] sm:$0xf]
      %v2617 = vld [vmem:[%s1207 + $0x4] sm:$0xf]
      %v2618 = vld [vmem:[%s1207 + $0x8] sm:$0xf]
      %v2619 = vld [vmem:[%s1207 + $0xc] sm:$0xf]
      %v2620 = vld [vmem:[%s1210] sm:$0x1]
      %v2622 = vlaneseq
      %v2623 = vshrl.u32 %v2622, 7
      %v2624 = vsub.s32 0, %v2623
      %v2625 = vrot.slane %v2620, %v2624
      %v2631 = vunpack.c.l.b16 %v2616
      %v2632 = vunpack.c.l.b16 %v2617
      %v2633 = vunpack.c.l.b16 %v2618
      %v2634 = vunpack.c.l.b16 %v2619
      %v2635 = vpack.c.b16 %v2632, %v2631
      %v2636 = vpack.c.b16 %v2634, %v2633
      %v2640 = vsel %vm1252, %v2615, 0
      %2642 = vmatprep.subr.bf16.mxu0 0
      %2643 = vmatpush1.bf16.msra.mxu0 %v2635
      %2644 = vmatprep.subr.bf16.mxu0 0
      %2645 = vmatpush1.bf16.msra.mxu0 %v2636
      %2646 = vmatprep.subr.bf16.mxu0 0
      %2647 = vmatpush1.bf16.msra.mxu0 0
      %2648 = vmatprep.subr.bf16.mxu0 0
      %2649 = vmatpush1.bf16.msra.mxu0 0
      %2650 = vmatprep.subr.bf16.mxu0 0
      %2651 = vmatpush1.bf16.msra.mxu0 0
      %2652 = vmatprep.subr.bf16.mxu0 0
      %2653 = vmatpush1.bf16.msra.mxu0 0
      %2654 = vmatprep.subr.bf16.mxu0 0
      %2655 = vmatpush1.bf16.msra.mxu0 0
      %2656 = vmatprep.subr.bf16.mxu0 0
      %2657 = vmatpush1.bf16.msra.mxu0 0
      %2658 = vmatprep.subr.bf16.mxu0 0
      %2659 = vmatpush1.bf16.msra.mxu0 0
      %2660 = vmatprep.subr.bf16.mxu0 0
      %2661 = vmatpush1.bf16.msra.mxu0 0
      %2662 = vmatprep.subr.bf16.mxu0 0
      %2663 = vmatpush1.bf16.msra.mxu0 0
      %2664 = vmatprep.subr.bf16.mxu0 0
      %2665 = vmatpush1.bf16.msra.mxu0 0
      %2666 = vmatprep.subr.bf16.mxu0 0
      %2667 = vmatpush1.bf16.msra.mxu0 0
      %2668 = vmatprep.subr.bf16.mxu0 0
      %2669 = vmatpush1.bf16.msra.mxu0 0
      %2670 = vmatprep.subr.bf16.mxu0 0
      %2671 = vmatpush1.bf16.msra.mxu0 0
      %2672 = vmatprep.subr.bf16.mxu0 0
      %2673 = vmatpush1.bf16.msra.mxu0 0
      %2674 = vmatprep.mubr.bf16.mxu0 0
      %2675 = vmatmul.mubr.bf16.gmra.mrb[0].mxu0 %v2640
      %v2676 = vpop.f32.mrb[0].mxu0
      %v2677 = vadd.f32 %v2625, %v2676
      %v2678 = vpop.f32.mrb[0].mxu0
      %v2679 = vpop.f32.mrb[0].mxu0
      %v2680 = vpop.f32.mrb[0].mxu0
      %2681 = vdwg.mxu0
      %v2682 = vmax.f32 %v2677, 0.0
      %v2683 = vpack.c.bf16 %v2682, %v2682
      %v2684 = vld [vmem:[%s1215] sm:$0xf]
      %v2685 = vld [vmem:[%s1215 + $0x4] sm:$0xf]
      %v2686 = vld [vmem:[%s1215 + $0x8] sm:$0xf]
      %v2687 = vld [vmem:[%s1215 + $0xc] sm:$0xf]
      %v2688 = vld [vmem:[%s1215 + $0x10] sm:$0xf]
      %v2689 = vld [vmem:[%s1215 + $0x14] sm:$0xf]
      %v2690 = vld [vmem:[%s1215 + $0x18] sm:$0xf]
      %v2691 = vld [vmem:[%s1215 + $0x1c] sm:$0xf]
      %v2700 = vunpack.c.l.b16 %v2684
      %v2701 = vunpack.c.l.b16 %v2685
      %v2702 = vunpack.c.l.b16 %v2686
      %v2703 = vunpack.c.l.b16 %v2687
      %v2704 = vunpack.c.l.b16 %v2688
      %v2705 = vunpack.c.l.b16 %v2689
      %v2706 = vunpack.c.l.b16 %v2690
      %v2707 = vunpack.c.l.b16 %v2691
      %v2708 = vpack.c.b16 %v2701, %v2700
      %v2709 = vpack.c.b16 %v2703, %v2702
      %v2710 = vpack.c.b16 %v2705, %v2704
      %v2711 = vpack.c.b16 %v2707, %v2706
      %vm2716 = vcmask 523264
      %v2718 = vsel %vm2716, %v2683, 0
      %2720 = vmatprep.subr.bf16.mxu0 0
      %2721 = vmatpush1.bf16.msra.mxu0 %v2708
      %2722 = vmatprep.subr.bf16.mxu0 0
      %2723 = vmatpush1.bf16.msra.mxu0 %v2709
      %2724 = vmatprep.subr.bf16.mxu0 0
      %2725 = vmatpush1.bf16.msra.mxu0 %v2710
      %2726 = vmatprep.subr.bf16.mxu0 0
      %2727 = vmatpush1.bf16.msra.mxu0 %v2711
      %2728 = vmatprep.subr.bf16.mxu0 0
      %2729 = vmatpush1.bf16.msra.mxu0 0
      %2730 = vmatprep.subr.bf16.mxu0 0
      %2731 = vmatpush1.bf16.msra.mxu0 0
      %2732 = vmatprep.subr.bf16.mxu0 0
      %2733 = vmatpush1.bf16.msra.mxu0 0
      %2734 = vmatprep.subr.bf16.mxu0 0
      %2735 = vmatpush1.bf16.msra.mxu0 0
      %2736 = vmatprep.subr.bf16.mxu0 0
      %2737 = vmatpush1.bf16.msra.mxu0 0
      %2738 = vmatprep.subr.bf16.mxu0 0
      %2739 = vmatpush1.bf16.msra.mxu0 0
      %2740 = vmatprep.subr.bf16.mxu0 0
      %2741 = vmatpush1.bf16.msra.mxu0 0
      %2742 = vmatprep.subr.bf16.mxu0 0
      %2743 = vmatpush1.bf16.msra.mxu0 0
      %2744 = vmatprep.subr.bf16.mxu0 0
      %2745 = vmatpush1.bf16.msra.mxu0 0
      %2746 = vmatprep.subr.bf16.mxu0 0
      %2747 = vmatpush1.bf16.msra.mxu0 0
      %2748 = vmatprep.subr.bf16.mxu0 0
      %2749 = vmatpush1.bf16.msra.mxu0 0
      %2750 = vmatprep.subr.bf16.mxu0 0
      %2751 = vmatpush1.bf16.msra.mxu0 0
      %2752 = vmatprep.mubr.bf16.mxu0 0
      %2753 = vmatmul.mubr.bf16.gmra.mrb[0].mxu0 %v2718
      %v2754 = vpop.f32.mrb[0].mxu0
      %v2755 = vadd.f32 0.0, %v2754
      %v2756 = vpop.f32.mrb[0].mxu0
      %v2757 = vpop.f32.mrb[0].mxu0
      %v2758 = vpop.f32.mrb[0].mxu0
      %2759 = vdwg.mxu0
      %v2760 = vadd.f32 %v2585, %v2755
      %v2761 = vld [vmem:[%s1218] sm:$0x1]
      %v2763 = vlaneseq
      %v2764 = vshrl.u32 %v2763, 7
      %v2765 = vsub.s32 0, %v2764
      %v2766 = vrot.slane %v2761, %v2765
      %v2768 = vadd.f32 %v2760, %v2766
      %2769 = vst.msk [vmem:[#allocation2] sm:$0xff] %vm1252, %v2768
      %p2770 = scmp.eq.s32.totalorder %s44, 1
      // Predicated region
      $region137: #{_lambda_.3} parent=131 // pred_check
        %p2771 = pneg %p2770
      $region138: #{_lambda_.3} parent=131 // pred_check_branch
        %2773 = sbr.rel (%p2771) target = $region140
      $region139: #{_lambda_.3} parent=131 // pred_region
        %v2774 = vld [vmem:[%s24] sm:$0x1]
        %v2775 = vld [vmem:[%s25] sm:$0x1]
        %v2776 = vsel %vm1252, %v2768, 0.0
        %2777 = vadd.xlane.f32.xlu0 %v2776
        %v2778 = vpop.xlane.xlu0 %2777
        %v2779 = vmul.f32 %v2778, %v1256
        %v2780 = vsub.f32 %v2768, %v2779
        %v2781 = vmul.f32 %v2780, %v2780
        %v2782 = vsel %vm1252, %v2781, 0.0
        %2783 = vadd.xlane.f32.xlu0 %v2782
        %v2784 = vpop.xlane.xlu0 %2783
        %v2785 = vmul.f32 %v2784, %v1256
        %v2786 = vadd.f32 %v2785, 1e-05
        %v2787 = vrsqrt.pop %v2786
        %v2788 = vmul.f32 %v2780, %v2787
        %v2790 = vlaneseq
        %v2791 = vshrl.u32 %v2790, 7
        %v2792 = vsub.s32 0, %v2791
        %v2793 = vrot.slane %v2774, %v2792
        %v2795 = vmul.f32 %v2788, %v2793
        %v2797 = vlaneseq
        %v2798 = vshrl.u32 %v2797, 7
        %v2799 = vsub.s32 0, %v2798
        %v2800 = vrot.slane %v2775, %v2799
        %v2802 = vadd.f32 %v2795, %v2800
        %v2803 = vpack.c.bf16 %v2802, %v2802
        %v2804 = vld [vmem:[%s26] sm:$0xf]
        %v2805 = vld [vmem:[%s26 + $0x4] sm:$0xf]
        %v2806 = vld [vmem:[%s26 + $0x8] sm:$0xf]
        %v2807 = vld [vmem:[%s26 + $0xc] sm:$0xf]
        %v2808 = vld [vmem:[%s27] sm:$0x1]
        %v2810 = vlaneseq
        %v2811 = vshrl.u32 %v2810, 7
        %v2812 = vsub.s32 0, %v2811
        %v2813 = vrot.slane %v2808, %v2812
        %v2819 = vunpack.c.l.b16 %v2804
        %v2820 = vunpack.c.l.b16 %v2805
        %v2821 = vunpack.c.l.b16 %v2806
        %v2822 = vunpack.c.l.b16 %v2807
        %v2823 = vpack.c.b16 %v2820, %v2819
        %v2824 = vpack.c.b16 %v2822, %v2821
        %v2828 = vsel %vm1252, %v2803, 0
        %2830 = vmatprep.subr.bf16.mxu0 0
        %2831 = vmatpush1.bf16.msra.mxu0 %v2823
        %2832 = vmatprep.subr.bf16.mxu0 0
        %2833 = vmatpush1.bf16.msra.mxu0 %v2824
        %2834 = vmatprep.subr.bf16.mxu0 0
        %2835 = vmatpush1.bf16.msra.mxu0 0
        %2836 = vmatprep.subr.bf16.mxu0 0
        %2837 = vmatpush1.bf16.msra.mxu0 0
        %2838 = vmatprep.subr.bf16.mxu0 0
        %2839 = vmatpush1.bf16.msra.mxu0 0
        %2840 = vmatprep.subr.bf16.mxu0 0
        %2841 = vmatpush1.bf16.msra.mxu0 0
        %2842 = vmatprep.subr.bf16.mxu0 0
        %2843 = vmatpush1.bf16.msra.mxu0 0
        %2844 = vmatprep.subr.bf16.mxu0 0
        %2845 = vmatpush1.bf16.msra.mxu0 0
        %2846 = vmatprep.subr.bf16.mxu0 0
        %2847 = vmatpush1.bf16.msra.mxu0 0
        %2848 = vmatprep.subr.bf16.mxu0 0
        %2849 = vmatpush1.bf16.msra.mxu0 0
        %2850 = vmatprep.subr.bf16.mxu0 0
        %2851 = vmatpush1.bf16.msra.mxu0 0
        %2852 = vmatprep.subr.bf16.mxu0 0
        %2853 = vmatpush1.bf16.msra.mxu0 0
        %2854 = vmatprep.subr.bf16.mxu0 0
        %2855 = vmatpush1.bf16.msra.mxu0 0
        %2856 = vmatprep.subr.bf16.mxu0 0
        %2857 = vmatpush1.bf16.msra.mxu0 0
        %2858 = vmatprep.subr.bf16.mxu0 0
        %2859 = vmatpush1.bf16.msra.mxu0 0
        %2860 = vmatprep.subr.bf16.mxu0 0
        %2861 = vmatpush1.bf16.msra.mxu0 0
        %2862 = vmatprep.mubr.bf16.mxu0 0
        %2863 = vmatmul.mubr.bf16.gmra.mrb[0].mxu0 %v2828
        %v2864 = vpop.f32.mrb[0].mxu0
        %v2865 = vadd.f32 %v2813, %v2864
        %v2866 = vpop.f32.mrb[0].mxu0
        %v2867 = vpop.f32.mrb[0].mxu0
        %v2868 = vpop.f32.mrb[0].mxu0
        %2869 = vdwg.mxu0
        %2870 = vst [vmem:[%s1222] sm:$0xff] %v2865
      $region140: #{_lambda_.3} parent=131 // pred_fallthru
        _
      %p2871 = scmp.lt.s32.totalorder %s43, 1
      %s2872 = scalar_select %p2871, %s43, 1
      %s2873 = smul.addr %s2872, 8
      %s2874 = scalar_lea.vmem %s28, %s2873
      // Predicated region
      $region141: #{_lambda_.3} parent=131 // pred_check
        %p2875 = pneg %p777
      $region142: #{_lambda_.3} parent=131 // pred_check_branch
        %2877 = sbr.rel (%p2875) target = $region144
      $region143: #{_lambda_.3} parent=131 // pred_region
        _
      $region144: #{_lambda_.3} parent=131 // pred_fallthru
        _
    $region132: #{_lambda_.3} parent=5 // pred_fallthru
      _
    %p2878 = scmp.le.s32.totalorder 2, %s34
    // Predicated region
    $region145: #{_lambda_.3} parent=5 // pred_check
      %p2879 = pneg %p2878
    $region146: #{_lambda_.3} parent=5 // pred_check_branch
      %2881 = sbr.rel (%p2879) target = $region148
    $region147: #{_lambda_.3} parent=5 // pred_region
      %s2882 = ssub.s32 %s34, 2
      // Predicated region
      $region149: #{_lambda_.3} parent=147 // pred_check
        %p2883 = pneg %p783
      $region150: #{_lambda_.3} parent=147 // pred_check_branch
        %2885 = sbr.rel (%p2883) target = $region152
      $region151: #{_lambda_.3} parent=147 // pred_region
        %p2886 = scmp.lt.s32.totalorder %s45, 1
        %s2887 = scalar_select %p2886, %s45, 1
        %s2888 = smul.addr %s2887, 8
        %s2889 = scalar_lea.vmem %s28, %s2888
      $region152: #{_lambda_.3} parent=147 // pred_fallthru
        _
    $region148: #{_lambda_.3} parent=5 // pred_fallthru
      _
  $region6: #{_lambda_.3} parent=0 // loop_footer
    %s38 = sadd.s32 1, %s34
  $region7: #{_lambda_.3} parent=0 // loop_footer_branch
    %33 = sbr.rel target = $region3
  $region8: #{_lambda_.3} parent=0 // loop_exit
    _

</llo_original>
